<compile_context>
chip_gen: v7x
topology: tpu7x:2x2x1
jax: 0.10.0
libtpu: 0.0.40
codegen_flags: <defaults>
</compile_context>

<pallas_src>
import jax
import jax.numpy as jnp
from jax.experimental import pallas as pl
from jax.experimental.pallas import tpu as pltpu


# ----------------------------- Pallas kernel -------------------------------

def make_fused_net_kernel(T, Bp, H, num_layers):
    """Build the fused kernel for static (T, Bp, H, num_layers)."""
    L = num_layers

    def kernel(*args):
        # args = [x, (wih_t, whh_t, b) * L, w1,b1,w2,b2,w3,b3, out_ref]
        x_ref = args[0]
        lstm_refs = args[1:1 + 3 * L]
        (w1_ref, b1_ref, w2_ref, b2_ref, w3_ref, b3_ref,
         out_ref) = args[1 + 3 * L:]

        def mm(a, w_ref):
            # Matmul operands take the stored weight dtype (f32 here, bf16 if
            # prepare_params(..., matmul_dtype=bf16)); accumulate in f32.
            w = w_ref[...]
            return jnp.dot(a.astype(w.dtype), w,
                           preferred_element_type=jnp.float32)

        wih = [lstm_refs[3 * l + 0] for l in range(L)]
        whh = [lstm_refs[3 * l + 1] for l in range(L)]
        b = [lstm_refs[3 * l + 2][...] for l in range(L)]

        # Layer-0 input projection hoisted OUT of the recurrence:
        # one (T*Bp, D) @ (D, 4H) MXU matmul that is off the serial chain.
        gx0 = mm(x_ref[...], wih[0]) + b[0]

        def lstm_cell(gates, c_prev):
            # Full-width sigmoid (single EUP pass over the (Bp, 4H) tile);
            # tanh only on the g slice (trim EUP work on the serial chain).
            sig = jax.nn.sigmoid(gates)
            i = sig[:, 0 * H:1 * H]
            f = sig[:, 1 * H:2 * H]
            o = sig[:, 3 * H:4 * H]
            g = jnp.tanh(gates[:, 2 * H:3 * H])
            c_new = f * c_prev + i * g
            h_new = o * jnp.tanh(c_new)
            return h_new, c_new

        # Wavefront recurrence over (time, layer): the update of layer l at
        # step t only reads h[l-1] from step t and h[l]/c[l] from step t-1,
        # so lower-layer step t+1 is independent of upper-layer step t and the
        # two small matmuls per wave can overlap on the MXU.
        h = [jnp.zeros((Bp, H), jnp.float32) for _ in range(L)]
        c = [jnp.zeros((Bp, H), jnp.float32) for _ in range(L)]
        outs = []
        for t in range(T):
            for l in range(L):
                if l == 0:
                    gates = gx0[t * Bp:(t + 1) * Bp, :] + mm(h[0], whh[0])
                else:
                    # Input projection folded into the step for layers >= 1.
                    gates = mm(h[l - 1], wih[l]) + mm(h[l], whh[l]) + b[l]
                h[l], c[l] = lstm_cell(gates, c[l])
            outs.append(h[L - 1])

        # Last layer's per-step outputs, kept in vregs (no VMEM scratch).
        y = jnp.concatenate(outs, axis=0)                     # (T*Bp, H)

        # fc1 -> ReLU -> fc2 -> ReLU -> fc3 -> softmax(last dim)
        h1 = jnp.maximum(mm(y, w1_ref) + b1_ref[...], 0.0)
        h2 = jnp.maximum(mm(h1, w2_ref) + b2_ref[...], 0.0)
        logits = mm(h2, w3_ref) + b3_ref[...]
        m = jnp.max(logits, axis=-1, keepdims=True)
        e = jnp.exp(logits - m)
        denom = jnp.sum(e, axis=-1, keepdims=True)
        # Exact reciprocal: denom is a single column, precision is free here.
        out_ref[...] = e * pl.reciprocal(denom, approx=False)

    return kernel


# ------------------------------ JAX wrappers --------------------------------

_VMEM_SPEC = pl.BlockSpec(memory_space=pltpu.MemorySpace.VMEM)


def net_forward(params, x):
    """x: (B, T, input_size), batch_first like the PyTorch module."""
    B, T, D = x.shape
    num_layers = len(params["lstm"])
    H = params["lstm"][0]["whh_t"].shape[0]
    out_size = params["w3_t"].shape[1]
    Bp = ((B + 7) // 8) * 8                      # pad batch to full sublanes

    xt = jnp.transpose(x, (1, 0, 2)).astype(jnp.float32)      # (T, B, D)
    xt = jnp.pad(xt, ((0, 0), (0, Bp - B), (0, 0)))           # (T, Bp, D)
    x2d = xt.reshape(T * Bp, D)

    flat_inputs = [x2d]
    for lp in params["lstm"]:
        flat_inputs += [lp["wih_t"], lp["whh_t"], lp["b"]]
    flat_inputs += [params["w1_t"], params["b1"],
                    params["w2_t"], params["b2"],
                    params["w3_t"], params["b3"]]

    out2d = pl.pallas_call(
        make_fused_net_kernel(T, Bp, H, num_layers),
        out_shape=jax.ShapeDtypeStruct((T * Bp, out_size), jnp.float32),
        in_specs=[_VMEM_SPEC] * len(flat_inputs),
        out_specs=_VMEM_SPEC,
    )(*flat_inputs)

    out = out2d.reshape(T, Bp, out_size)[:, :B, :]            # drop padding
    return jnp.transpose(out, (1, 0, 2))                      # (B, T, out)


def init_params(key, input_size, hidden_size, num_layers, output_size):
    """PyTorch-layout parameters, U(-1/sqrt(H), 1/sqrt(H)) init."""
    params = {"lstm": []}
    bound = 1.0 / jnp.sqrt(jnp.float32(hidden_size))

    def uni(k, shape):
        return jax.random.uniform(k, shape, jnp.float32, -bound, bound)

    for layer in range(num_layers):
        d_in = input_size if layer == 0 else hidden_size
        key, k1, k2, k3, k4 = jax.random.split(key, 5)
        params["lstm"].append({
            "w_ih": uni(k1, (4 * hidden_size, d_in)),
            "w_hh": uni(k2, (4 * hidden_size, hidden_size)),
            "b_ih": uni(k3, (4 * hidden_size,)),
            "b_hh": uni(k4, (4 * hidden_size,)),
        })

    h2, h4 = hidden_size // 2, hidden_size // 4
    key, k1, k2, k3, k4, k5, k6 = jax.random.split(key, 7)
    params["w1"] = uni(k1, (h2, hidden_size))
    params["b1"] = uni(k2, (h2,))
    params["w2"] = uni(k3, (h4, h2))
    params["b2"] = uni(k4, (h4,))
    params["w3"] = uni(k5, (output_size, h4))
    params["b3"] = uni(k6, (output_size,))
    return params


def prepare_params(raw, matmul_dtype=jnp.float32):
    """One-time conversion: transposed weights, fused biases.

    matmul_dtype=jnp.bfloat16 stores matmul operands in bf16 (f32 accumulate in
    the kernel) — the main MXU lever once H/B scale; f32 here for exactness.
    """
    prepped = {"lstm": []}
    for lp in raw["lstm"]:
        prepped["lstm"].append({
            "wih_t": jnp.transpose(lp["w_ih"]).astype(matmul_dtype),  # (D_in, 4H)
            "whh_t": jnp.transpose(lp["w_hh"]).astype(matmul_dtype),  # (H, 4H)
            "b": (lp["b_ih"] + lp["b_hh"]).reshape(1, -1),            # (1, 4H) f32
        })
    prepped["w1_t"] = jnp.transpose(raw["w1"]).astype(matmul_dtype)
    prepped["b1"] = raw["b1"].reshape(1, -1)
    prepped["w2_t"] = jnp.transpose(raw["w2"]).astype(matmul_dtype)
    prepped["b2"] = raw["b2"].reshape(1, -1)
    prepped["w3_t"] = jnp.transpose(raw["w3"]).astype(matmul_dtype)
    prepped["b3"] = raw["b3"].reshape(1, -1)
    return prepped


# ------------------------- pure-JAX reference model -------------------------

def net_forward_ref(raw, x):
    """Direct translation of the PyTorch forward (for correctness checking)."""
    B, T, _ = x.shape
    y = x.astype(jnp.float32)
    for lp in raw["lstm"]:
        H = lp["w_hh"].shape[1]
        h = jnp.zeros((B, H), jnp.float32)
        c = jnp.zeros((B, H), jnp.float32)
        outs = []
        for t in range(T):
            g = (y[:, t, :] @ lp["w_ih"].T + lp["b_ih"]
                 + h @ lp["w_hh"].T + lp["b_hh"])
            i = jax.nn.sigmoid(g[:, 0 * H:1 * H])
            f = jax.nn.sigmoid(g[:, 1 * H:2 * H])
            gg = jnp.tanh(g[:, 2 * H:3 * H])
            o = jax.nn.sigmoid(g[:, 3 * H:4 * H])
            c = f * c + i * gg
            h = o * jnp.tanh(c)
            outs.append(h)
        y = jnp.stack(outs, axis=1)
    h1 = jax.nn.relu(y @ raw["w1"].T + raw["b1"])
    h2 = jax.nn.relu(h1 @ raw["w2"].T + raw["b2"])
    logits = h2 @ raw["w3"].T + raw["b3"]
    return jax.nn.softmax(logits, axis=-1)


if __name__ == "__main__":
    input_size, hidden_size, num_layers, output_size = 16, 32, 2, 4
    B, T = 2, 8

    key = jax.random.PRNGKey(0)
    key, pkey, xkey = jax.random.split(key, 3)
    raw_params = init_params(pkey, input_size, hidden_size, num_layers,
                             output_size)
    params = prepare_params(raw_params)                      # f32 operands
    x = jax.random.normal(xkey, (B, T, input_size), jnp.float32)

    out = jax.jit(net_forward)(params, x)
    out = jax.block_until_ready(out)

    ref = net_forward_ref(raw_params, x)

    assert out.shape == (B, T, output_size)
    # Exact softmax normalization now (no approx reciprocal).
    assert bool(jnp.allclose(jnp.sum(out, axis=-1), 1.0, atol=1e-5))
    assert bool(jnp.allclose(out, ref, atol=1e-3, rtol=1e-3))
    print("KERNEL_OK")
</pallas_src>

<mosaic_0001>
module attributes {stable_mosaic.version = 11 : i64} {
  func.func @kernel(%arg0: memref<64x16xf32, #tpu.memory_space<vmem>>, %arg1: memref<16x128xf32, #tpu.memory_space<vmem>>, %arg2: memref<32x128xf32, #tpu.memory_space<vmem>>, %arg3: memref<1x128xf32, #tpu.memory_space<vmem>>, %arg4: memref<32x128xf32, #tpu.memory_space<vmem>>, %arg5: memref<32x128xf32, #tpu.memory_space<vmem>>, %arg6: memref<1x128xf32, #tpu.memory_space<vmem>>, %arg7: memref<32x16xf32, #tpu.memory_space<vmem>>, %arg8: memref<1x16xf32, #tpu.memory_space<vmem>>, %arg9: memref<16x8xf32, #tpu.memory_space<vmem>>, %arg10: memref<1x8xf32, #tpu.memory_space<vmem>>, %arg11: memref<8x4xf32, #tpu.memory_space<vmem>>, %arg12: memref<1x4xf32, #tpu.memory_space<vmem>>, %arg13: memref<64x4xf32, #tpu.memory_space<vmem>>) attributes {dimension_semantics = [], scalar_prefetch = 0 : i64, scratch_operands = 0 : i64, tpu.core_type = #tpu.core_type<tc>} {
    %c0 = arith.constant 0 : index
    %c0_0 = arith.constant 0 : index
    %0 = vector.load %arg3[%c0, %c0_0] : memref<1x128xf32, #tpu.memory_space<vmem>>, vector<1x128xf32>
    %c0_1 = arith.constant 0 : index
    %c0_2 = arith.constant 0 : index
    %1 = vector.load %arg6[%c0_1, %c0_2] : memref<1x128xf32, #tpu.memory_space<vmem>>, vector<1x128xf32>
    %c0_3 = arith.constant 0 : index
    %c0_4 = arith.constant 0 : index
    %2 = vector.load %arg0[%c0_3, %c0_4] : memref<64x16xf32, #tpu.memory_space<vmem>>, vector<64x16xf32>
    %c0_5 = arith.constant 0 : index
    %c0_6 = arith.constant 0 : index
    %3 = vector.load %arg1[%c0_5, %c0_6] : memref<16x128xf32, #tpu.memory_space<vmem>>, vector<16x128xf32>
    %cst = arith.constant dense<0.000000e+00> : vector<64x128xf32>
    %4 = tpu.matmul %2, %3, %cst {dimension_numbers = #tpu.dot_dimension_numbers<[1], [0], [0], [1], [0, 0, 1, 1], [], []>} : vector<64x16xf32>, vector<16x128xf32>, vector<64x128xf32> -> vector<64x128xf32>
    %5 = vector.broadcast %0 : vector<1x128xf32> to vector<64x128xf32>
    %6 = arith.addf %4, %5 : vector<64x128xf32>
    %cst_7 = arith.constant 0.000000e+00 : f32
    %7 = vector.broadcast %cst_7 : f32 to vector<8x32xf32>
    %cst_8 = arith.constant 0.000000e+00 : f32
    %8 = vector.broadcast %cst_8 : f32 to vector<8x32xf32>
    %cst_9 = arith.constant 0.000000e+00 : f32
    %9 = vector.broadcast %cst_9 : f32 to vector<8x32xf32>
    %cst_10 = arith.constant 0.000000e+00 : f32
    %10 = vector.broadcast %cst_10 : f32 to vector<8x32xf32>
    %11 = vector.extract_strided_slice %6 {offsets = [0, 0], sizes = [8, 128], strides = [1, 1]} : vector<64x128xf32> to vector<8x128xf32>
    %c0_11 = arith.constant 0 : index
    %c0_12 = arith.constant 0 : index
    %12 = vector.load %arg2[%c0_11, %c0_12] : memref<32x128xf32, #tpu.memory_space<vmem>>, vector<32x128xf32>
    %cst_13 = arith.constant dense<0.000000e+00> : vector<8x128xf32>
    %13 = tpu.matmul %7, %12, %cst_13 {dimension_numbers = #tpu.dot_dimension_numbers<[1], [0], [0], [1], [0, 0, 1, 1], [], []>} : vector<8x32xf32>, vector<32x128xf32>, vector<8x128xf32> -> vector<8x128xf32>
    %14 = arith.addf %11, %13 : vector<8x128xf32>
    %15 = arith.negf %14 : vector<8x128xf32>
    %16 = math.exp %15 : vector<8x128xf32>
    %cst_14 = arith.constant 1.000000e+00 : f32
    %17 = vector.broadcast %cst_14 : f32 to vector<8x128xf32>
    %18 = arith.addf %17, %16 : vector<8x128xf32>
    %19 = arith.divf %17, %18 : vector<8x128xf32>
    %20 = vector.extract_strided_slice %19 {offsets = [0, 0], sizes = [8, 32], strides = [1, 1]} : vector<8x128xf32> to vector<8x32xf32>
    %21 = vector.extract_strided_slice %19 {offsets = [0, 32], sizes = [8, 32], strides = [1, 1]} : vector<8x128xf32> to vector<8x32xf32>
    %22 = vector.extract_strided_slice %19 {offsets = [0, 96], sizes = [8, 32], strides = [1, 1]} : vector<8x128xf32> to vector<8x32xf32>
    %23 = vector.extract_strided_slice %14 {offsets = [0, 64], sizes = [8, 32], strides = [1, 1]} : vector<8x128xf32> to vector<8x32xf32>
    %24 = math.tanh %23 : vector<8x32xf32>
    %25 = arith.mulf %21, %9 : vector<8x32xf32>
    %26 = arith.mulf %20, %24 : vector<8x32xf32>
    %27 = arith.addf %25, %26 : vector<8x32xf32>
    %28 = math.tanh %27 : vector<8x32xf32>
    %29 = arith.mulf %22, %28 : vector<8x32xf32>
    %c0_15 = arith.constant 0 : index
    %c0_16 = arith.constant 0 : index
    %30 = vector.load %arg4[%c0_15, %c0_16] : memref<32x128xf32, #tpu.memory_space<vmem>>, vector<32x128xf32>
    %cst_17 = arith.constant dense<0.000000e+00> : vector<8x128xf32>
    %31 = tpu.matmul %29, %30, %cst_17 {dimension_numbers = #tpu.dot_dimension_numbers<[1], [0], [0], [1], [0, 0, 1, 1], [], []>} : vector<8x32xf32>, vector<32x128xf32>, vector<8x128xf32> -> vector<8x128xf32>
    %c0_18 = arith.constant 0 : index
    %c0_19 = arith.constant 0 : index
    %32 = vector.load %arg5[%c0_18, %c0_19] : memref<32x128xf32, #tpu.memory_space<vmem>>, vector<32x128xf32>
    %cst_20 = arith.constant dense<0.000000e+00> : vector<8x128xf32>
    %33 = tpu.matmul %8, %32, %cst_20 {dimension_numbers = #tpu.dot_dimension_numbers<[1], [0], [0], [1], [0, 0, 1, 1], [], []>} : vector<8x32xf32>, vector<32x128xf32>, vector<8x128xf32> -> vector<8x128xf32>
    %34 = arith.addf %31, %33 : vector<8x128xf32>
    %35 = vector.broadcast %1 : vector<1x128xf32> to vector<8x128xf32>
    %36 = arith.addf %34, %35 : vector<8x128xf32>
    %37 = arith.negf %36 : vector<8x128xf32>
    %38 = math.exp %37 : vector<8x128xf32>
    %cst_21 = arith.constant 1.000000e+00 : f32
    %39 = vector.broadcast %cst_21 : f32 to vector<8x128xf32>
    %40 = arith.addf %39, %38 : vector<8x128xf32>
    %41 = arith.divf %39, %40 : vector<8x128xf32>
    %42 = vector.extract_strided_slice %41 {offsets = [0, 0], sizes = [8, 32], strides = [1, 1]} : vector<8x128xf32> to vector<8x32xf32>
    %43 = vector.extract_strided_slice %41 {offsets = [0, 32], sizes = [8, 32], strides = [1, 1]} : vector<8x128xf32> to vector<8x32xf32>
    %44 = vector.extract_strided_slice %41 {offsets = [0, 96], sizes = [8, 32], strides = [1, 1]} : vector<8x128xf32> to vector<8x32xf32>
    %45 = vector.extract_strided_slice %36 {offsets = [0, 64], sizes = [8, 32], strides = [1, 1]} : vector<8x128xf32> to vector<8x32xf32>
    %46 = math.tanh %45 : vector<8x32xf32>
    %47 = arith.mulf %43, %10 : vector<8x32xf32>
    %48 = arith.mulf %42, %46 : vector<8x32xf32>
    %49 = arith.addf %47, %48 : vector<8x32xf32>
    %50 = math.tanh %49 : vector<8x32xf32>
    %51 = arith.mulf %44, %50 : vector<8x32xf32>
    %52 = vector.extract_strided_slice %6 {offsets = [8, 0], sizes = [8, 128], strides = [1, 1]} : vector<64x128xf32> to vector<8x128xf32>
    %c0_22 = arith.constant 0 : index
    %c0_23 = arith.constant 0 : index
    %53 = vector.load %arg2[%c0_22, %c0_23] : memref<32x128xf32, #tpu.memory_space<vmem>>, vector<32x128xf32>
    %cst_24 = arith.constant dense<0.000000e+00> : vector<8x128xf32>
    %54 = tpu.matmul %29, %53, %cst_24 {dimension_numbers = #tpu.dot_dimension_numbers<[1], [0], [0], [1], [0, 0, 1, 1], [], []>} : vector<8x32xf32>, vector<32x128xf32>, vector<8x128xf32> -> vector<8x128xf32>
    %55 = arith.addf %52, %54 : vector<8x128xf32>
    %56 = arith.negf %55 : vector<8x128xf32>
    %57 = math.exp %56 : vector<8x128xf32>
    %cst_25 = arith.constant 1.000000e+00 : f32
    %58 = vector.broadcast %cst_25 : f32 to vector<8x128xf32>
    %59 = arith.addf %58, %57 : vector<8x128xf32>
    %60 = arith.divf %58, %59 : vector<8x128xf32>
    %61 = vector.extract_strided_slice %60 {offsets = [0, 0], sizes = [8, 32], strides = [1, 1]} : vector<8x128xf32> to vector<8x32xf32>
    %62 = vector.extract_strided_slice %60 {offsets = [0, 32], sizes = [8, 32], strides = [1, 1]} : vector<8x128xf32> to vector<8x32xf32>
    %63 = vector.extract_strided_slice %60 {offsets = [0, 96], sizes = [8, 32], strides = [1, 1]} : vector<8x128xf32> to vector<8x32xf32>
    %64 = vector.extract_strided_slice %55 {offsets = [0, 64], sizes = [8, 32], strides = [1, 1]} : vector<8x128xf32> to vector<8x32xf32>
    %65 = math.tanh %64 : vector<8x32xf32>
    %66 = arith.mulf %62, %27 : vector<8x32xf32>
    %67 = arith.mulf %61, %65 : vector<8x32xf32>
    %68 = arith.addf %66, %67 : vector<8x32xf32>
    %69 = math.tanh %68 : vector<8x32xf32>
    %70 = arith.mulf %63, %69 : vector<8x32xf32>
    %c0_26 = arith.constant 0 : index
    %c0_27 = arith.constant 0 : index
    %71 = vector.load %arg4[%c0_26, %c0_27] : memref<32x128xf32, #tpu.memory_space<vmem>>, vector<32x128xf32>
    %cst_28 = arith.constant dense<0.000000e+00> : vector<8x128xf32>
    %72 = tpu.matmul %70, %71, %cst_28 {dimension_numbers = #tpu.dot_dimension_numbers<[1], [0], [0], [1], [0, 0, 1, 1], [], []>} : vector<8x32xf32>, vector<32x128xf32>, vector<8x128xf32> -> vector<8x128xf32>
    %c0_29 = arith.constant 0 : index
    %c0_30 = arith.constant 0 : index
    %73 = vector.load %arg5[%c0_29, %c0_30] : memref<32x128xf32, #tpu.memory_space<vmem>>, vector<32x128xf32>
    %cst_31 = arith.constant dense<0.000000e+00> : vector<8x128xf32>
    %74 = tpu.matmul %51, %73, %cst_31 {dimension_numbers = #tpu.dot_dimension_numbers<[1], [0], [0], [1], [0, 0, 1, 1], [], []>} : vector<8x32xf32>, vector<32x128xf32>, vector<8x128xf32> -> vector<8x128xf32>
    %75 = arith.addf %72, %74 : vector<8x128xf32>
    %76 = vector.broadcast %1 : vector<1x128xf32> to vector<8x128xf32>
    %77 = arith.addf %75, %76 : vector<8x128xf32>
    %78 = arith.negf %77 : vector<8x128xf32>
    %79 = math.exp %78 : vector<8x128xf32>
    %cst_32 = arith.constant 1.000000e+00 : f32
    %80 = vector.broadcast %cst_32 : f32 to vector<8x128xf32>
    %81 = arith.addf %80, %79 : vector<8x128xf32>
    %82 = arith.divf %80, %81 : vector<8x128xf32>
    %83 = vector.extract_strided_slice %82 {offsets = [0, 0], sizes = [8, 32], strides = [1, 1]} : vector<8x128xf32> to vector<8x32xf32>
    %84 = vector.extract_strided_slice %82 {offsets = [0, 32], sizes = [8, 32], strides = [1, 1]} : vector<8x128xf32> to vector<8x32xf32>
    %85 = vector.extract_strided_slice %82 {offsets = [0, 96], sizes = [8, 32], strides = [1, 1]} : vector<8x128xf32> to vector<8x32xf32>
    %86 = vector.extract_strided_slice %77 {offsets = [0, 64], sizes = [8, 32], strides = [1, 1]} : vector<8x128xf32> to vector<8x32xf32>
    %87 = math.tanh %86 : vector<8x32xf32>
    %88 = arith.mulf %84, %49 : vector<8x32xf32>
    %89 = arith.mulf %83, %87 : vector<8x32xf32>
    %90 = arith.addf %88, %89 : vector<8x32xf32>
    %91 = math.tanh %90 : vector<8x32xf32>
    %92 = arith.mulf %85, %91 : vector<8x32xf32>
    %93 = vector.extract_strided_slice %6 {offsets = [16, 0], sizes = [8, 128], strides = [1, 1]} : vector<64x128xf32> to vector<8x128xf32>
    %c0_33 = arith.constant 0 : index
    %c0_34 = arith.constant 0 : index
    %94 = vector.load %arg2[%c0_33, %c0_34] : memref<32x128xf32, #tpu.memory_space<vmem>>, vector<32x128xf32>
    %cst_35 = arith.constant dense<0.000000e+00> : vector<8x128xf32>
    %95 = tpu.matmul %70, %94, %cst_35 {dimension_numbers = #tpu.dot_dimension_numbers<[1], [0], [0], [1], [0, 0, 1, 1], [], []>} : vector<8x32xf32>, vector<32x128xf32>, vector<8x128xf32> -> vector<8x128xf32>
    %96 = arith.addf %93, %95 : vector<8x128xf32>
    %97 = arith.negf %96 : vector<8x128xf32>
    %98 = math.exp %97 : vector<8x128xf32>
    %cst_36 = arith.constant 1.000000e+00 : f32
    %99 = vector.broadcast %cst_36 : f32 to vector<8x128xf32>
    %100 = arith.addf %99, %98 : vector<8x128xf32>
    %101 = arith.divf %99, %100 : vector<8x128xf32>
    %102 = vector.extract_strided_slice %101 {offsets = [0, 0], sizes = [8, 32], strides = [1, 1]} : vector<8x128xf32> to vector<8x32xf32>
    %103 = vector.extract_strided_slice %101 {offsets = [0, 32], sizes = [8, 32], strides = [1, 1]} : vector<8x128xf32> to vector<8x32xf32>
    %104 = vector.extract_strided_slice %101 {offsets = [0, 96], sizes = [8, 32], strides = [1, 1]} : vector<8x128xf32> to vector<8x32xf32>
    %105 = vector.extract_strided_slice %96 {offsets = [0, 64], sizes = [8, 32], strides = [1, 1]} : vector<8x128xf32> to vector<8x32xf32>
    %106 = math.tanh %105 : vector<8x32xf32>
    %107 = arith.mulf %103, %68 : vector<8x32xf32>
    %108 = arith.mulf %102, %106 : vector<8x32xf32>
    %109 = arith.addf %107, %108 : vector<8x32xf32>
    %110 = math.tanh %109 : vector<8x32xf32>
    %111 = arith.mulf %104, %110 : vector<8x32xf32>
    %c0_37 = arith.constant 0 : index
    %c0_38 = arith.constant 0 : index
    %112 = vector.load %arg4[%c0_37, %c0_38] : memref<32x128xf32, #tpu.memory_space<vmem>>, vector<32x128xf32>
    %cst_39 = arith.constant dense<0.000000e+00> : vector<8x128xf32>
    %113 = tpu.matmul %111, %112, %cst_39 {dimension_numbers = #tpu.dot_dimension_numbers<[1], [0], [0], [1], [0, 0, 1, 1], [], []>} : vector<8x32xf32>, vector<32x128xf32>, vector<8x128xf32> -> vector<8x128xf32>
    %c0_40 = arith.constant 0 : index
    %c0_41 = arith.constant 0 : index
    %114 = vector.load %arg5[%c0_40, %c0_41] : memref<32x128xf32, #tpu.memory_space<vmem>>, vector<32x128xf32>
    %cst_42 = arith.constant dense<0.000000e+00> : vector<8x128xf32>
    %115 = tpu.matmul %92, %114, %cst_42 {dimension_numbers = #tpu.dot_dimension_numbers<[1], [0], [0], [1], [0, 0, 1, 1], [], []>} : vector<8x32xf32>, vector<32x128xf32>, vector<8x128xf32> -> vector<8x128xf32>
    %116 = arith.addf %113, %115 : vector<8x128xf32>
    %117 = vector.broadcast %1 : vector<1x128xf32> to vector<8x128xf32>
    %118 = arith.addf %116, %117 : vector<8x128xf32>
    %119 = arith.negf %118 : vector<8x128xf32>
    %120 = math.exp %119 : vector<8x128xf32>
    %cst_43 = arith.constant 1.000000e+00 : f32
    %121 = vector.broadcast %cst_43 : f32 to vector<8x128xf32>
    %122 = arith.addf %121, %120 : vector<8x128xf32>
    %123 = arith.divf %121, %122 : vector<8x128xf32>
    %124 = vector.extract_strided_slice %123 {offsets = [0, 0], sizes = [8, 32], strides = [1, 1]} : vector<8x128xf32> to vector<8x32xf32>
    %125 = vector.extract_strided_slice %123 {offsets = [0, 32], sizes = [8, 32], strides = [1, 1]} : vector<8x128xf32> to vector<8x32xf32>
    %126 = vector.extract_strided_slice %123 {offsets = [0, 96], sizes = [8, 32], strides = [1, 1]} : vector<8x128xf32> to vector<8x32xf32>
    %127 = vector.extract_strided_slice %118 {offsets = [0, 64], sizes = [8, 32], strides = [1, 1]} : vector<8x128xf32> to vector<8x32xf32>
    %128 = math.tanh %127 : vector<8x32xf32>
    %129 = arith.mulf %125, %90 : vector<8x32xf32>
    %130 = arith.mulf %124, %128 : vector<8x32xf32>
    %131 = arith.addf %129, %130 : vector<8x32xf32>
    %132 = math.tanh %131 : vector<8x32xf32>
    %133 = arith.mulf %126, %132 : vector<8x32xf32>
    %134 = vector.extract_strided_slice %6 {offsets = [24, 0], sizes = [8, 128], strides = [1, 1]} : vector<64x128xf32> to vector<8x128xf32>
    %c0_44 = arith.constant 0 : index
    %c0_45 = arith.constant 0 : index
    %135 = vector.load %arg2[%c0_44, %c0_45] : memref<32x128xf32, #tpu.memory_space<vmem>>, vector<32x128xf32>
    %cst_46 = arith.constant dense<0.000000e+00> : vector<8x128xf32>
    %136 = tpu.matmul %111, %135, %cst_46 {dimension_numbers = #tpu.dot_dimension_numbers<[1], [0], [0], [1], [0, 0, 1, 1], [], []>} : vector<8x32xf32>, vector<32x128xf32>, vector<8x128xf32> -> vector<8x128xf32>
    %137 = arith.addf %134, %136 : vector<8x128xf32>
    %138 = arith.negf %137 : vector<8x128xf32>
    %139 = math.exp %138 : vector<8x128xf32>
    %cst_47 = arith.constant 1.000000e+00 : f32
    %140 = vector.broadcast %cst_47 : f32 to vector<8x128xf32>
    %141 = arith.addf %140, %139 : vector<8x128xf32>
    %142 = arith.divf %140, %141 : vector<8x128xf32>
    %143 = vector.extract_strided_slice %142 {offsets = [0, 0], sizes = [8, 32], strides = [1, 1]} : vector<8x128xf32> to vector<8x32xf32>
    %144 = vector.extract_strided_slice %142 {offsets = [0, 32], sizes = [8, 32], strides = [1, 1]} : vector<8x128xf32> to vector<8x32xf32>
    %145 = vector.extract_strided_slice %142 {offsets = [0, 96], sizes = [8, 32], strides = [1, 1]} : vector<8x128xf32> to vector<8x32xf32>
    %146 = vector.extract_strided_slice %137 {offsets = [0, 64], sizes = [8, 32], strides = [1, 1]} : vector<8x128xf32> to vector<8x32xf32>
    %147 = math.tanh %146 : vector<8x32xf32>
    %148 = arith.mulf %144, %109 : vector<8x32xf32>
    %149 = arith.mulf %143, %147 : vector<8x32xf32>
    %150 = arith.addf %148, %149 : vector<8x32xf32>
    %151 = math.tanh %150 : vector<8x32xf32>
    %152 = arith.mulf %145, %151 : vector<8x32xf32>
    %c0_48 = arith.constant 0 : index
    %c0_49 = arith.constant 0 : index
    %153 = vector.load %arg4[%c0_48, %c0_49] : memref<32x128xf32, #tpu.memory_space<vmem>>, vector<32x128xf32>
    %cst_50 = arith.constant dense<0.000000e+00> : vector<8x128xf32>
    %154 = tpu.matmul %152, %153, %cst_50 {dimension_numbers = #tpu.dot_dimension_numbers<[1], [0], [0], [1], [0, 0, 1, 1], [], []>} : vector<8x32xf32>, vector<32x128xf32>, vector<8x128xf32> -> vector<8x128xf32>
    %c0_51 = arith.constant 0 : index
    %c0_52 = arith.constant 0 : index
    %155 = vector.load %arg5[%c0_51, %c0_52] : memref<32x128xf32, #tpu.memory_space<vmem>>, vector<32x128xf32>
    %cst_53 = arith.constant dense<0.000000e+00> : vector<8x128xf32>
    %156 = tpu.matmul %133, %155, %cst_53 {dimension_numbers = #tpu.dot_dimension_numbers<[1], [0], [0], [1], [0, 0, 1, 1], [], []>} : vector<8x32xf32>, vector<32x128xf32>, vector<8x128xf32> -> vector<8x128xf32>
    %157 = arith.addf %154, %156 : vector<8x128xf32>
    %158 = vector.broadcast %1 : vector<1x128xf32> to vector<8x128xf32>
    %159 = arith.addf %157, %158 : vector<8x128xf32>
    %160 = arith.negf %159 : vector<8x128xf32>
    %161 = math.exp %160 : vector<8x128xf32>
    %cst_54 = arith.constant 1.000000e+00 : f32
    %162 = vector.broadcast %cst_54 : f32 to vector<8x128xf32>
    %163 = arith.addf %162, %161 : vector<8x128xf32>
    %164 = arith.divf %162, %163 : vector<8x128xf32>
    %165 = vector.extract_strided_slice %164 {offsets = [0, 0], sizes = [8, 32], strides = [1, 1]} : vector<8x128xf32> to vector<8x32xf32>
    %166 = vector.extract_strided_slice %164 {offsets = [0, 32], sizes = [8, 32], strides = [1, 1]} : vector<8x128xf32> to vector<8x32xf32>
    %167 = vector.extract_strided_slice %164 {offsets = [0, 96], sizes = [8, 32], strides = [1, 1]} : vector<8x128xf32> to vector<8x32xf32>
    %168 = vector.extract_strided_slice %159 {offsets = [0, 64], sizes = [8, 32], strides = [1, 1]} : vector<8x128xf32> to vector<8x32xf32>
    %169 = math.tanh %168 : vector<8x32xf32>
    %170 = arith.mulf %166, %131 : vector<8x32xf32>
    %171 = arith.mulf %165, %169 : vector<8x32xf32>
    %172 = arith.addf %170, %171 : vector<8x32xf32>
    %173 = math.tanh %172 : vector<8x32xf32>
    %174 = arith.mulf %167, %173 : vector<8x32xf32>
    %175 = vector.extract_strided_slice %6 {offsets = [32, 0], sizes = [8, 128], strides = [1, 1]} : vector<64x128xf32> to vector<8x128xf32>
    %c0_55 = arith.constant 0 : index
    %c0_56 = arith.constant 0 : index
    %176 = vector.load %arg2[%c0_55, %c0_56] : memref<32x128xf32, #tpu.memory_space<vmem>>, vector<32x128xf32>
    %cst_57 = arith.constant dense<0.000000e+00> : vector<8x128xf32>
    %177 = tpu.matmul %152, %176, %cst_57 {dimension_numbers = #tpu.dot_dimension_numbers<[1], [0], [0], [1], [0, 0, 1, 1], [], []>} : vector<8x32xf32>, vector<32x128xf32>, vector<8x128xf32> -> vector<8x128xf32>
    %178 = arith.addf %175, %177 : vector<8x128xf32>
    %179 = arith.negf %178 : vector<8x128xf32>
    %180 = math.exp %179 : vector<8x128xf32>
    %cst_58 = arith.constant 1.000000e+00 : f32
    %181 = vector.broadcast %cst_58 : f32 to vector<8x128xf32>
    %182 = arith.addf %181, %180 : vector<8x128xf32>
    %183 = arith.divf %181, %182 : vector<8x128xf32>
    %184 = vector.extract_strided_slice %183 {offsets = [0, 0], sizes = [8, 32], strides = [1, 1]} : vector<8x128xf32> to vector<8x32xf32>
    %185 = vector.extract_strided_slice %183 {offsets = [0, 32], sizes = [8, 32], strides = [1, 1]} : vector<8x128xf32> to vector<8x32xf32>
    %186 = vector.extract_strided_slice %183 {offsets = [0, 96], sizes = [8, 32], strides = [1, 1]} : vector<8x128xf32> to vector<8x32xf32>
    %187 = vector.extract_strided_slice %178 {offsets = [0, 64], sizes = [8, 32], strides = [1, 1]} : vector<8x128xf32> to vector<8x32xf32>
    %188 = math.tanh %187 : vector<8x32xf32>
    %189 = arith.mulf %185, %150 : vector<8x32xf32>
    %190 = arith.mulf %184, %188 : vector<8x32xf32>
    %191 = arith.addf %189, %190 : vector<8x32xf32>
    %192 = math.tanh %191 : vector<8x32xf32>
    %193 = arith.mulf %186, %192 : vector<8x32xf32>
    %c0_59 = arith.constant 0 : index
    %c0_60 = arith.constant 0 : index
    %194 = vector.load %arg4[%c0_59, %c0_60] : memref<32x128xf32, #tpu.memory_space<vmem>>, vector<32x128xf32>
    %cst_61 = arith.constant dense<0.000000e+00> : vector<8x128xf32>
    %195 = tpu.matmul %193, %194, %cst_61 {dimension_numbers = #tpu.dot_dimension_numbers<[1], [0], [0], [1], [0, 0, 1, 1], [], []>} : vector<8x32xf32>, vector<32x128xf32>, vector<8x128xf32> -> vector<8x128xf32>
    %c0_62 = arith.constant 0 : index
    %c0_63 = arith.constant 0 : index
    %196 = vector.load %arg5[%c0_62, %c0_63] : memref<32x128xf32, #tpu.memory_space<vmem>>, vector<32x128xf32>
    %cst_64 = arith.constant dense<0.000000e+00> : vector<8x128xf32>
    %197 = tpu.matmul %174, %196, %cst_64 {dimension_numbers = #tpu.dot_dimension_numbers<[1], [0], [0], [1], [0, 0, 1, 1], [], []>} : vector<8x32xf32>, vector<32x128xf32>, vector<8x128xf32> -> vector<8x128xf32>
    %198 = arith.addf %195, %197 : vector<8x128xf32>
    %199 = vector.broadcast %1 : vector<1x128xf32> to vector<8x128xf32>
    %200 = arith.addf %198, %199 : vector<8x128xf32>
    %201 = arith.negf %200 : vector<8x128xf32>
    %202 = math.exp %201 : vector<8x128xf32>
    %cst_65 = arith.constant 1.000000e+00 : f32
    %203 = vector.broadcast %cst_65 : f32 to vector<8x128xf32>
    %204 = arith.addf %203, %202 : vector<8x128xf32>
    %205 = arith.divf %203, %204 : vector<8x128xf32>
    %206 = vector.extract_strided_slice %205 {offsets = [0, 0], sizes = [8, 32], strides = [1, 1]} : vector<8x128xf32> to vector<8x32xf32>
    %207 = vector.extract_strided_slice %205 {offsets = [0, 32], sizes = [8, 32], strides = [1, 1]} : vector<8x128xf32> to vector<8x32xf32>
    %208 = vector.extract_strided_slice %205 {offsets = [0, 96], sizes = [8, 32], strides = [1, 1]} : vector<8x128xf32> to vector<8x32xf32>
    %209 = vector.extract_strided_slice %200 {offsets = [0, 64], sizes = [8, 32], strides = [1, 1]} : vector<8x128xf32> to vector<8x32xf32>
    %210 = math.tanh %209 : vector<8x32xf32>
    %211 = arith.mulf %207, %172 : vector<8x32xf32>
    %212 = arith.mulf %206, %210 : vector<8x32xf32>
    %213 = arith.addf %211, %212 : vector<8x32xf32>
    %214 = math.tanh %213 : vector<8x32xf32>
    %215 = arith.mulf %208, %214 : vector<8x32xf32>
    %216 = vector.extract_strided_slice %6 {offsets = [40, 0], sizes = [8, 128], strides = [1, 1]} : vector<64x128xf32> to vector<8x128xf32>
    %c0_66 = arith.constant 0 : index
    %c0_67 = arith.constant 0 : index
    %217 = vector.load %arg2[%c0_66, %c0_67] : memref<32x128xf32, #tpu.memory_space<vmem>>, vector<32x128xf32>
    %cst_68 = arith.constant dense<0.000000e+00> : vector<8x128xf32>
    %218 = tpu.matmul %193, %217, %cst_68 {dimension_numbers = #tpu.dot_dimension_numbers<[1], [0], [0], [1], [0, 0, 1, 1], [], []>} : vector<8x32xf32>, vector<32x128xf32>, vector<8x128xf32> -> vector<8x128xf32>
    %219 = arith.addf %216, %218 : vector<8x128xf32>
    %220 = arith.negf %219 : vector<8x128xf32>
    %221 = math.exp %220 : vector<8x128xf32>
    %cst_69 = arith.constant 1.000000e+00 : f32
    %222 = vector.broadcast %cst_69 : f32 to vector<8x128xf32>
    %223 = arith.addf %222, %221 : vector<8x128xf32>
    %224 = arith.divf %222, %223 : vector<8x128xf32>
    %225 = vector.extract_strided_slice %224 {offsets = [0, 0], sizes = [8, 32], strides = [1, 1]} : vector<8x128xf32> to vector<8x32xf32>
    %226 = vector.extract_strided_slice %224 {offsets = [0, 32], sizes = [8, 32], strides = [1, 1]} : vector<8x128xf32> to vector<8x32xf32>
    %227 = vector.extract_strided_slice %224 {offsets = [0, 96], sizes = [8, 32], strides = [1, 1]} : vector<8x128xf32> to vector<8x32xf32>
    %228 = vector.extract_strided_slice %219 {offsets = [0, 64], sizes = [8, 32], strides = [1, 1]} : vector<8x128xf32> to vector<8x32xf32>
    %229 = math.tanh %228 : vector<8x32xf32>
    %230 = arith.mulf %226, %191 : vector<8x32xf32>
    %231 = arith.mulf %225, %229 : vector<8x32xf32>
    %232 = arith.addf %230, %231 : vector<8x32xf32>
    %233 = math.tanh %232 : vector<8x32xf32>
    %234 = arith.mulf %227, %233 : vector<8x32xf32>
    %c0_70 = arith.constant 0 : index
    %c0_71 = arith.constant 0 : index
    %235 = vector.load %arg4[%c0_70, %c0_71] : memref<32x128xf32, #tpu.memory_space<vmem>>, vector<32x128xf32>
    %cst_72 = arith.constant dense<0.000000e+00> : vector<8x128xf32>
    %236 = tpu.matmul %234, %235, %cst_72 {dimension_numbers = #tpu.dot_dimension_numbers<[1], [0], [0], [1], [0, 0, 1, 1], [], []>} : vector<8x32xf32>, vector<32x128xf32>, vector<8x128xf32> -> vector<8x128xf32>
    %c0_73 = arith.constant 0 : index
    %c0_74 = arith.constant 0 : index
    %237 = vector.load %arg5[%c0_73, %c0_74] : memref<32x128xf32, #tpu.memory_space<vmem>>, vector<32x128xf32>
    %cst_75 = arith.constant dense<0.000000e+00> : vector<8x128xf32>
    %238 = tpu.matmul %215, %237, %cst_75 {dimension_numbers = #tpu.dot_dimension_numbers<[1], [0], [0], [1], [0, 0, 1, 1], [], []>} : vector<8x32xf32>, vector<32x128xf32>, vector<8x128xf32> -> vector<8x128xf32>
    %239 = arith.addf %236, %238 : vector<8x128xf32>
    %240 = vector.broadcast %1 : vector<1x128xf32> to vector<8x128xf32>
    %241 = arith.addf %239, %240 : vector<8x128xf32>
    %242 = arith.negf %241 : vector<8x128xf32>
    %243 = math.exp %242 : vector<8x128xf32>
    %cst_76 = arith.constant 1.000000e+00 : f32
    %244 = vector.broadcast %cst_76 : f32 to vector<8x128xf32>
    %245 = arith.addf %244, %243 : vector<8x128xf32>
    %246 = arith.divf %244, %245 : vector<8x128xf32>
    %247 = vector.extract_strided_slice %246 {offsets = [0, 0], sizes = [8, 32], strides = [1, 1]} : vector<8x128xf32> to vector<8x32xf32>
    %248 = vector.extract_strided_slice %246 {offsets = [0, 32], sizes = [8, 32], strides = [1, 1]} : vector<8x128xf32> to vector<8x32xf32>
    %249 = vector.extract_strided_slice %246 {offsets = [0, 96], sizes = [8, 32], strides = [1, 1]} : vector<8x128xf32> to vector<8x32xf32>
    %250 = vector.extract_strided_slice %241 {offsets = [0, 64], sizes = [8, 32], strides = [1, 1]} : vector<8x128xf32> to vector<8x32xf32>
    %251 = math.tanh %250 : vector<8x32xf32>
    %252 = arith.mulf %248, %213 : vector<8x32xf32>
    %253 = arith.mulf %247, %251 : vector<8x32xf32>
    %254 = arith.addf %252, %253 : vector<8x32xf32>
    %255 = math.tanh %254 : vector<8x32xf32>
    %256 = arith.mulf %249, %255 : vector<8x32xf32>
    %257 = vector.extract_strided_slice %6 {offsets = [48, 0], sizes = [8, 128], strides = [1, 1]} : vector<64x128xf32> to vector<8x128xf32>
    %c0_77 = arith.constant 0 : index
    %c0_78 = arith.constant 0 : index
    %258 = vector.load %arg2[%c0_77, %c0_78] : memref<32x128xf32, #tpu.memory_space<vmem>>, vector<32x128xf32>
    %cst_79 = arith.constant dense<0.000000e+00> : vector<8x128xf32>
    %259 = tpu.matmul %234, %258, %cst_79 {dimension_numbers = #tpu.dot_dimension_numbers<[1], [0], [0], [1], [0, 0, 1, 1], [], []>} : vector<8x32xf32>, vector<32x128xf32>, vector<8x128xf32> -> vector<8x128xf32>
    %260 = arith.addf %257, %259 : vector<8x128xf32>
    %261 = arith.negf %260 : vector<8x128xf32>
    %262 = math.exp %261 : vector<8x128xf32>
    %cst_80 = arith.constant 1.000000e+00 : f32
    %263 = vector.broadcast %cst_80 : f32 to vector<8x128xf32>
    %264 = arith.addf %263, %262 : vector<8x128xf32>
    %265 = arith.divf %263, %264 : vector<8x128xf32>
    %266 = vector.extract_strided_slice %265 {offsets = [0, 0], sizes = [8, 32], strides = [1, 1]} : vector<8x128xf32> to vector<8x32xf32>
    %267 = vector.extract_strided_slice %265 {offsets = [0, 32], sizes = [8, 32], strides = [1, 1]} : vector<8x128xf32> to vector<8x32xf32>
    %268 = vector.extract_strided_slice %265 {offsets = [0, 96], sizes = [8, 32], strides = [1, 1]} : vector<8x128xf32> to vector<8x32xf32>
    %269 = vector.extract_strided_slice %260 {offsets = [0, 64], sizes = [8, 32], strides = [1, 1]} : vector<8x128xf32> to vector<8x32xf32>
    %270 = math.tanh %269 : vector<8x32xf32>
    %271 = arith.mulf %267, %232 : vector<8x32xf32>
    %272 = arith.mulf %266, %270 : vector<8x32xf32>
    %273 = arith.addf %271, %272 : vector<8x32xf32>
    %274 = math.tanh %273 : vector<8x32xf32>
    %275 = arith.mulf %268, %274 : vector<8x32xf32>
    %c0_81 = arith.constant 0 : index
    %c0_82 = arith.constant 0 : index
    %276 = vector.load %arg4[%c0_81, %c0_82] : memref<32x128xf32, #tpu.memory_space<vmem>>, vector<32x128xf32>
    %cst_83 = arith.constant dense<0.000000e+00> : vector<8x128xf32>
    %277 = tpu.matmul %275, %276, %cst_83 {dimension_numbers = #tpu.dot_dimension_numbers<[1], [0], [0], [1], [0, 0, 1, 1], [], []>} : vector<8x32xf32>, vector<32x128xf32>, vector<8x128xf32> -> vector<8x128xf32>
    %c0_84 = arith.constant 0 : index
    %c0_85 = arith.constant 0 : index
    %278 = vector.load %arg5[%c0_84, %c0_85] : memref<32x128xf32, #tpu.memory_space<vmem>>, vector<32x128xf32>
    %cst_86 = arith.constant dense<0.000000e+00> : vector<8x128xf32>
    %279 = tpu.matmul %256, %278, %cst_86 {dimension_numbers = #tpu.dot_dimension_numbers<[1], [0], [0], [1], [0, 0, 1, 1], [], []>} : vector<8x32xf32>, vector<32x128xf32>, vector<8x128xf32> -> vector<8x128xf32>
    %280 = arith.addf %277, %279 : vector<8x128xf32>
    %281 = vector.broadcast %1 : vector<1x128xf32> to vector<8x128xf32>
    %282 = arith.addf %280, %281 : vector<8x128xf32>
    %283 = arith.negf %282 : vector<8x128xf32>
    %284 = math.exp %283 : vector<8x128xf32>
    %cst_87 = arith.constant 1.000000e+00 : f32
    %285 = vector.broadcast %cst_87 : f32 to vector<8x128xf32>
    %286 = arith.addf %285, %284 : vector<8x128xf32>
    %287 = arith.divf %285, %286 : vector<8x128xf32>
    %288 = vector.extract_strided_slice %287 {offsets = [0, 0], sizes = [8, 32], strides = [1, 1]} : vector<8x128xf32> to vector<8x32xf32>
    %289 = vector.extract_strided_slice %287 {offsets = [0, 32], sizes = [8, 32], strides = [1, 1]} : vector<8x128xf32> to vector<8x32xf32>
    %290 = vector.extract_strided_slice %287 {offsets = [0, 96], sizes = [8, 32], strides = [1, 1]} : vector<8x128xf32> to vector<8x32xf32>
    %291 = vector.extract_strided_slice %282 {offsets = [0, 64], sizes = [8, 32], strides = [1, 1]} : vector<8x128xf32> to vector<8x32xf32>
    %292 = math.tanh %291 : vector<8x32xf32>
    %293 = arith.mulf %289, %254 : vector<8x32xf32>
    %294 = arith.mulf %288, %292 : vector<8x32xf32>
    %295 = arith.addf %293, %294 : vector<8x32xf32>
    %296 = math.tanh %295 : vector<8x32xf32>
    %297 = arith.mulf %290, %296 : vector<8x32xf32>
    %298 = vector.extract_strided_slice %6 {offsets = [56, 0], sizes = [8, 128], strides = [1, 1]} : vector<64x128xf32> to vector<8x128xf32>
    %c0_88 = arith.constant 0 : index
    %c0_89 = arith.constant 0 : index
    %299 = vector.load %arg2[%c0_88, %c0_89] : memref<32x128xf32, #tpu.memory_space<vmem>>, vector<32x128xf32>
    %cst_90 = arith.constant dense<0.000000e+00> : vector<8x128xf32>
    %300 = tpu.matmul %275, %299, %cst_90 {dimension_numbers = #tpu.dot_dimension_numbers<[1], [0], [0], [1], [0, 0, 1, 1], [], []>} : vector<8x32xf32>, vector<32x128xf32>, vector<8x128xf32> -> vector<8x128xf32>
    %301 = arith.addf %298, %300 : vector<8x128xf32>
    %302 = arith.negf %301 : vector<8x128xf32>
    %303 = math.exp %302 : vector<8x128xf32>
    %cst_91 = arith.constant 1.000000e+00 : f32
    %304 = vector.broadcast %cst_91 : f32 to vector<8x128xf32>
    %305 = arith.addf %304, %303 : vector<8x128xf32>
    %306 = arith.divf %304, %305 : vector<8x128xf32>
    %307 = vector.extract_strided_slice %306 {offsets = [0, 0], sizes = [8, 32], strides = [1, 1]} : vector<8x128xf32> to vector<8x32xf32>
    %308 = vector.extract_strided_slice %306 {offsets = [0, 32], sizes = [8, 32], strides = [1, 1]} : vector<8x128xf32> to vector<8x32xf32>
    %309 = vector.extract_strided_slice %306 {offsets = [0, 96], sizes = [8, 32], strides = [1, 1]} : vector<8x128xf32> to vector<8x32xf32>
    %310 = vector.extract_strided_slice %301 {offsets = [0, 64], sizes = [8, 32], strides = [1, 1]} : vector<8x128xf32> to vector<8x32xf32>
    %311 = math.tanh %310 : vector<8x32xf32>
    %312 = arith.mulf %308, %273 : vector<8x32xf32>
    %313 = arith.mulf %307, %311 : vector<8x32xf32>
    %314 = arith.addf %312, %313 : vector<8x32xf32>
    %315 = math.tanh %314 : vector<8x32xf32>
    %316 = arith.mulf %309, %315 : vector<8x32xf32>
    %c0_92 = arith.constant 0 : index
    %c0_93 = arith.constant 0 : index
    %317 = vector.load %arg4[%c0_92, %c0_93] : memref<32x128xf32, #tpu.memory_space<vmem>>, vector<32x128xf32>
    %cst_94 = arith.constant dense<0.000000e+00> : vector<8x128xf32>
    %318 = tpu.matmul %316, %317, %cst_94 {dimension_numbers = #tpu.dot_dimension_numbers<[1], [0], [0], [1], [0, 0, 1, 1], [], []>} : vector<8x32xf32>, vector<32x128xf32>, vector<8x128xf32> -> vector<8x128xf32>
    %c0_95 = arith.constant 0 : index
    %c0_96 = arith.constant 0 : index
    %319 = vector.load %arg5[%c0_95, %c0_96] : memref<32x128xf32, #tpu.memory_space<vmem>>, vector<32x128xf32>
    %cst_97 = arith.constant dense<0.000000e+00> : vector<8x128xf32>
    %320 = tpu.matmul %297, %319, %cst_97 {dimension_numbers = #tpu.dot_dimension_numbers<[1], [0], [0], [1], [0, 0, 1, 1], [], []>} : vector<8x32xf32>, vector<32x128xf32>, vector<8x128xf32> -> vector<8x128xf32>
    %321 = arith.addf %318, %320 : vector<8x128xf32>
    %322 = vector.broadcast %1 : vector<1x128xf32> to vector<8x128xf32>
    %323 = arith.addf %321, %322 : vector<8x128xf32>
    %324 = arith.negf %323 : vector<8x128xf32>
    %325 = math.exp %324 : vector<8x128xf32>
    %cst_98 = arith.constant 1.000000e+00 : f32
    %326 = vector.broadcast %cst_98 : f32 to vector<8x128xf32>
    %327 = arith.addf %326, %325 : vector<8x128xf32>
    %328 = arith.divf %326, %327 : vector<8x128xf32>
    %329 = vector.extract_strided_slice %328 {offsets = [0, 0], sizes = [8, 32], strides = [1, 1]} : vector<8x128xf32> to vector<8x32xf32>
    %330 = vector.extract_strided_slice %328 {offsets = [0, 32], sizes = [8, 32], strides = [1, 1]} : vector<8x128xf32> to vector<8x32xf32>
    %331 = vector.extract_strided_slice %328 {offsets = [0, 96], sizes = [8, 32], strides = [1, 1]} : vector<8x128xf32> to vector<8x32xf32>
    %332 = vector.extract_strided_slice %323 {offsets = [0, 64], sizes = [8, 32], strides = [1, 1]} : vector<8x128xf32> to vector<8x32xf32>
    %333 = math.tanh %332 : vector<8x32xf32>
    %334 = arith.mulf %330, %295 : vector<8x32xf32>
    %335 = arith.mulf %329, %333 : vector<8x32xf32>
    %336 = arith.addf %334, %335 : vector<8x32xf32>
    %337 = math.tanh %336 : vector<8x32xf32>
    %338 = arith.mulf %331, %337 : vector<8x32xf32>
    %339 = tpu.concatenate %51, %92, %133, %174, %215, %256, %297, %338 in 0 : vector<8x32xf32>, vector<8x32xf32>, vector<8x32xf32>, vector<8x32xf32>, vector<8x32xf32>, vector<8x32xf32>, vector<8x32xf32>, vector<8x32xf32> -> vector<64x32xf32>
    %c0_99 = arith.constant 0 : index
    %c0_100 = arith.constant 0 : index
    %340 = vector.load %arg7[%c0_99, %c0_100] : memref<32x16xf32, #tpu.memory_space<vmem>>, vector<32x16xf32>
    %cst_101 = arith.constant dense<0.000000e+00> : vector<64x16xf32>
    %341 = tpu.matmul %339, %340, %cst_101 {dimension_numbers = #tpu.dot_dimension_numbers<[1], [0], [0], [1], [0, 0, 1, 1], [], []>} : vector<64x32xf32>, vector<32x16xf32>, vector<64x16xf32> -> vector<64x16xf32>
    %c0_102 = arith.constant 0 : index
    %c0_103 = arith.constant 0 : index
    %342 = vector.load %arg8[%c0_102, %c0_103] : memref<1x16xf32, #tpu.memory_space<vmem>>, vector<1x16xf32>
    %343 = vector.broadcast %342 : vector<1x16xf32> to vector<64x16xf32>
    %344 = arith.addf %341, %343 : vector<64x16xf32>
    %cst_104 = arith.constant 0.000000e+00 : f32
    %345 = vector.broadcast %cst_104 : f32 to vector<64x16xf32>
    %346 = arith.maximumf %344, %345 : vector<64x16xf32>
    %c0_105 = arith.constant 0 : index
    %c0_106 = arith.constant 0 : index
    %347 = vector.load %arg9[%c0_105, %c0_106] : memref<16x8xf32, #tpu.memory_space<vmem>>, vector<16x8xf32>
    %cst_107 = arith.constant dense<0.000000e+00> : vector<64x8xf32>
    %348 = tpu.matmul %346, %347, %cst_107 {dimension_numbers = #tpu.dot_dimension_numbers<[1], [0], [0], [1], [0, 0, 1, 1], [], []>} : vector<64x16xf32>, vector<16x8xf32>, vector<64x8xf32> -> vector<64x8xf32>
    %c0_108 = arith.constant 0 : index
    %c0_109 = arith.constant 0 : index
    %349 = vector.load %arg10[%c0_108, %c0_109] : memref<1x8xf32, #tpu.memory_space<vmem>>, vector<1x8xf32>
    %350 = vector.broadcast %349 : vector<1x8xf32> to vector<64x8xf32>
    %351 = arith.addf %348, %350 : vector<64x8xf32>
    %cst_110 = arith.constant 0.000000e+00 : f32
    %352 = vector.broadcast %cst_110 : f32 to vector<64x8xf32>
    %353 = arith.maximumf %351, %352 : vector<64x8xf32>
    %c0_111 = arith.constant 0 : index
    %c0_112 = arith.constant 0 : index
    %354 = vector.load %arg11[%c0_111, %c0_112] : memref<8x4xf32, #tpu.memory_space<vmem>>, vector<8x4xf32>
    %cst_113 = arith.constant dense<0.000000e+00> : vector<64x4xf32>
    %355 = tpu.matmul %353, %354, %cst_113 {dimension_numbers = #tpu.dot_dimension_numbers<[1], [0], [0], [1], [0, 0, 1, 1], [], []>} : vector<64x8xf32>, vector<8x4xf32>, vector<64x4xf32> -> vector<64x4xf32>
    %c0_114 = arith.constant 0 : index
    %c0_115 = arith.constant 0 : index
    %356 = vector.load %arg12[%c0_114, %c0_115] : memref<1x4xf32, #tpu.memory_space<vmem>>, vector<1x4xf32>
    %357 = vector.broadcast %356 : vector<1x4xf32> to vector<64x4xf32>
    %358 = arith.addf %355, %357 : vector<64x4xf32>
    %cst_116 = arith.constant dense<0xFF800000> : vector<64xf32>
    %359 = vector.multi_reduction <maximumf>, %358, %cst_116 [1] : vector<64x4xf32> to vector<64xf32>
    %360 = vector.shape_cast %359 : vector<64xf32> to vector<64x1xf32>
    %361 = vector.broadcast %360 : vector<64x1xf32> to vector<64x4xf32>
    %362 = arith.subf %358, %361 : vector<64x4xf32>
    %363 = math.exp %362 : vector<64x4xf32>
    %cst_117 = arith.constant dense<0.000000e+00> : vector<64xf32>
    %364 = vector.multi_reduction <add>, %363, %cst_117 [1] : vector<64x4xf32> to vector<64xf32>
    %365 = vector.shape_cast %364 : vector<64xf32> to vector<64x1xf32>
    %366 = tpu.reciprocal %365 : vector<64x1xf32> -> vector<64x1xf32>
    %367 = vector.broadcast %366 : vector<64x1xf32> to vector<64x4xf32>
    %368 = arith.mulf %363, %367 : vector<64x4xf32>
    %c0_118 = arith.constant 0 : index
    %c0_119 = arith.constant 0 : index
    %369 = vector.load %arg13[%c0_118, %c0_119] : memref<64x4xf32, #tpu.memory_space<vmem>>, vector<64x4xf32>
    tpu.vector_store %arg13[%c0_118, %c0_119], %368 {strides = array<i32>} : memref<64x4xf32, #tpu.memory_space<vmem>>, vector<64x4xf32>,
    return
  }
}

</mosaic_0001>

<llo_original>
// kernel: net_forward.1
$region0: #{net_forward.1}
  #allocation0 [shape = 'u32[]', space=smem, size = 0x4, offset = 0x4, fixed_abs, tag = 'smem constant byte address 0x4 - core index']
  #allocation1 [shape = 'u32[144,128]{1,0:T(1,128)}', space=vmem, size = 0x12000, scoped, tag = 'internal scratch']
  %s0 = inlined_call_operand.vmem [shape: f32[64,16], index: 0, kind: input, shape index: {}]
  %s1 = inlined_call_operand.vmem [shape: f32[16,128], index: 1, kind: input, shape index: {}]
  %s2 = inlined_call_operand.vmem [shape: f32[32,128], index: 2, kind: input, shape index: {}]
  %s3 = inlined_call_operand.vmem [shape: f32[1,128], index: 3, kind: input, shape index: {}]
  %s4 = inlined_call_operand.vmem [shape: f32[32,128], index: 4, kind: input, shape index: {}]
  %s5 = inlined_call_operand.vmem [shape: f32[32,128], index: 5, kind: input, shape index: {}]
  %s6 = inlined_call_operand.vmem [shape: f32[1,128], index: 6, kind: input, shape index: {}]
  %s7 = inlined_call_operand.vmem [shape: f32[32,16], index: 7, kind: input, shape index: {}]
  %s8 = inlined_call_operand.vmem [shape: f32[1,16], index: 8, kind: input, shape index: {}]
  %s9 = inlined_call_operand.vmem [shape: f32[16,8], index: 9, kind: input, shape index: {}]
  %s10 = inlined_call_operand.vmem [shape: f32[1,8], index: 10, kind: input, shape index: {}]
  %s11 = inlined_call_operand.vmem [shape: f32[8,4], index: 11, kind: input, shape index: {}]
  %s12 = inlined_call_operand.vmem [shape: f32[1,4], index: 12, kind: input, shape index: {}]
  %s13 = inlined_call_operand.vmem [shape: f32[64,4], index: 13, kind: output, shape index: {}]
  %s14 = sld [smem:[#allocation0]]
  $region62: #{net_forward.1} parent=0
    _
  %s16 = ssub.s32 1, %s14
  %s17 = scalar_select 0, %s16, %s14
  // Predicated region
  $region2: #{net_forward.1} parent=0 // pred_check
    _
  $region3: #{net_forward.1} parent=0 // pred_check_branch
    %19 = sbr.rel (0) target = $region5
  $region4: #{net_forward.1} parent=0 // pred_region
    _
  $region5: #{net_forward.1} parent=0 // pred_fallthru
    _
  // Predicated region
  $region6: #{net_forward.1} parent=0 // pred_check
    _
  $region7: #{net_forward.1} parent=0 // pred_check_branch
    %21 = sbr.rel (0) target = $region9
  $region8: #{net_forward.1} parent=0 // pred_region
    _
  $region9: #{net_forward.1} parent=0 // pred_fallthru
    _
  // Predicated region
  $region10: #{net_forward.1} parent=0 // pred_check
    _
  $region11: #{net_forward.1} parent=0 // pred_check_branch
    %23 = sbr.rel (0) target = $region13
  $region12: #{net_forward.1} parent=0 // pred_region
    _
  $region13: #{net_forward.1} parent=0 // pred_fallthru
    _
  // Predicated region
  $region14: #{net_forward.1} parent=0 // pred_check
    _
  $region15: #{net_forward.1} parent=0 // pred_check_branch
    %25 = sbr.rel (0) target = $region17
  $region16: #{net_forward.1} parent=0 // pred_region
    _
  $region17: #{net_forward.1} parent=0 // pred_fallthru
    _
  // Predicated region
  $region18: #{net_forward.1} parent=0 // pred_check
    _
  $region19: #{net_forward.1} parent=0 // pred_check_branch
    %27 = sbr.rel (0) target = $region21
  $region20: #{net_forward.1} parent=0 // pred_region
    _
  $region21: #{net_forward.1} parent=0 // pred_fallthru
    _
  // Predicated region
  $region22: #{net_forward.1} parent=0 // pred_check
    _
  $region23: #{net_forward.1} parent=0 // pred_check_branch
    %29 = sbr.rel (0) target = $region25
  $region24: #{net_forward.1} parent=0 // pred_region
    _
  $region25: #{net_forward.1} parent=0 // pred_fallthru
    _
  // Predicated region
  $region26: #{net_forward.1} parent=0 // pred_check
    _
  $region27: #{net_forward.1} parent=0 // pred_check_branch
    %31 = sbr.rel (0) target = $region29
  $region28: #{net_forward.1} parent=0 // pred_region
    _
  $region29: #{net_forward.1} parent=0 // pred_fallthru
    _
  // Predicated region
  $region30: #{net_forward.1} parent=0 // pred_check
    _
  $region31: #{net_forward.1} parent=0 // pred_check_branch
    %33 = sbr.rel (0) target = $region33
  $region32: #{net_forward.1} parent=0 // pred_region
    _
  $region33: #{net_forward.1} parent=0 // pred_fallthru
    _
  // Predicated region
  $region34: #{net_forward.1} parent=0 // pred_check
    _
  $region35: #{net_forward.1} parent=0 // pred_check_branch
    %35 = sbr.rel (0) target = $region37
  $region36: #{net_forward.1} parent=0 // pred_region
    _
  $region37: #{net_forward.1} parent=0 // pred_fallthru
    _
  // Predicated region
  $region38: #{net_forward.1} parent=0 // pred_check
    _
  $region39: #{net_forward.1} parent=0 // pred_check_branch
    %37 = sbr.rel (0) target = $region41
  $region40: #{net_forward.1} parent=0 // pred_region
    _
  $region41: #{net_forward.1} parent=0 // pred_fallthru
    _
  // Predicated region
  $region42: #{net_forward.1} parent=0 // pred_check
    _
  $region43: #{net_forward.1} parent=0 // pred_check_branch
    %39 = sbr.rel (0) target = $region45
  $region44: #{net_forward.1} parent=0 // pred_region
    _
  $region45: #{net_forward.1} parent=0 // pred_fallthru
    _
  // Predicated region
  $region46: #{net_forward.1} parent=0 // pred_check
    _
  $region47: #{net_forward.1} parent=0 // pred_check_branch
    %41 = sbr.rel (0) target = $region49
  $region48: #{net_forward.1} parent=0 // pred_region
    _
  $region49: #{net_forward.1} parent=0 // pred_fallthru
    _
  // Predicated region
  $region50: #{net_forward.1} parent=0 // pred_check
    _
  $region51: #{net_forward.1} parent=0 // pred_check_branch
    %43 = sbr.rel (0) target = $region53
  $region52: #{net_forward.1} parent=0 // pred_region
    _
  $region53: #{net_forward.1} parent=0 // pred_fallthru
    _
  %v44 = vld [vmem:[%s3] sm:$0x1]
  %v45 = vld [vmem:[%s6] sm:$0x1]
  %v46 = vld [vmem:[%s0] sm:$0xff]
  %v47 = vld [vmem:[%s0 + $0x8] sm:$0xff]
  %v48 = vld [vmem:[%s0 + $0x10] sm:$0xff]
  %v49 = vld [vmem:[%s0 + $0x18] sm:$0xff]
  %v50 = vld [vmem:[%s0 + $0x20] sm:$0xff]
  %v51 = vld [vmem:[%s0 + $0x28] sm:$0xff]
  %v52 = vld [vmem:[%s0 + $0x30] sm:$0xff]
  %v53 = vld [vmem:[%s0 + $0x38] sm:$0xff]
  %v54 = vld [vmem:[%s1] sm:$0xff]
  %v55 = vld [vmem:[%s1 + $0x8] sm:$0xff]
  %v57 = vlaneseq
  %v58 = vshrl.u32 %v57, 7
  %v59 = vsub.s32 0, %v58
  %v60 = vrot.slane %v44, %v59
  %vm62 = vcmask 130048
  %v64 = vsel %vm62, %v46, 0
  %v67 = vsel %vm62, %v47, 0
  %v70 = vsel %vm62, %v48, 0
  %v73 = vsel %vm62, %v49, 0
  %v76 = vsel %vm62, %v50, 0
  %v79 = vsel %vm62, %v51, 0
  %v82 = vsel %vm62, %v52, 0
  %v85 = vsel %vm62, %v53, 0
  %87 = vmatprep.subr.mxu0 0.0
  %88 = vmatpush1.msra.mxu0 %v54
  %89 = vmatprep.subr.mxu0 0.0
  %90 = vmatpush1.msra.mxu0 %v55
  %91 = vmatprep.subr.mxu0 0.0
  %92 = vmatpush1.msra.mxu0 0.0
  %93 = vmatprep.subr.mxu0 0.0
  %94 = vmatpush1.msra.mxu0 0.0
  %95 = vmatprep.subr.mxu0 0.0
  %96 = vmatpush1.msra.mxu0 0.0
  %97 = vmatprep.subr.mxu0 0.0
  %98 = vmatpush1.msra.mxu0 0.0
  %99 = vmatprep.subr.mxu0 0.0
  %100 = vmatpush1.msra.mxu0 0.0
  %101 = vmatprep.subr.mxu0 0.0
  %102 = vmatpush1.msra.mxu0 0.0
  %103 = vmatprep.subr.mxu0 0.0
  %104 = vmatpush1.msra.mxu0 0.0
  %105 = vmatprep.subr.mxu0 0.0
  %106 = vmatpush1.msra.mxu0 0.0
  %107 = vmatprep.subr.mxu0 0.0
  %108 = vmatpush1.msra.mxu0 0.0
  %109 = vmatprep.subr.mxu0 0.0
  %110 = vmatpush1.msra.mxu0 0.0
  %111 = vmatprep.subr.mxu0 0.0
  %112 = vmatpush1.msra.mxu0 0.0
  %113 = vmatprep.subr.mxu0 0.0
  %114 = vmatpush1.msra.mxu0 0.0
  %115 = vmatprep.subr.mxu0 0.0
  %116 = vmatpush1.msra.mxu0 0.0
  %117 = vmatprep.subr.mxu0 0.0
  %118 = vmatpush1.msra.mxu0 0.0
  %119 = vmatprep.subr.mxu0 0.0
  %120 = vmatpush1.msra.mxu0 0.0
  %121 = vmatprep.subr.mxu0 0.0
  %122 = vmatpush1.msra.mxu0 0.0
  %123 = vmatprep.subr.mxu0 0.0
  %124 = vmatpush1.msra.mxu0 0.0
  %125 = vmatprep.subr.mxu0 0.0
  %126 = vmatpush1.msra.mxu0 0.0
  %127 = vmatprep.subr.mxu0 0.0
  %128 = vmatpush1.msra.mxu0 0.0
  %129 = vmatprep.subr.mxu0 0.0
  %130 = vmatpush1.msra.mxu0 0.0
  %131 = vmatprep.subr.mxu0 0.0
  %132 = vmatpush1.msra.mxu0 0.0
  %133 = vmatprep.subr.mxu0 0.0
  %134 = vmatpush1.msra.mxu0 0.0
  %135 = vmatprep.subr.mxu0 0.0
  %136 = vmatpush1.msra.mxu0 0.0
  %137 = vmatprep.subr.mxu0 0.0
  %138 = vmatpush1.msra.mxu0 0.0
  %139 = vmatprep.subr.mxu0 0.0
  %140 = vmatpush1.msra.mxu0 0.0
  %141 = vmatprep.subr.mxu0 0.0
  %142 = vmatpush1.msra.mxu0 0.0
  %143 = vmatprep.subr.mxu0 0.0
  %144 = vmatpush1.msra.mxu0 0.0
  %145 = vmatprep.subr.mxu0 0.0
  %146 = vmatpush1.msra.mxu0 0.0
  %147 = vmatprep.subr.mxu0 0.0
  %148 = vmatpush1.msra.mxu0 0.0
  %149 = vmatprep.subr.mxu0 0.0
  %150 = vmatpush1.msra.mxu0 0.0
  %151 = vmatprep.mubr.f32.mxu0 0.0
  %152 = vmatmul.mubr.f32.gmra.mrb[0].mxu0 %v64
  %v153 = vpop.f32.mrb[0].mxu0
  %v154 = vadd.f32 %v60, %v153
  %v155 = vpop.f32.mrb[0].mxu0
  %156 = vmatprep.mubr.f32.mxu0 0.0
  %157 = vmatmul.mubr.f32.gmra.mrb[0].mxu0 %v67
  %v158 = vpop.f32.mrb[0].mxu0
  %v159 = vadd.f32 %v60, %v158
  %v160 = vpop.f32.mrb[0].mxu0
  %161 = vmatprep.mubr.f32.mxu0 0.0
  %162 = vmatmul.mubr.f32.gmra.mrb[0].mxu0 %v70
  %v163 = vpop.f32.mrb[0].mxu0
  %v164 = vadd.f32 %v60, %v163
  %v165 = vpop.f32.mrb[0].mxu0
  %166 = vmatprep.mubr.f32.mxu0 0.0
  %167 = vmatmul.mubr.f32.gmra.mrb[0].mxu0 %v73
  %v168 = vpop.f32.mrb[0].mxu0
  %v169 = vadd.f32 %v60, %v168
  %v170 = vpop.f32.mrb[0].mxu0
  %171 = vmatprep.mubr.f32.mxu0 0.0
  %172 = vmatmul.mubr.f32.gmra.mrb[0].mxu0 %v76
  %v173 = vpop.f32.mrb[0].mxu0
  %v174 = vadd.f32 %v60, %v173
  %v175 = vpop.f32.mrb[0].mxu0
  %176 = vmatprep.mubr.f32.mxu0 0.0
  %177 = vmatmul.mubr.f32.gmra.mrb[0].mxu0 %v79
  %v178 = vpop.f32.mrb[0].mxu0
  %v179 = vadd.f32 %v60, %v178
  %v180 = vpop.f32.mrb[0].mxu0
  %181 = vmatprep.mubr.f32.mxu0 0.0
  %182 = vmatmul.mubr.f32.gmra.mrb[0].mxu0 %v82
  %v183 = vpop.f32.mrb[0].mxu0
  %v184 = vadd.f32 %v60, %v183
  %v185 = vpop.f32.mrb[0].mxu0
  %186 = vmatprep.mubr.f32.mxu0 0.0
  %187 = vmatmul.mubr.f32.gmra.mrb[0].mxu0 %v85
  %v188 = vpop.f32.mrb[0].mxu0
  %v189 = vadd.f32 %v60, %v188
  %v190 = vpop.f32.mrb[0].mxu0
  %191 = vdwg.mxu0
  %v192 = vld [vmem:[%s2] sm:$0xff]
  %v193 = vld [vmem:[%s2 + $0x8] sm:$0xff]
  %v194 = vld [vmem:[%s2 + $0x10] sm:$0xff]
  %v195 = vld [vmem:[%s2 + $0x18] sm:$0xff]
  %vm196 = vcmask 261120
  %v198 = vsel %vm196, 0.0, 0
  %200 = vmatprep.subr.mxu0 0.0
  %201 = vmatpush1.msra.mxu0 %v192
  %202 = vmatprep.subr.mxu0 0.0
  %203 = vmatpush1.msra.mxu0 %v193
  %204 = vmatprep.subr.mxu0 0.0
  %205 = vmatpush1.msra.mxu0 %v194
  %206 = vmatprep.subr.mxu0 0.0
  %207 = vmatpush1.msra.mxu0 %v195
  %208 = vmatprep.subr.mxu0 0.0
  %209 = vmatpush1.msra.mxu0 0.0
  %210 = vmatprep.subr.mxu0 0.0
  %211 = vmatpush1.msra.mxu0 0.0
  %212 = vmatprep.subr.mxu0 0.0
  %213 = vmatpush1.msra.mxu0 0.0
  %214 = vmatprep.subr.mxu0 0.0
  %215 = vmatpush1.msra.mxu0 0.0
  %216 = vmatprep.subr.mxu0 0.0
  %217 = vmatpush1.msra.mxu0 0.0
  %218 = vmatprep.subr.mxu0 0.0
  %219 = vmatpush1.msra.mxu0 0.0
  %220 = vmatprep.subr.mxu0 0.0
  %221 = vmatpush1.msra.mxu0 0.0
  %222 = vmatprep.subr.mxu0 0.0
  %223 = vmatpush1.msra.mxu0 0.0
  %224 = vmatprep.subr.mxu0 0.0
  %225 = vmatpush1.msra.mxu0 0.0
  %226 = vmatprep.subr.mxu0 0.0
  %227 = vmatpush1.msra.mxu0 0.0
  %228 = vmatprep.subr.mxu0 0.0
  %229 = vmatpush1.msra.mxu0 0.0
  %230 = vmatprep.subr.mxu0 0.0
  %231 = vmatpush1.msra.mxu0 0.0
  %232 = vmatprep.subr.mxu0 0.0
  %233 = vmatpush1.msra.mxu0 0.0
  %234 = vmatprep.subr.mxu0 0.0
  %235 = vmatpush1.msra.mxu0 0.0
  %236 = vmatprep.subr.mxu0 0.0
  %237 = vmatpush1.msra.mxu0 0.0
  %238 = vmatprep.subr.mxu0 0.0
  %239 = vmatpush1.msra.mxu0 0.0
  %240 = vmatprep.subr.mxu0 0.0
  %241 = vmatpush1.msra.mxu0 0.0
  %242 = vmatprep.subr.mxu0 0.0
  %243 = vmatpush1.msra.mxu0 0.0
  %244 = vmatprep.subr.mxu0 0.0
  %245 = vmatpush1.msra.mxu0 0.0
  %246 = vmatprep.subr.mxu0 0.0
  %247 = vmatpush1.msra.mxu0 0.0
  %248 = vmatprep.subr.mxu0 0.0
  %249 = vmatpush1.msra.mxu0 0.0
  %250 = vmatprep.subr.mxu0 0.0
  %251 = vmatpush1.msra.mxu0 0.0
  %252 = vmatprep.subr.mxu0 0.0
  %253 = vmatpush1.msra.mxu0 0.0
  %254 = vmatprep.subr.mxu0 0.0
  %255 = vmatpush1.msra.mxu0 0.0
  %256 = vmatprep.subr.mxu0 0.0
  %257 = vmatpush1.msra.mxu0 0.0
  %258 = vmatprep.subr.mxu0 0.0
  %259 = vmatpush1.msra.mxu0 0.0
  %260 = vmatprep.subr.mxu0 0.0
  %261 = vmatpush1.msra.mxu0 0.0
  %262 = vmatprep.subr.mxu0 0.0
  %263 = vmatpush1.msra.mxu0 0.0
  %264 = vmatprep.mubr.f32.mxu0 0.0
  %265 = vmatmul.mubr.f32.gmra.mrb[0].mxu0 %v198
  %v266 = vpop.f32.mrb[0].mxu0
  %v267 = vadd.f32 0.0, %v266
  %v268 = vpop.f32.mrb[0].mxu0
  %269 = vdwg.mxu0
  %v270 = vadd.f32 %v154, %v267
  %v271 = vxor.u32 %v270, 2147483648
  %v272 = vmul.f32 %v271, 1.442695
  %v273 = vpow.pop %v272
  %v274 = vadd.f32 %v273, 1.0
  %v275 = vrcp.pop %v274
  %v276 = vmul.f32 1.0, %v275
  %v277 = vtanh.pop %v270
  %v278 = vmul.f32 %v276, 0.0
  %280 = vrot.lane.b32.xlu0 %v277, 64
  %v281 = vpop.permute.xlu0 %280
  %v283 = vmul.f32 %v276, %v281
  %285 = vrot.lane.b32.xlu0 %v283, 32
  %v286 = vpop.permute.xlu0 %285
  %v288 = vadd.f32 %v278, %v286
  %v289 = vtanh.pop %v288
  %291 = vrot.lane.b32.xlu0 %v289, 64
  %v292 = vpop.permute.xlu0 %291
  %v294 = vmul.f32 %v276, %v292
  %v295 = vld [vmem:[%s4] sm:$0xff]
  %v296 = vld [vmem:[%s4 + $0x8] sm:$0xff]
  %v297 = vld [vmem:[%s4 + $0x10] sm:$0xff]
  %v298 = vld [vmem:[%s4 + $0x18] sm:$0xff]
  %v299 = vld [vmem:[%s5] sm:$0xff]
  %v300 = vld [vmem:[%s5 + $0x8] sm:$0xff]
  %v301 = vld [vmem:[%s5 + $0x10] sm:$0xff]
  %v302 = vld [vmem:[%s5 + $0x18] sm:$0xff]
  %303 = vmatprep.subr.mxu0 0.0
  %304 = vmatpush1.msra.mxu0 %v299
  %305 = vmatprep.subr.mxu0 0.0
  %306 = vmatpush1.msra.mxu0 %v300
  %307 = vmatprep.subr.mxu0 0.0
  %308 = vmatpush1.msra.mxu0 %v301
  %309 = vmatprep.subr.mxu0 0.0
  %310 = vmatpush1.msra.mxu0 %v302
  %311 = vmatprep.subr.mxu0 0.0
  %312 = vmatpush1.msra.mxu0 0.0
  %313 = vmatprep.subr.mxu0 0.0
  %314 = vmatpush1.msra.mxu0 0.0
  %315 = vmatprep.subr.mxu0 0.0
  %316 = vmatpush1.msra.mxu0 0.0
  %317 = vmatprep.subr.mxu0 0.0
  %318 = vmatpush1.msra.mxu0 0.0
  %319 = vmatprep.subr.mxu0 0.0
  %320 = vmatpush1.msra.mxu0 0.0
  %321 = vmatprep.subr.mxu0 0.0
  %322 = vmatpush1.msra.mxu0 0.0
  %323 = vmatprep.subr.mxu0 0.0
  %324 = vmatpush1.msra.mxu0 0.0
  %325 = vmatprep.subr.mxu0 0.0
  %326 = vmatpush1.msra.mxu0 0.0
  %327 = vmatprep.subr.mxu0 0.0
  %328 = vmatpush1.msra.mxu0 0.0
  %329 = vmatprep.subr.mxu0 0.0
  %330 = vmatpush1.msra.mxu0 0.0
  %331 = vmatprep.subr.mxu0 0.0
  %332 = vmatpush1.msra.mxu0 0.0
  %333 = vmatprep.subr.mxu0 0.0
  %334 = vmatpush1.msra.mxu0 0.0
  %335 = vmatprep.subr.mxu0 0.0
  %336 = vmatpush1.msra.mxu0 0.0
  %337 = vmatprep.subr.mxu0 0.0
  %338 = vmatpush1.msra.mxu0 0.0
  %339 = vmatprep.subr.mxu0 0.0
  %340 = vmatpush1.msra.mxu0 0.0
  %341 = vmatprep.subr.mxu0 0.0
  %342 = vmatpush1.msra.mxu0 0.0
  %343 = vmatprep.subr.mxu0 0.0
  %344 = vmatpush1.msra.mxu0 0.0
  %345 = vmatprep.subr.mxu0 0.0
  %346 = vmatpush1.msra.mxu0 0.0
  %347 = vmatprep.subr.mxu0 0.0
  %348 = vmatpush1.msra.mxu0 0.0
  %349 = vmatprep.subr.mxu0 0.0
  %350 = vmatpush1.msra.mxu0 0.0
  %351 = vmatprep.subr.mxu0 0.0
  %352 = vmatpush1.msra.mxu0 0.0
  %353 = vmatprep.subr.mxu0 0.0
  %354 = vmatpush1.msra.mxu0 0.0
  %355 = vmatprep.subr.mxu0 0.0
  %356 = vmatpush1.msra.mxu0 0.0
  %357 = vmatprep.subr.mxu0 0.0
  %358 = vmatpush1.msra.mxu0 0.0
  %359 = vmatprep.subr.mxu0 0.0
  %360 = vmatpush1.msra.mxu0 0.0
  %361 = vmatprep.subr.mxu0 0.0
  %362 = vmatpush1.msra.mxu0 0.0
  %363 = vmatprep.subr.mxu0 0.0
  %364 = vmatpush1.msra.mxu0 0.0
  %365 = vmatprep.subr.mxu0 0.0
  %366 = vmatpush1.msra.mxu0 0.0
  %367 = vmatprep.mubr.f32.mxu0 0.0
  %368 = vmatmul.mubr.f32.gmra.mrb[0].mxu0 %v198
  %v369 = vpop.f32.mrb[0].mxu0
  %v370 = vadd.f32 0.0, %v369
  %v371 = vpop.f32.mrb[0].mxu0
  %372 = vdwg.mxu0
  %374 = vrot.lane.b32.xlu0 %v294, 32
  %v375 = vpop.permute.xlu0 %374
  %v376 = vsel %vm196, %v375, 0
  %378 = vmatprep.subr.mxu0 0.0
  %379 = vmatpush1.msra.mxu0 %v295
  %380 = vmatprep.subr.mxu0 0.0
  %381 = vmatpush1.msra.mxu0 %v296
  %382 = vmatprep.subr.mxu0 0.0
  %383 = vmatpush1.msra.mxu0 %v297
  %384 = vmatprep.subr.mxu0 0.0
  %385 = vmatpush1.msra.mxu0 %v298
  %386 = vmatprep.subr.mxu0 0.0
  %387 = vmatpush1.msra.mxu0 0.0
  %388 = vmatprep.subr.mxu0 0.0
  %389 = vmatpush1.msra.mxu0 0.0
  %390 = vmatprep.subr.mxu0 0.0
  %391 = vmatpush1.msra.mxu0 0.0
  %392 = vmatprep.subr.mxu0 0.0
  %393 = vmatpush1.msra.mxu0 0.0
  %394 = vmatprep.subr.mxu0 0.0
  %395 = vmatpush1.msra.mxu0 0.0
  %396 = vmatprep.subr.mxu0 0.0
  %397 = vmatpush1.msra.mxu0 0.0
  %398 = vmatprep.subr.mxu0 0.0
  %399 = vmatpush1.msra.mxu0 0.0
  %400 = vmatprep.subr.mxu0 0.0
  %401 = vmatpush1.msra.mxu0 0.0
  %402 = vmatprep.subr.mxu0 0.0
  %403 = vmatpush1.msra.mxu0 0.0
  %404 = vmatprep.subr.mxu0 0.0
  %405 = vmatpush1.msra.mxu0 0.0
  %406 = vmatprep.subr.mxu0 0.0
  %407 = vmatpush1.msra.mxu0 0.0
  %408 = vmatprep.subr.mxu0 0.0
  %409 = vmatpush1.msra.mxu0 0.0
  %410 = vmatprep.subr.mxu0 0.0
  %411 = vmatpush1.msra.mxu0 0.0
  %412 = vmatprep.subr.mxu0 0.0
  %413 = vmatpush1.msra.mxu0 0.0
  %414 = vmatprep.subr.mxu0 0.0
  %415 = vmatpush1.msra.mxu0 0.0
  %416 = vmatprep.subr.mxu0 0.0
  %417 = vmatpush1.msra.mxu0 0.0
  %418 = vmatprep.subr.mxu0 0.0
  %419 = vmatpush1.msra.mxu0 0.0
  %420 = vmatprep.subr.mxu0 0.0
  %421 = vmatpush1.msra.mxu0 0.0
  %422 = vmatprep.subr.mxu0 0.0
  %423 = vmatpush1.msra.mxu0 0.0
  %424 = vmatprep.subr.mxu0 0.0
  %425 = vmatpush1.msra.mxu0 0.0
  %426 = vmatprep.subr.mxu0 0.0
  %427 = vmatpush1.msra.mxu0 0.0
  %428 = vmatprep.subr.mxu0 0.0
  %429 = vmatpush1.msra.mxu0 0.0
  %430 = vmatprep.subr.mxu0 0.0
  %431 = vmatpush1.msra.mxu0 0.0
  %432 = vmatprep.subr.mxu0 0.0
  %433 = vmatpush1.msra.mxu0 0.0
  %434 = vmatprep.subr.mxu0 0.0
  %435 = vmatpush1.msra.mxu0 0.0
  %436 = vmatprep.subr.mxu0 0.0
  %437 = vmatpush1.msra.mxu0 0.0
  %438 = vmatprep.subr.mxu0 0.0
  %439 = vmatpush1.msra.mxu0 0.0
  %440 = vmatprep.subr.mxu0 0.0
  %441 = vmatpush1.msra.mxu0 0.0
  %442 = vmatprep.mubr.f32.mxu0 0.0
  %443 = vmatmul.mubr.f32.gmra.mrb[0].mxu0 %v376
  %v444 = vpop.f32.mrb[0].mxu0
  %v445 = vadd.f32 %v370, %v444
  %v446 = vpop.f32.mrb[0].mxu0
  %447 = vdwg.mxu0
  %v449 = vlaneseq
  %v450 = vshrl.u32 %v449, 7
  %v451 = vsub.s32 0, %v450
  %v452 = vrot.slane %v45, %v451
  %v454 = vadd.f32 %v445, %v452
  %v455 = vxor.u32 %v454, 2147483648
  %v456 = vmul.f32 %v455, 1.442695
  %v457 = vpow.pop %v456
  %v458 = vadd.f32 %v457, 1.0
  %v459 = vrcp.pop %v458
  %v460 = vmul.f32 1.0, %v459
  %v461 = vtanh.pop %v454
  %v462 = vmul.f32 %v460, 0.0
  %464 = vrot.lane.b32.xlu0 %v461, 64
  %v465 = vpop.permute.xlu0 %464
  %v467 = vmul.f32 %v460, %v465
  %469 = vrot.lane.b32.xlu0 %v467, 32
  %v470 = vpop.permute.xlu0 %469
  %v472 = vadd.f32 %v462, %v470
  %v473 = vtanh.pop %v472
  %475 = vrot.lane.b32.xlu0 %v473, 64
  %v476 = vpop.permute.xlu0 %475
  %v478 = vmul.f32 %v460, %v476
  %479 = vmatprep.subr.mxu0 0.0
  %480 = vmatpush1.msra.mxu0 %v192
  %481 = vmatprep.subr.mxu0 0.0
  %482 = vmatpush1.msra.mxu0 %v193
  %483 = vmatprep.subr.mxu0 0.0
  %484 = vmatpush1.msra.mxu0 %v194
  %485 = vmatprep.subr.mxu0 0.0
  %486 = vmatpush1.msra.mxu0 %v195
  %487 = vmatprep.subr.mxu0 0.0
  %488 = vmatpush1.msra.mxu0 0.0
  %489 = vmatprep.subr.mxu0 0.0
  %490 = vmatpush1.msra.mxu0 0.0
  %491 = vmatprep.subr.mxu0 0.0
  %492 = vmatpush1.msra.mxu0 0.0
  %493 = vmatprep.subr.mxu0 0.0
  %494 = vmatpush1.msra.mxu0 0.0
  %495 = vmatprep.subr.mxu0 0.0
  %496 = vmatpush1.msra.mxu0 0.0
  %497 = vmatprep.subr.mxu0 0.0
  %498 = vmatpush1.msra.mxu0 0.0
  %499 = vmatprep.subr.mxu0 0.0
  %500 = vmatpush1.msra.mxu0 0.0
  %501 = vmatprep.subr.mxu0 0.0
  %502 = vmatpush1.msra.mxu0 0.0
  %503 = vmatprep.subr.mxu0 0.0
  %504 = vmatpush1.msra.mxu0 0.0
  %505 = vmatprep.subr.mxu0 0.0
  %506 = vmatpush1.msra.mxu0 0.0
  %507 = vmatprep.subr.mxu0 0.0
  %508 = vmatpush1.msra.mxu0 0.0
  %509 = vmatprep.subr.mxu0 0.0
  %510 = vmatpush1.msra.mxu0 0.0
  %511 = vmatprep.subr.mxu0 0.0
  %512 = vmatpush1.msra.mxu0 0.0
  %513 = vmatprep.subr.mxu0 0.0
  %514 = vmatpush1.msra.mxu0 0.0
  %515 = vmatprep.subr.mxu0 0.0
  %516 = vmatpush1.msra.mxu0 0.0
  %517 = vmatprep.subr.mxu0 0.0
  %518 = vmatpush1.msra.mxu0 0.0
  %519 = vmatprep.subr.mxu0 0.0
  %520 = vmatpush1.msra.mxu0 0.0
  %521 = vmatprep.subr.mxu0 0.0
  %522 = vmatpush1.msra.mxu0 0.0
  %523 = vmatprep.subr.mxu0 0.0
  %524 = vmatpush1.msra.mxu0 0.0
  %525 = vmatprep.subr.mxu0 0.0
  %526 = vmatpush1.msra.mxu0 0.0
  %527 = vmatprep.subr.mxu0 0.0
  %528 = vmatpush1.msra.mxu0 0.0
  %529 = vmatprep.subr.mxu0 0.0
  %530 = vmatpush1.msra.mxu0 0.0
  %531 = vmatprep.subr.mxu0 0.0
  %532 = vmatpush1.msra.mxu0 0.0
  %533 = vmatprep.subr.mxu0 0.0
  %534 = vmatpush1.msra.mxu0 0.0
  %535 = vmatprep.subr.mxu0 0.0
  %536 = vmatpush1.msra.mxu0 0.0
  %537 = vmatprep.subr.mxu0 0.0
  %538 = vmatpush1.msra.mxu0 0.0
  %539 = vmatprep.subr.mxu0 0.0
  %540 = vmatpush1.msra.mxu0 0.0
  %541 = vmatprep.subr.mxu0 0.0
  %542 = vmatpush1.msra.mxu0 0.0
  %543 = vmatprep.mubr.f32.mxu0 0.0
  %544 = vmatmul.mubr.f32.gmra.mrb[0].mxu0 %v376
  %v545 = vpop.f32.mrb[0].mxu0
  %v546 = vadd.f32 0.0, %v545
  %v547 = vpop.f32.mrb[0].mxu0
  %548 = vdwg.mxu0
  %v549 = vadd.f32 %v159, %v546
  %v550 = vxor.u32 %v549, 2147483648
  %v551 = vmul.f32 %v550, 1.442695
  %v552 = vpow.pop %v551
  %v553 = vadd.f32 %v552, 1.0
  %v554 = vrcp.pop %v553
  %v555 = vmul.f32 1.0, %v554
  %v556 = vtanh.pop %v549
  %v557 = vmul.f32 %v555, %v288
  %559 = vrot.lane.b32.xlu0 %v556, 64
  %v560 = vpop.permute.xlu0 %559
  %v562 = vmul.f32 %v555, %v560
  %564 = vrot.lane.b32.xlu0 %v562, 32
  %v565 = vpop.permute.xlu0 %564
  %v567 = vadd.f32 %v557, %v565
  %v568 = vtanh.pop %v567
  %570 = vrot.lane.b32.xlu0 %v568, 64
  %v571 = vpop.permute.xlu0 %570
  %v573 = vmul.f32 %v555, %v571
  %575 = vrot.lane.b32.xlu0 %v478, 32
  %v576 = vpop.permute.xlu0 %575
  %v577 = vsel %vm196, %v576, 0
  %579 = vmatprep.subr.mxu0 0.0
  %580 = vmatpush1.msra.mxu0 %v299
  %581 = vmatprep.subr.mxu0 0.0
  %582 = vmatpush1.msra.mxu0 %v300
  %583 = vmatprep.subr.mxu0 0.0
  %584 = vmatpush1.msra.mxu0 %v301
  %585 = vmatprep.subr.mxu0 0.0
  %586 = vmatpush1.msra.mxu0 %v302
  %587 = vmatprep.subr.mxu0 0.0
  %588 = vmatpush1.msra.mxu0 0.0
  %589 = vmatprep.subr.mxu0 0.0
  %590 = vmatpush1.msra.mxu0 0.0
  %591 = vmatprep.subr.mxu0 0.0
  %592 = vmatpush1.msra.mxu0 0.0
  %593 = vmatprep.subr.mxu0 0.0
  %594 = vmatpush1.msra.mxu0 0.0
  %595 = vmatprep.subr.mxu0 0.0
  %596 = vmatpush1.msra.mxu0 0.0
  %597 = vmatprep.subr.mxu0 0.0
  %598 = vmatpush1.msra.mxu0 0.0
  %599 = vmatprep.subr.mxu0 0.0
  %600 = vmatpush1.msra.mxu0 0.0
  %601 = vmatprep.subr.mxu0 0.0
  %602 = vmatpush1.msra.mxu0 0.0
  %603 = vmatprep.subr.mxu0 0.0
  %604 = vmatpush1.msra.mxu0 0.0
  %605 = vmatprep.subr.mxu0 0.0
  %606 = vmatpush1.msra.mxu0 0.0
  %607 = vmatprep.subr.mxu0 0.0
  %608 = vmatpush1.msra.mxu0 0.0
  %609 = vmatprep.subr.mxu0 0.0
  %610 = vmatpush1.msra.mxu0 0.0
  %611 = vmatprep.subr.mxu0 0.0
  %612 = vmatpush1.msra.mxu0 0.0
  %613 = vmatprep.subr.mxu0 0.0
  %614 = vmatpush1.msra.mxu0 0.0
  %615 = vmatprep.subr.mxu0 0.0
  %616 = vmatpush1.msra.mxu0 0.0
  %617 = vmatprep.subr.mxu0 0.0
  %618 = vmatpush1.msra.mxu0 0.0
  %619 = vmatprep.subr.mxu0 0.0
  %620 = vmatpush1.msra.mxu0 0.0
  %621 = vmatprep.subr.mxu0 0.0
  %622 = vmatpush1.msra.mxu0 0.0
  %623 = vmatprep.subr.mxu0 0.0
  %624 = vmatpush1.msra.mxu0 0.0
  %625 = vmatprep.subr.mxu0 0.0
  %626 = vmatpush1.msra.mxu0 0.0
  %627 = vmatprep.subr.mxu0 0.0
  %628 = vmatpush1.msra.mxu0 0.0
  %629 = vmatprep.subr.mxu0 0.0
  %630 = vmatpush1.msra.mxu0 0.0
  %631 = vmatprep.subr.mxu0 0.0
  %632 = vmatpush1.msra.mxu0 0.0
  %633 = vmatprep.subr.mxu0 0.0
  %634 = vmatpush1.msra.mxu0 0.0
  %635 = vmatprep.subr.mxu0 0.0
  %636 = vmatpush1.msra.mxu0 0.0
  %637 = vmatprep.subr.mxu0 0.0
  %638 = vmatpush1.msra.mxu0 0.0
  %639 = vmatprep.subr.mxu0 0.0
  %640 = vmatpush1.msra.mxu0 0.0
  %641 = vmatprep.subr.mxu0 0.0
  %642 = vmatpush1.msra.mxu0 0.0
  %643 = vmatprep.mubr.f32.mxu0 0.0
  %644 = vmatmul.mubr.f32.gmra.mrb[0].mxu0 %v577
  %v645 = vpop.f32.mrb[0].mxu0
  %v646 = vadd.f32 0.0, %v645
  %v647 = vpop.f32.mrb[0].mxu0
  %648 = vdwg.mxu0
  %650 = vrot.lane.b32.xlu0 %v573, 32
  %v651 = vpop.permute.xlu0 %650
  %v652 = vsel %vm196, %v651, 0
  %654 = vmatprep.subr.mxu0 0.0
  %655 = vmatpush1.msra.mxu0 %v295
  %656 = vmatprep.subr.mxu0 0.0
  %657 = vmatpush1.msra.mxu0 %v296
  %658 = vmatprep.subr.mxu0 0.0
  %659 = vmatpush1.msra.mxu0 %v297
  %660 = vmatprep.subr.mxu0 0.0
  %661 = vmatpush1.msra.mxu0 %v298
  %662 = vmatprep.subr.mxu0 0.0
  %663 = vmatpush1.msra.mxu0 0.0
  %664 = vmatprep.subr.mxu0 0.0
  %665 = vmatpush1.msra.mxu0 0.0
  %666 = vmatprep.subr.mxu0 0.0
  %667 = vmatpush1.msra.mxu0 0.0
  %668 = vmatprep.subr.mxu0 0.0
  %669 = vmatpush1.msra.mxu0 0.0
  %670 = vmatprep.subr.mxu0 0.0
  %671 = vmatpush1.msra.mxu0 0.0
  %672 = vmatprep.subr.mxu0 0.0
  %673 = vmatpush1.msra.mxu0 0.0
  %674 = vmatprep.subr.mxu0 0.0
  %675 = vmatpush1.msra.mxu0 0.0
  %676 = vmatprep.subr.mxu0 0.0
  %677 = vmatpush1.msra.mxu0 0.0
  %678 = vmatprep.subr.mxu0 0.0
  %679 = vmatpush1.msra.mxu0 0.0
  %680 = vmatprep.subr.mxu0 0.0
  %681 = vmatpush1.msra.mxu0 0.0
  %682 = vmatprep.subr.mxu0 0.0
  %683 = vmatpush1.msra.mxu0 0.0
  %684 = vmatprep.subr.mxu0 0.0
  %685 = vmatpush1.msra.mxu0 0.0
  %686 = vmatprep.subr.mxu0 0.0
  %687 = vmatpush1.msra.mxu0 0.0
  %688 = vmatprep.subr.mxu0 0.0
  %689 = vmatpush1.msra.mxu0 0.0
  %690 = vmatprep.subr.mxu0 0.0
  %691 = vmatpush1.msra.mxu0 0.0
  %692 = vmatprep.subr.mxu0 0.0
  %693 = vmatpush1.msra.mxu0 0.0
  %694 = vmatprep.subr.mxu0 0.0
  %695 = vmatpush1.msra.mxu0 0.0
  %696 = vmatprep.subr.mxu0 0.0
  %697 = vmatpush1.msra.mxu0 0.0
  %698 = vmatprep.subr.mxu0 0.0
  %699 = vmatpush1.msra.mxu0 0.0
  %700 = vmatprep.subr.mxu0 0.0
  %701 = vmatpush1.msra.mxu0 0.0
  %702 = vmatprep.subr.mxu0 0.0
  %703 = vmatpush1.msra.mxu0 0.0
  %704 = vmatprep.subr.mxu0 0.0
  %705 = vmatpush1.msra.mxu0 0.0
  %706 = vmatprep.subr.mxu0 0.0
  %707 = vmatpush1.msra.mxu0 0.0
  %708 = vmatprep.subr.mxu0 0.0
  %709 = vmatpush1.msra.mxu0 0.0
  %710 = vmatprep.subr.mxu0 0.0
  %711 = vmatpush1.msra.mxu0 0.0
  %712 = vmatprep.subr.mxu0 0.0
  %713 = vmatpush1.msra.mxu0 0.0
  %714 = vmatprep.subr.mxu0 0.0
  %715 = vmatpush1.msra.mxu0 0.0
  %716 = vmatprep.subr.mxu0 0.0
  %717 = vmatpush1.msra.mxu0 0.0
  %718 = vmatprep.mubr.f32.mxu0 0.0
  %719 = vmatmul.mubr.f32.gmra.mrb[0].mxu0 %v652
  %v720 = vpop.f32.mrb[0].mxu0
  %v721 = vadd.f32 %v646, %v720
  %v722 = vpop.f32.mrb[0].mxu0
  %723 = vdwg.mxu0
  %v724 = vadd.f32 %v721, %v452
  %v725 = vxor.u32 %v724, 2147483648
  %v726 = vmul.f32 %v725, 1.442695
  %v727 = vpow.pop %v726
  %v728 = vadd.f32 %v727, 1.0
  %v729 = vrcp.pop %v728
  %v730 = vmul.f32 1.0, %v729
  %v731 = vtanh.pop %v724
  %v732 = vmul.f32 %v730, %v472
  %734 = vrot.lane.b32.xlu0 %v731, 64
  %v735 = vpop.permute.xlu0 %734
  %v737 = vmul.f32 %v730, %v735
  %739 = vrot.lane.b32.xlu0 %v737, 32
  %v740 = vpop.permute.xlu0 %739
  %v742 = vadd.f32 %v732, %v740
  %v743 = vtanh.pop %v742
  %745 = vrot.lane.b32.xlu0 %v743, 64
  %v746 = vpop.permute.xlu0 %745
  %v748 = vmul.f32 %v730, %v746
  %749 = vmatprep.subr.mxu0 0.0
  %750 = vmatpush1.msra.mxu0 %v192
  %751 = vmatprep.subr.mxu0 0.0
  %752 = vmatpush1.msra.mxu0 %v193
  %753 = vmatprep.subr.mxu0 0.0
  %754 = vmatpush1.msra.mxu0 %v194
  %755 = vmatprep.subr.mxu0 0.0
  %756 = vmatpush1.msra.mxu0 %v195
  %757 = vmatprep.subr.mxu0 0.0
  %758 = vmatpush1.msra.mxu0 0.0
  %759 = vmatprep.subr.mxu0 0.0
  %760 = vmatpush1.msra.mxu0 0.0
  %761 = vmatprep.subr.mxu0 0.0
  %762 = vmatpush1.msra.mxu0 0.0
  %763 = vmatprep.subr.mxu0 0.0
  %764 = vmatpush1.msra.mxu0 0.0
  %765 = vmatprep.subr.mxu0 0.0
  %766 = vmatpush1.msra.mxu0 0.0
  %767 = vmatprep.subr.mxu0 0.0
  %768 = vmatpush1.msra.mxu0 0.0
  %769 = vmatprep.subr.mxu0 0.0
  %770 = vmatpush1.msra.mxu0 0.0
  %771 = vmatprep.subr.mxu0 0.0
  %772 = vmatpush1.msra.mxu0 0.0
  %773 = vmatprep.subr.mxu0 0.0
  %774 = vmatpush1.msra.mxu0 0.0
  %775 = vmatprep.subr.mxu0 0.0
  %776 = vmatpush1.msra.mxu0 0.0
  %777 = vmatprep.subr.mxu0 0.0
  %778 = vmatpush1.msra.mxu0 0.0
  %779 = vmatprep.subr.mxu0 0.0
  %780 = vmatpush1.msra.mxu0 0.0
  %781 = vmatprep.subr.mxu0 0.0
  %782 = vmatpush1.msra.mxu0 0.0
  %783 = vmatprep.subr.mxu0 0.0
  %784 = vmatpush1.msra.mxu0 0.0
  %785 = vmatprep.subr.mxu0 0.0
  %786 = vmatpush1.msra.mxu0 0.0
  %787 = vmatprep.subr.mxu0 0.0
  %788 = vmatpush1.msra.mxu0 0.0
  %789 = vmatprep.subr.mxu0 0.0
  %790 = vmatpush1.msra.mxu0 0.0
  %791 = vmatprep.subr.mxu0 0.0
  %792 = vmatpush1.msra.mxu0 0.0
  %793 = vmatprep.subr.mxu0 0.0
  %794 = vmatpush1.msra.mxu0 0.0
  %795 = vmatprep.subr.mxu0 0.0
  %796 = vmatpush1.msra.mxu0 0.0
  %797 = vmatprep.subr.mxu0 0.0
  %798 = vmatpush1.msra.mxu0 0.0
  %799 = vmatprep.subr.mxu0 0.0
  %800 = vmatpush1.msra.mxu0 0.0
  %801 = vmatprep.subr.mxu0 0.0
  %802 = vmatpush1.msra.mxu0 0.0
  %803 = vmatprep.subr.mxu0 0.0
  %804 = vmatpush1.msra.mxu0 0.0
  %805 = vmatprep.subr.mxu0 0.0
  %806 = vmatpush1.msra.mxu0 0.0
  %807 = vmatprep.subr.mxu0 0.0
  %808 = vmatpush1.msra.mxu0 0.0
  %809 = vmatprep.subr.mxu0 0.0
  %810 = vmatpush1.msra.mxu0 0.0
  %811 = vmatprep.subr.mxu0 0.0
  %812 = vmatpush1.msra.mxu0 0.0
  %813 = vmatprep.mubr.f32.mxu0 0.0
  %814 = vmatmul.mubr.f32.gmra.mrb[0].mxu0 %v652
  %v815 = vpop.f32.mrb[0].mxu0
  %v816 = vadd.f32 0.0, %v815
  %v817 = vpop.f32.mrb[0].mxu0
  %818 = vdwg.mxu0
  %v819 = vadd.f32 %v164, %v816
  %v820 = vxor.u32 %v819, 2147483648
  %v821 = vmul.f32 %v820, 1.442695
  %v822 = vpow.pop %v821
  %v823 = vadd.f32 %v822, 1.0
  %v824 = vrcp.pop %v823
  %v825 = vmul.f32 1.0, %v824
  %v826 = vtanh.pop %v819
  %v827 = vmul.f32 %v825, %v567
  %829 = vrot.lane.b32.xlu0 %v826, 64
  %v830 = vpop.permute.xlu0 %829
  %v832 = vmul.f32 %v825, %v830
  %834 = vrot.lane.b32.xlu0 %v832, 32
  %v835 = vpop.permute.xlu0 %834
  %v837 = vadd.f32 %v827, %v835
  %v838 = vtanh.pop %v837
  %840 = vrot.lane.b32.xlu0 %v838, 64
  %v841 = vpop.permute.xlu0 %840
  %v843 = vmul.f32 %v825, %v841
  %845 = vrot.lane.b32.xlu0 %v748, 32
  %v846 = vpop.permute.xlu0 %845
  %v847 = vsel %vm196, %v846, 0
  %849 = vmatprep.subr.mxu0 0.0
  %850 = vmatpush1.msra.mxu0 %v299
  %851 = vmatprep.subr.mxu0 0.0
  %852 = vmatpush1.msra.mxu0 %v300
  %853 = vmatprep.subr.mxu0 0.0
  %854 = vmatpush1.msra.mxu0 %v301
  %855 = vmatprep.subr.mxu0 0.0
  %856 = vmatpush1.msra.mxu0 %v302
  %857 = vmatprep.subr.mxu0 0.0
  %858 = vmatpush1.msra.mxu0 0.0
  %859 = vmatprep.subr.mxu0 0.0
  %860 = vmatpush1.msra.mxu0 0.0
  %861 = vmatprep.subr.mxu0 0.0
  %862 = vmatpush1.msra.mxu0 0.0
  %863 = vmatprep.subr.mxu0 0.0
  %864 = vmatpush1.msra.mxu0 0.0
  %865 = vmatprep.subr.mxu0 0.0
  %866 = vmatpush1.msra.mxu0 0.0
  %867 = vmatprep.subr.mxu0 0.0
  %868 = vmatpush1.msra.mxu0 0.0
  %869 = vmatprep.subr.mxu0 0.0
  %870 = vmatpush1.msra.mxu0 0.0
  %871 = vmatprep.subr.mxu0 0.0
  %872 = vmatpush1.msra.mxu0 0.0
  %873 = vmatprep.subr.mxu0 0.0
  %874 = vmatpush1.msra.mxu0 0.0
  %875 = vmatprep.subr.mxu0 0.0
  %876 = vmatpush1.msra.mxu0 0.0
  %877 = vmatprep.subr.mxu0 0.0
  %878 = vmatpush1.msra.mxu0 0.0
  %879 = vmatprep.subr.mxu0 0.0
  %880 = vmatpush1.msra.mxu0 0.0
  %881 = vmatprep.subr.mxu0 0.0
  %882 = vmatpush1.msra.mxu0 0.0
  %883 = vmatprep.subr.mxu0 0.0
  %884 = vmatpush1.msra.mxu0 0.0
  %885 = vmatprep.subr.mxu0 0.0
  %886 = vmatpush1.msra.mxu0 0.0
  %887 = vmatprep.subr.mxu0 0.0
  %888 = vmatpush1.msra.mxu0 0.0
  %889 = vmatprep.subr.mxu0 0.0
  %890 = vmatpush1.msra.mxu0 0.0
  %891 = vmatprep.subr.mxu0 0.0
  %892 = vmatpush1.msra.mxu0 0.0
  %893 = vmatprep.subr.mxu0 0.0
  %894 = vmatpush1.msra.mxu0 0.0
  %895 = vmatprep.subr.mxu0 0.0
  %896 = vmatpush1.msra.mxu0 0.0
  %897 = vmatprep.subr.mxu0 0.0
  %898 = vmatpush1.msra.mxu0 0.0
  %899 = vmatprep.subr.mxu0 0.0
  %900 = vmatpush1.msra.mxu0 0.0
  %901 = vmatprep.subr.mxu0 0.0
  %902 = vmatpush1.msra.mxu0 0.0
  %903 = vmatprep.subr.mxu0 0.0
  %904 = vmatpush1.msra.mxu0 0.0
  %905 = vmatprep.subr.mxu0 0.0
  %906 = vmatpush1.msra.mxu0 0.0
  %907 = vmatprep.subr.mxu0 0.0
  %908 = vmatpush1.msra.mxu0 0.0
  %909 = vmatprep.subr.mxu0 0.0
  %910 = vmatpush1.msra.mxu0 0.0
  %911 = vmatprep.subr.mxu0 0.0
  %912 = vmatpush1.msra.mxu0 0.0
  %913 = vmatprep.mubr.f32.mxu0 0.0
  %914 = vmatmul.mubr.f32.gmra.mrb[0].mxu0 %v847
  %v915 = vpop.f32.mrb[0].mxu0
  %v916 = vadd.f32 0.0, %v915
  %v917 = vpop.f32.mrb[0].mxu0
  %918 = vdwg.mxu0
  %920 = vrot.lane.b32.xlu0 %v843, 32
  %v921 = vpop.permute.xlu0 %920
  %v922 = vsel %vm196, %v921, 0
  %924 = vmatprep.subr.mxu0 0.0
  %925 = vmatpush1.msra.mxu0 %v295
  %926 = vmatprep.subr.mxu0 0.0
  %927 = vmatpush1.msra.mxu0 %v296
  %928 = vmatprep.subr.mxu0 0.0
  %929 = vmatpush1.msra.mxu0 %v297
  %930 = vmatprep.subr.mxu0 0.0
  %931 = vmatpush1.msra.mxu0 %v298
  %932 = vmatprep.subr.mxu0 0.0
  %933 = vmatpush1.msra.mxu0 0.0
  %934 = vmatprep.subr.mxu0 0.0
  %935 = vmatpush1.msra.mxu0 0.0
  %936 = vmatprep.subr.mxu0 0.0
  %937 = vmatpush1.msra.mxu0 0.0
  %938 = vmatprep.subr.mxu0 0.0
  %939 = vmatpush1.msra.mxu0 0.0
  %940 = vmatprep.subr.mxu0 0.0
  %941 = vmatpush1.msra.mxu0 0.0
  %942 = vmatprep.subr.mxu0 0.0
  %943 = vmatpush1.msra.mxu0 0.0
  %944 = vmatprep.subr.mxu0 0.0
  %945 = vmatpush1.msra.mxu0 0.0
  %946 = vmatprep.subr.mxu0 0.0
  %947 = vmatpush1.msra.mxu0 0.0
  %948 = vmatprep.subr.mxu0 0.0
  %949 = vmatpush1.msra.mxu0 0.0
  %950 = vmatprep.subr.mxu0 0.0
  %951 = vmatpush1.msra.mxu0 0.0
  %952 = vmatprep.subr.mxu0 0.0
  %953 = vmatpush1.msra.mxu0 0.0
  %954 = vmatprep.subr.mxu0 0.0
  %955 = vmatpush1.msra.mxu0 0.0
  %956 = vmatprep.subr.mxu0 0.0
  %957 = vmatpush1.msra.mxu0 0.0
  %958 = vmatprep.subr.mxu0 0.0
  %959 = vmatpush1.msra.mxu0 0.0
  %960 = vmatprep.subr.mxu0 0.0
  %961 = vmatpush1.msra.mxu0 0.0
  %962 = vmatprep.subr.mxu0 0.0
  %963 = vmatpush1.msra.mxu0 0.0
  %964 = vmatprep.subr.mxu0 0.0
  %965 = vmatpush1.msra.mxu0 0.0
  %966 = vmatprep.subr.mxu0 0.0
  %967 = vmatpush1.msra.mxu0 0.0
  %968 = vmatprep.subr.mxu0 0.0
  %969 = vmatpush1.msra.mxu0 0.0
  %970 = vmatprep.subr.mxu0 0.0
  %971 = vmatpush1.msra.mxu0 0.0
  %972 = vmatprep.subr.mxu0 0.0
  %973 = vmatpush1.msra.mxu0 0.0
  %974 = vmatprep.subr.mxu0 0.0
  %975 = vmatpush1.msra.mxu0 0.0
  %976 = vmatprep.subr.mxu0 0.0
  %977 = vmatpush1.msra.mxu0 0.0
  %978 = vmatprep.subr.mxu0 0.0
  %979 = vmatpush1.msra.mxu0 0.0
  %980 = vmatprep.subr.mxu0 0.0
  %981 = vmatpush1.msra.mxu0 0.0
  %982 = vmatprep.subr.mxu0 0.0
  %983 = vmatpush1.msra.mxu0 0.0
  %984 = vmatprep.subr.mxu0 0.0
  %985 = vmatpush1.msra.mxu0 0.0
  %986 = vmatprep.subr.mxu0 0.0
  %987 = vmatpush1.msra.mxu0 0.0
  %988 = vmatprep.mubr.f32.mxu0 0.0
  %989 = vmatmul.mubr.f32.gmra.mrb[0].mxu0 %v922
  %v990 = vpop.f32.mrb[0].mxu0
  %v991 = vadd.f32 %v916, %v990
  %v992 = vpop.f32.mrb[0].mxu0
  %993 = vdwg.mxu0
  %v994 = vadd.f32 %v991, %v452
  %v995 = vxor.u32 %v994, 2147483648
  %v996 = vmul.f32 %v995, 1.442695
  %v997 = vpow.pop %v996
  %v998 = vadd.f32 %v997, 1.0
  %v999 = vrcp.pop %v998
  %v1000 = vmul.f32 1.0, %v999
  %v1001 = vtanh.pop %v994
  %v1002 = vmul.f32 %v1000, %v742
  %1004 = vrot.lane.b32.xlu0 %v1001, 64
  %v1005 = vpop.permute.xlu0 %1004
  %v1007 = vmul.f32 %v1000, %v1005
  %1009 = vrot.lane.b32.xlu0 %v1007, 32
  %v1010 = vpop.permute.xlu0 %1009
  %v1012 = vadd.f32 %v1002, %v1010
  %v1013 = vtanh.pop %v1012
  %1015 = vrot.lane.b32.xlu0 %v1013, 64
  %v1016 = vpop.permute.xlu0 %1015
  %v1018 = vmul.f32 %v1000, %v1016
  %1019 = vmatprep.subr.mxu0 0.0
  %1020 = vmatpush1.msra.mxu0 %v192
  %1021 = vmatprep.subr.mxu0 0.0
  %1022 = vmatpush1.msra.mxu0 %v193
  %1023 = vmatprep.subr.mxu0 0.0
  %1024 = vmatpush1.msra.mxu0 %v194
  %1025 = vmatprep.subr.mxu0 0.0
  %1026 = vmatpush1.msra.mxu0 %v195
  %1027 = vmatprep.subr.mxu0 0.0
  %1028 = vmatpush1.msra.mxu0 0.0
  %1029 = vmatprep.subr.mxu0 0.0
  %1030 = vmatpush1.msra.mxu0 0.0
  %1031 = vmatprep.subr.mxu0 0.0
  %1032 = vmatpush1.msra.mxu0 0.0
  %1033 = vmatprep.subr.mxu0 0.0
  %1034 = vmatpush1.msra.mxu0 0.0
  %1035 = vmatprep.subr.mxu0 0.0
  %1036 = vmatpush1.msra.mxu0 0.0
  %1037 = vmatprep.subr.mxu0 0.0
  %1038 = vmatpush1.msra.mxu0 0.0
  %1039 = vmatprep.subr.mxu0 0.0
  %1040 = vmatpush1.msra.mxu0 0.0
  %1041 = vmatprep.subr.mxu0 0.0
  %1042 = vmatpush1.msra.mxu0 0.0
  %1043 = vmatprep.subr.mxu0 0.0
  %1044 = vmatpush1.msra.mxu0 0.0
  %1045 = vmatprep.subr.mxu0 0.0
  %1046 = vmatpush1.msra.mxu0 0.0
  %1047 = vmatprep.subr.mxu0 0.0
  %1048 = vmatpush1.msra.mxu0 0.0
  %1049 = vmatprep.subr.mxu0 0.0
  %1050 = vmatpush1.msra.mxu0 0.0
  %1051 = vmatprep.subr.mxu0 0.0
  %1052 = vmatpush1.msra.mxu0 0.0
  %1053 = vmatprep.subr.mxu0 0.0
  %1054 = vmatpush1.msra.mxu0 0.0
  %1055 = vmatprep.subr.mxu0 0.0
  %1056 = vmatpush1.msra.mxu0 0.0
  %1057 = vmatprep.subr.mxu0 0.0
  %1058 = vmatpush1.msra.mxu0 0.0
  %1059 = vmatprep.subr.mxu0 0.0
  %1060 = vmatpush1.msra.mxu0 0.0
  %1061 = vmatprep.subr.mxu0 0.0
  %1062 = vmatpush1.msra.mxu0 0.0
  %1063 = vmatprep.subr.mxu0 0.0
  %1064 = vmatpush1.msra.mxu0 0.0
  %1065 = vmatprep.subr.mxu0 0.0
  %1066 = vmatpush1.msra.mxu0 0.0
  %1067 = vmatprep.subr.mxu0 0.0
  %1068 = vmatpush1.msra.mxu0 0.0
  %1069 = vmatprep.subr.mxu0 0.0
  %1070 = vmatpush1.msra.mxu0 0.0
  %1071 = vmatprep.subr.mxu0 0.0
  %1072 = vmatpush1.msra.mxu0 0.0
  %1073 = vmatprep.subr.mxu0 0.0
  %1074 = vmatpush1.msra.mxu0 0.0
  %1075 = vmatprep.subr.mxu0 0.0
  %1076 = vmatpush1.msra.mxu0 0.0
  %1077 = vmatprep.subr.mxu0 0.0
  %1078 = vmatpush1.msra.mxu0 0.0
  %1079 = vmatprep.subr.mxu0 0.0
  %1080 = vmatpush1.msra.mxu0 0.0
  %1081 = vmatprep.subr.mxu0 0.0
  %1082 = vmatpush1.msra.mxu0 0.0
  %1083 = vmatprep.mubr.f32.mxu0 0.0
  %1084 = vmatmul.mubr.f32.gmra.mrb[0].mxu0 %v922
  %v1085 = vpop.f32.mrb[0].mxu0
  %v1086 = vadd.f32 0.0, %v1085
  %v1087 = vpop.f32.mrb[0].mxu0
  %1088 = vdwg.mxu0
  %v1089 = vadd.f32 %v169, %v1086
  %v1090 = vxor.u32 %v1089, 2147483648
  %v1091 = vmul.f32 %v1090, 1.442695
  %v1092 = vpow.pop %v1091
  %v1093 = vadd.f32 %v1092, 1.0
  %v1094 = vrcp.pop %v1093
  %v1095 = vmul.f32 1.0, %v1094
  %v1096 = vtanh.pop %v1089
  %v1097 = vmul.f32 %v1095, %v837
  %1099 = vrot.lane.b32.xlu0 %v1096, 64
  %v1100 = vpop.permute.xlu0 %1099
  %v1102 = vmul.f32 %v1095, %v1100
  %1104 = vrot.lane.b32.xlu0 %v1102, 32
  %v1105 = vpop.permute.xlu0 %1104
  %v1107 = vadd.f32 %v1097, %v1105
  %v1108 = vtanh.pop %v1107
  %1110 = vrot.lane.b32.xlu0 %v1108, 64
  %v1111 = vpop.permute.xlu0 %1110
  %v1113 = vmul.f32 %v1095, %v1111
  %1115 = vrot.lane.b32.xlu0 %v1018, 32
  %v1116 = vpop.permute.xlu0 %1115
  %v1117 = vsel %vm196, %v1116, 0
  %1119 = vmatprep.subr.mxu0 0.0
  %1120 = vmatpush1.msra.mxu0 %v299
  %1121 = vmatprep.subr.mxu0 0.0
  %1122 = vmatpush1.msra.mxu0 %v300
  %1123 = vmatprep.subr.mxu0 0.0
  %1124 = vmatpush1.msra.mxu0 %v301
  %1125 = vmatprep.subr.mxu0 0.0
  %1126 = vmatpush1.msra.mxu0 %v302
  %1127 = vmatprep.subr.mxu0 0.0
  %1128 = vmatpush1.msra.mxu0 0.0
  %1129 = vmatprep.subr.mxu0 0.0
  %1130 = vmatpush1.msra.mxu0 0.0
  %1131 = vmatprep.subr.mxu0 0.0
  %1132 = vmatpush1.msra.mxu0 0.0
  %1133 = vmatprep.subr.mxu0 0.0
  %1134 = vmatpush1.msra.mxu0 0.0
  %1135 = vmatprep.subr.mxu0 0.0
  %1136 = vmatpush1.msra.mxu0 0.0
  %1137 = vmatprep.subr.mxu0 0.0
  %1138 = vmatpush1.msra.mxu0 0.0
  %1139 = vmatprep.subr.mxu0 0.0
  %1140 = vmatpush1.msra.mxu0 0.0
  %1141 = vmatprep.subr.mxu0 0.0
  %1142 = vmatpush1.msra.mxu0 0.0
  %1143 = vmatprep.subr.mxu0 0.0
  %1144 = vmatpush1.msra.mxu0 0.0
  %1145 = vmatprep.subr.mxu0 0.0
  %1146 = vmatpush1.msra.mxu0 0.0
  %1147 = vmatprep.subr.mxu0 0.0
  %1148 = vmatpush1.msra.mxu0 0.0
  %1149 = vmatprep.subr.mxu0 0.0
  %1150 = vmatpush1.msra.mxu0 0.0
  %1151 = vmatprep.subr.mxu0 0.0
  %1152 = vmatpush1.msra.mxu0 0.0
  %1153 = vmatprep.subr.mxu0 0.0
  %1154 = vmatpush1.msra.mxu0 0.0
  %1155 = vmatprep.subr.mxu0 0.0
  %1156 = vmatpush1.msra.mxu0 0.0
  %1157 = vmatprep.subr.mxu0 0.0
  %1158 = vmatpush1.msra.mxu0 0.0
  %1159 = vmatprep.subr.mxu0 0.0
  %1160 = vmatpush1.msra.mxu0 0.0
  %1161 = vmatprep.subr.mxu0 0.0
  %1162 = vmatpush1.msra.mxu0 0.0
  %1163 = vmatprep.subr.mxu0 0.0
  %1164 = vmatpush1.msra.mxu0 0.0
  %1165 = vmatprep.subr.mxu0 0.0
  %1166 = vmatpush1.msra.mxu0 0.0
  %1167 = vmatprep.subr.mxu0 0.0
  %1168 = vmatpush1.msra.mxu0 0.0
  %1169 = vmatprep.subr.mxu0 0.0
  %1170 = vmatpush1.msra.mxu0 0.0
  %1171 = vmatprep.subr.mxu0 0.0
  %1172 = vmatpush1.msra.mxu0 0.0
  %1173 = vmatprep.subr.mxu0 0.0
  %1174 = vmatpush1.msra.mxu0 0.0
  %1175 = vmatprep.subr.mxu0 0.0
  %1176 = vmatpush1.msra.mxu0 0.0
  %1177 = vmatprep.subr.mxu0 0.0
  %1178 = vmatpush1.msra.mxu0 0.0
  %1179 = vmatprep.subr.mxu0 0.0
  %1180 = vmatpush1.msra.mxu0 0.0
  %1181 = vmatprep.subr.mxu0 0.0
  %1182 = vmatpush1.msra.mxu0 0.0
  %1183 = vmatprep.mubr.f32.mxu0 0.0
  %1184 = vmatmul.mubr.f32.gmra.mrb[0].mxu0 %v1117
  %v1185 = vpop.f32.mrb[0].mxu0
  %v1186 = vadd.f32 0.0, %v1185
  %v1187 = vpop.f32.mrb[0].mxu0
  %1188 = vdwg.mxu0
  %1190 = vrot.lane.b32.xlu0 %v1113, 32
  %v1191 = vpop.permute.xlu0 %1190
  %v1192 = vsel %vm196, %v1191, 0
  %1194 = vmatprep.subr.mxu0 0.0
  %1195 = vmatpush1.msra.mxu0 %v295
  %1196 = vmatprep.subr.mxu0 0.0
  %1197 = vmatpush1.msra.mxu0 %v296
  %1198 = vmatprep.subr.mxu0 0.0
  %1199 = vmatpush1.msra.mxu0 %v297
  %1200 = vmatprep.subr.mxu0 0.0
  %1201 = vmatpush1.msra.mxu0 %v298
  %1202 = vmatprep.subr.mxu0 0.0
  %1203 = vmatpush1.msra.mxu0 0.0
  %1204 = vmatprep.subr.mxu0 0.0
  %1205 = vmatpush1.msra.mxu0 0.0
  %1206 = vmatprep.subr.mxu0 0.0
  %1207 = vmatpush1.msra.mxu0 0.0
  %1208 = vmatprep.subr.mxu0 0.0
  %1209 = vmatpush1.msra.mxu0 0.0
  %1210 = vmatprep.subr.mxu0 0.0
  %1211 = vmatpush1.msra.mxu0 0.0
  %1212 = vmatprep.subr.mxu0 0.0
  %1213 = vmatpush1.msra.mxu0 0.0
  %1214 = vmatprep.subr.mxu0 0.0
  %1215 = vmatpush1.msra.mxu0 0.0
  %1216 = vmatprep.subr.mxu0 0.0
  %1217 = vmatpush1.msra.mxu0 0.0
  %1218 = vmatprep.subr.mxu0 0.0
  %1219 = vmatpush1.msra.mxu0 0.0
  %1220 = vmatprep.subr.mxu0 0.0
  %1221 = vmatpush1.msra.mxu0 0.0
  %1222 = vmatprep.subr.mxu0 0.0
  %1223 = vmatpush1.msra.mxu0 0.0
  %1224 = vmatprep.subr.mxu0 0.0
  %1225 = vmatpush1.msra.mxu0 0.0
  %1226 = vmatprep.subr.mxu0 0.0
  %1227 = vmatpush1.msra.mxu0 0.0
  %1228 = vmatprep.subr.mxu0 0.0
  %1229 = vmatpush1.msra.mxu0 0.0
  %1230 = vmatprep.subr.mxu0 0.0
  %1231 = vmatpush1.msra.mxu0 0.0
  %1232 = vmatprep.subr.mxu0 0.0
  %1233 = vmatpush1.msra.mxu0 0.0
  %1234 = vmatprep.subr.mxu0 0.0
  %1235 = vmatpush1.msra.mxu0 0.0
  %1236 = vmatprep.subr.mxu0 0.0
  %1237 = vmatpush1.msra.mxu0 0.0
  %1238 = vmatprep.subr.mxu0 0.0
  %1239 = vmatpush1.msra.mxu0 0.0
  %1240 = vmatprep.subr.mxu0 0.0
  %1241 = vmatpush1.msra.mxu0 0.0
  %1242 = vmatprep.subr.mxu0 0.0
  %1243 = vmatpush1.msra.mxu0 0.0
  %1244 = vmatprep.subr.mxu0 0.0
  %1245 = vmatpush1.msra.mxu0 0.0
  %1246 = vmatprep.subr.mxu0 0.0
  %1247 = vmatpush1.msra.mxu0 0.0
  %1248 = vmatprep.subr.mxu0 0.0
  %1249 = vmatpush1.msra.mxu0 0.0
  %1250 = vmatprep.subr.mxu0 0.0
  %1251 = vmatpush1.msra.mxu0 0.0
  %1252 = vmatprep.subr.mxu0 0.0
  %1253 = vmatpush1.msra.mxu0 0.0
  %1254 = vmatprep.subr.mxu0 0.0
  %1255 = vmatpush1.msra.mxu0 0.0
  %1256 = vmatprep.subr.mxu0 0.0
  %1257 = vmatpush1.msra.mxu0 0.0
  %1258 = vmatprep.mubr.f32.mxu0 0.0
  %1259 = vmatmul.mubr.f32.gmra.mrb[0].mxu0 %v1192
  %v1260 = vpop.f32.mrb[0].mxu0
  %v1261 = vadd.f32 %v1186, %v1260
  %v1262 = vpop.f32.mrb[0].mxu0
  %1263 = vdwg.mxu0
  %v1264 = vadd.f32 %v1261, %v452
  %v1265 = vxor.u32 %v1264, 2147483648
  %v1266 = vmul.f32 %v1265, 1.442695
  %v1267 = vpow.pop %v1266
  %v1268 = vadd.f32 %v1267, 1.0
  %v1269 = vrcp.pop %v1268
  %v1270 = vmul.f32 1.0, %v1269
  %v1271 = vtanh.pop %v1264
  %v1272 = vmul.f32 %v1270, %v1012
  %1274 = vrot.lane.b32.xlu0 %v1271, 64
  %v1275 = vpop.permute.xlu0 %1274
  %v1277 = vmul.f32 %v1270, %v1275
  %1279 = vrot.lane.b32.xlu0 %v1277, 32
  %v1280 = vpop.permute.xlu0 %1279
  %v1282 = vadd.f32 %v1272, %v1280
  %v1283 = vtanh.pop %v1282
  %1285 = vrot.lane.b32.xlu0 %v1283, 64
  %v1286 = vpop.permute.xlu0 %1285
  %v1288 = vmul.f32 %v1270, %v1286
  %1289 = vmatprep.subr.mxu0 0.0
  %1290 = vmatpush1.msra.mxu0 %v192
  %1291 = vmatprep.subr.mxu0 0.0
  %1292 = vmatpush1.msra.mxu0 %v193
  %1293 = vmatprep.subr.mxu0 0.0
  %1294 = vmatpush1.msra.mxu0 %v194
  %1295 = vmatprep.subr.mxu0 0.0
  %1296 = vmatpush1.msra.mxu0 %v195
  %1297 = vmatprep.subr.mxu0 0.0
  %1298 = vmatpush1.msra.mxu0 0.0
  %1299 = vmatprep.subr.mxu0 0.0
  %1300 = vmatpush1.msra.mxu0 0.0
  %1301 = vmatprep.subr.mxu0 0.0
  %1302 = vmatpush1.msra.mxu0 0.0
  %1303 = vmatprep.subr.mxu0 0.0
  %1304 = vmatpush1.msra.mxu0 0.0
  %1305 = vmatprep.subr.mxu0 0.0
  %1306 = vmatpush1.msra.mxu0 0.0
  %1307 = vmatprep.subr.mxu0 0.0
  %1308 = vmatpush1.msra.mxu0 0.0
  %1309 = vmatprep.subr.mxu0 0.0
  %1310 = vmatpush1.msra.mxu0 0.0
  %1311 = vmatprep.subr.mxu0 0.0
  %1312 = vmatpush1.msra.mxu0 0.0
  %1313 = vmatprep.subr.mxu0 0.0
  %1314 = vmatpush1.msra.mxu0 0.0
  %1315 = vmatprep.subr.mxu0 0.0
  %1316 = vmatpush1.msra.mxu0 0.0
  %1317 = vmatprep.subr.mxu0 0.0
  %1318 = vmatpush1.msra.mxu0 0.0
  %1319 = vmatprep.subr.mxu0 0.0
  %1320 = vmatpush1.msra.mxu0 0.0
  %1321 = vmatprep.subr.mxu0 0.0
  %1322 = vmatpush1.msra.mxu0 0.0
  %1323 = vmatprep.subr.mxu0 0.0
  %1324 = vmatpush1.msra.mxu0 0.0
  %1325 = vmatprep.subr.mxu0 0.0
  %1326 = vmatpush1.msra.mxu0 0.0
  %1327 = vmatprep.subr.mxu0 0.0
  %1328 = vmatpush1.msra.mxu0 0.0
  %1329 = vmatprep.subr.mxu0 0.0
  %1330 = vmatpush1.msra.mxu0 0.0
  %1331 = vmatprep.subr.mxu0 0.0
  %1332 = vmatpush1.msra.mxu0 0.0
  %1333 = vmatprep.subr.mxu0 0.0
  %1334 = vmatpush1.msra.mxu0 0.0
  %1335 = vmatprep.subr.mxu0 0.0
  %1336 = vmatpush1.msra.mxu0 0.0
  %1337 = vmatprep.subr.mxu0 0.0
  %1338 = vmatpush1.msra.mxu0 0.0
  %1339 = vmatprep.subr.mxu0 0.0
  %1340 = vmatpush1.msra.mxu0 0.0
  %1341 = vmatprep.subr.mxu0 0.0
  %1342 = vmatpush1.msra.mxu0 0.0
  %1343 = vmatprep.subr.mxu0 0.0
  %1344 = vmatpush1.msra.mxu0 0.0
  %1345 = vmatprep.subr.mxu0 0.0
  %1346 = vmatpush1.msra.mxu0 0.0
  %1347 = vmatprep.subr.mxu0 0.0
  %1348 = vmatpush1.msra.mxu0 0.0
  %1349 = vmatprep.subr.mxu0 0.0
  %1350 = vmatpush1.msra.mxu0 0.0
  %1351 = vmatprep.subr.mxu0 0.0
  %1352 = vmatpush1.msra.mxu0 0.0
  %1353 = vmatprep.mubr.f32.mxu0 0.0
  %1354 = vmatmul.mubr.f32.gmra.mrb[0].mxu0 %v1192
  %v1355 = vpop.f32.mrb[0].mxu0
  %v1356 = vadd.f32 0.0, %v1355
  %v1357 = vpop.f32.mrb[0].mxu0
  %1358 = vdwg.mxu0
  %v1359 = vadd.f32 %v174, %v1356
  %v1360 = vxor.u32 %v1359, 2147483648
  %v1361 = vmul.f32 %v1360, 1.442695
  %v1362 = vpow.pop %v1361
  %v1363 = vadd.f32 %v1362, 1.0
  %v1364 = vrcp.pop %v1363
  %v1365 = vmul.f32 1.0, %v1364
  %v1366 = vtanh.pop %v1359
  %v1367 = vmul.f32 %v1365, %v1107
  %1369 = vrot.lane.b32.xlu0 %v1366, 64
  %v1370 = vpop.permute.xlu0 %1369
  %v1372 = vmul.f32 %v1365, %v1370
  %1374 = vrot.lane.b32.xlu0 %v1372, 32
  %v1375 = vpop.permute.xlu0 %1374
  %v1377 = vadd.f32 %v1367, %v1375
  %v1378 = vtanh.pop %v1377
  %1380 = vrot.lane.b32.xlu0 %v1378, 64
  %v1381 = vpop.permute.xlu0 %1380
  %v1383 = vmul.f32 %v1365, %v1381
  %1385 = vrot.lane.b32.xlu0 %v1288, 32
  %v1386 = vpop.permute.xlu0 %1385
  %v1387 = vsel %vm196, %v1386, 0
  %1389 = vmatprep.subr.mxu0 0.0
  %1390 = vmatpush1.msra.mxu0 %v299
  %1391 = vmatprep.subr.mxu0 0.0
  %1392 = vmatpush1.msra.mxu0 %v300
  %1393 = vmatprep.subr.mxu0 0.0
  %1394 = vmatpush1.msra.mxu0 %v301
  %1395 = vmatprep.subr.mxu0 0.0
  %1396 = vmatpush1.msra.mxu0 %v302
  %1397 = vmatprep.subr.mxu0 0.0
  %1398 = vmatpush1.msra.mxu0 0.0
  %1399 = vmatprep.subr.mxu0 0.0
  %1400 = vmatpush1.msra.mxu0 0.0
  %1401 = vmatprep.subr.mxu0 0.0
  %1402 = vmatpush1.msra.mxu0 0.0
  %1403 = vmatprep.subr.mxu0 0.0
  %1404 = vmatpush1.msra.mxu0 0.0
  %1405 = vmatprep.subr.mxu0 0.0
  %1406 = vmatpush1.msra.mxu0 0.0
  %1407 = vmatprep.subr.mxu0 0.0
  %1408 = vmatpush1.msra.mxu0 0.0
  %1409 = vmatprep.subr.mxu0 0.0
  %1410 = vmatpush1.msra.mxu0 0.0
  %1411 = vmatprep.subr.mxu0 0.0
  %1412 = vmatpush1.msra.mxu0 0.0
  %1413 = vmatprep.subr.mxu0 0.0
  %1414 = vmatpush1.msra.mxu0 0.0
  %1415 = vmatprep.subr.mxu0 0.0
  %1416 = vmatpush1.msra.mxu0 0.0
  %1417 = vmatprep.subr.mxu0 0.0
  %1418 = vmatpush1.msra.mxu0 0.0
  %1419 = vmatprep.subr.mxu0 0.0
  %1420 = vmatpush1.msra.mxu0 0.0
  %1421 = vmatprep.subr.mxu0 0.0
  %1422 = vmatpush1.msra.mxu0 0.0
  %1423 = vmatprep.subr.mxu0 0.0
  %1424 = vmatpush1.msra.mxu0 0.0
  %1425 = vmatprep.subr.mxu0 0.0
  %1426 = vmatpush1.msra.mxu0 0.0
  %1427 = vmatprep.subr.mxu0 0.0
  %1428 = vmatpush1.msra.mxu0 0.0
  %1429 = vmatprep.subr.mxu0 0.0
  %1430 = vmatpush1.msra.mxu0 0.0
  %1431 = vmatprep.subr.mxu0 0.0
  %1432 = vmatpush1.msra.mxu0 0.0
  %1433 = vmatprep.subr.mxu0 0.0
  %1434 = vmatpush1.msra.mxu0 0.0
  %1435 = vmatprep.subr.mxu0 0.0
  %1436 = vmatpush1.msra.mxu0 0.0
  %1437 = vmatprep.subr.mxu0 0.0
  %1438 = vmatpush1.msra.mxu0 0.0
  %1439 = vmatprep.subr.mxu0 0.0
  %1440 = vmatpush1.msra.mxu0 0.0
  %1441 = vmatprep.subr.mxu0 0.0
  %1442 = vmatpush1.msra.mxu0 0.0
  %1443 = vmatprep.subr.mxu0 0.0
  %1444 = vmatpush1.msra.mxu0 0.0
  %1445 = vmatprep.subr.mxu0 0.0
  %1446 = vmatpush1.msra.mxu0 0.0
  %1447 = vmatprep.subr.mxu0 0.0
  %1448 = vmatpush1.msra.mxu0 0.0
  %1449 = vmatprep.subr.mxu0 0.0
  %1450 = vmatpush1.msra.mxu0 0.0
  %1451 = vmatprep.subr.mxu0 0.0
  %1452 = vmatpush1.msra.mxu0 0.0
  %1453 = vmatprep.mubr.f32.mxu0 0.0
  %1454 = vmatmul.mubr.f32.gmra.mrb[0].mxu0 %v1387
  %v1455 = vpop.f32.mrb[0].mxu0
  %v1456 = vadd.f32 0.0, %v1455
  %v1457 = vpop.f32.mrb[0].mxu0
  %1458 = vdwg.mxu0
  %1460 = vrot.lane.b32.xlu0 %v1383, 32
  %v1461 = vpop.permute.xlu0 %1460
  %v1462 = vsel %vm196, %v1461, 0
  %1464 = vmatprep.subr.mxu0 0.0
  %1465 = vmatpush1.msra.mxu0 %v295
  %1466 = vmatprep.subr.mxu0 0.0
  %1467 = vmatpush1.msra.mxu0 %v296
  %1468 = vmatprep.subr.mxu0 0.0
  %1469 = vmatpush1.msra.mxu0 %v297
  %1470 = vmatprep.subr.mxu0 0.0
  %1471 = vmatpush1.msra.mxu0 %v298
  %1472 = vmatprep.subr.mxu0 0.0
  %1473 = vmatpush1.msra.mxu0 0.0
  %1474 = vmatprep.subr.mxu0 0.0
  %1475 = vmatpush1.msra.mxu0 0.0
  %1476 = vmatprep.subr.mxu0 0.0
  %1477 = vmatpush1.msra.mxu0 0.0
  %1478 = vmatprep.subr.mxu0 0.0
  %1479 = vmatpush1.msra.mxu0 0.0
  %1480 = vmatprep.subr.mxu0 0.0
  %1481 = vmatpush1.msra.mxu0 0.0
  %1482 = vmatprep.subr.mxu0 0.0
  %1483 = vmatpush1.msra.mxu0 0.0
  %1484 = vmatprep.subr.mxu0 0.0
  %1485 = vmatpush1.msra.mxu0 0.0
  %1486 = vmatprep.subr.mxu0 0.0
  %1487 = vmatpush1.msra.mxu0 0.0
  %1488 = vmatprep.subr.mxu0 0.0
  %1489 = vmatpush1.msra.mxu0 0.0
  %1490 = vmatprep.subr.mxu0 0.0
  %1491 = vmatpush1.msra.mxu0 0.0
  %1492 = vmatprep.subr.mxu0 0.0
  %1493 = vmatpush1.msra.mxu0 0.0
  %1494 = vmatprep.subr.mxu0 0.0
  %1495 = vmatpush1.msra.mxu0 0.0
  %1496 = vmatprep.subr.mxu0 0.0
  %1497 = vmatpush1.msra.mxu0 0.0
  %1498 = vmatprep.subr.mxu0 0.0
  %1499 = vmatpush1.msra.mxu0 0.0
  %1500 = vmatprep.subr.mxu0 0.0
  %1501 = vmatpush1.msra.mxu0 0.0
  %1502 = vmatprep.subr.mxu0 0.0
  %1503 = vmatpush1.msra.mxu0 0.0
  %1504 = vmatprep.subr.mxu0 0.0
  %1505 = vmatpush1.msra.mxu0 0.0
  %1506 = vmatprep.subr.mxu0 0.0
  %1507 = vmatpush1.msra.mxu0 0.0
  %1508 = vmatprep.subr.mxu0 0.0
  %1509 = vmatpush1.msra.mxu0 0.0
  %1510 = vmatprep.subr.mxu0 0.0
  %1511 = vmatpush1.msra.mxu0 0.0
  %1512 = vmatprep.subr.mxu0 0.0
  %1513 = vmatpush1.msra.mxu0 0.0
  %1514 = vmatprep.subr.mxu0 0.0
  %1515 = vmatpush1.msra.mxu0 0.0
  %1516 = vmatprep.subr.mxu0 0.0
  %1517 = vmatpush1.msra.mxu0 0.0
  %1518 = vmatprep.subr.mxu0 0.0
  %1519 = vmatpush1.msra.mxu0 0.0
  %1520 = vmatprep.subr.mxu0 0.0
  %1521 = vmatpush1.msra.mxu0 0.0
  %1522 = vmatprep.subr.mxu0 0.0
  %1523 = vmatpush1.msra.mxu0 0.0
  %1524 = vmatprep.subr.mxu0 0.0
  %1525 = vmatpush1.msra.mxu0 0.0
  %1526 = vmatprep.subr.mxu0 0.0
  %1527 = vmatpush1.msra.mxu0 0.0
  %1528 = vmatprep.mubr.f32.mxu0 0.0
  %1529 = vmatmul.mubr.f32.gmra.mrb[0].mxu0 %v1462
  %v1530 = vpop.f32.mrb[0].mxu0
  %v1531 = vadd.f32 %v1456, %v1530
  %v1532 = vpop.f32.mrb[0].mxu0
  %1533 = vdwg.mxu0
  %v1534 = vadd.f32 %v1531, %v452
  %v1535 = vxor.u32 %v1534, 2147483648
  %v1536 = vmul.f32 %v1535, 1.442695
  %v1537 = vpow.pop %v1536
  %v1538 = vadd.f32 %v1537, 1.0
  %v1539 = vrcp.pop %v1538
  %v1540 = vmul.f32 1.0, %v1539
  %v1541 = vtanh.pop %v1534
  %v1542 = vmul.f32 %v1540, %v1282
  %1544 = vrot.lane.b32.xlu0 %v1541, 64
  %v1545 = vpop.permute.xlu0 %1544
  %v1547 = vmul.f32 %v1540, %v1545
  %1549 = vrot.lane.b32.xlu0 %v1547, 32
  %v1550 = vpop.permute.xlu0 %1549
  %v1552 = vadd.f32 %v1542, %v1550
  %v1553 = vtanh.pop %v1552
  %1555 = vrot.lane.b32.xlu0 %v1553, 64
  %v1556 = vpop.permute.xlu0 %1555
  %v1558 = vmul.f32 %v1540, %v1556
  %1559 = vmatprep.subr.mxu0 0.0
  %1560 = vmatpush1.msra.mxu0 %v192
  %1561 = vmatprep.subr.mxu0 0.0
  %1562 = vmatpush1.msra.mxu0 %v193
  %1563 = vmatprep.subr.mxu0 0.0
  %1564 = vmatpush1.msra.mxu0 %v194
  %1565 = vmatprep.subr.mxu0 0.0
  %1566 = vmatpush1.msra.mxu0 %v195
  %1567 = vmatprep.subr.mxu0 0.0
  %1568 = vmatpush1.msra.mxu0 0.0
  %1569 = vmatprep.subr.mxu0 0.0
  %1570 = vmatpush1.msra.mxu0 0.0
  %1571 = vmatprep.subr.mxu0 0.0
  %1572 = vmatpush1.msra.mxu0 0.0
  %1573 = vmatprep.subr.mxu0 0.0
  %1574 = vmatpush1.msra.mxu0 0.0
  %1575 = vmatprep.subr.mxu0 0.0
  %1576 = vmatpush1.msra.mxu0 0.0
  %1577 = vmatprep.subr.mxu0 0.0
  %1578 = vmatpush1.msra.mxu0 0.0
  %1579 = vmatprep.subr.mxu0 0.0
  %1580 = vmatpush1.msra.mxu0 0.0
  %1581 = vmatprep.subr.mxu0 0.0
  %1582 = vmatpush1.msra.mxu0 0.0
  %1583 = vmatprep.subr.mxu0 0.0
  %1584 = vmatpush1.msra.mxu0 0.0
  %1585 = vmatprep.subr.mxu0 0.0
  %1586 = vmatpush1.msra.mxu0 0.0
  %1587 = vmatprep.subr.mxu0 0.0
  %1588 = vmatpush1.msra.mxu0 0.0
  %1589 = vmatprep.subr.mxu0 0.0
  %1590 = vmatpush1.msra.mxu0 0.0
  %1591 = vmatprep.subr.mxu0 0.0
  %1592 = vmatpush1.msra.mxu0 0.0
  %1593 = vmatprep.subr.mxu0 0.0
  %1594 = vmatpush1.msra.mxu0 0.0
  %1595 = vmatprep.subr.mxu0 0.0
  %1596 = vmatpush1.msra.mxu0 0.0
  %1597 = vmatprep.subr.mxu0 0.0
  %1598 = vmatpush1.msra.mxu0 0.0
  %1599 = vmatprep.subr.mxu0 0.0
  %1600 = vmatpush1.msra.mxu0 0.0
  %1601 = vmatprep.subr.mxu0 0.0
  %1602 = vmatpush1.msra.mxu0 0.0
  %1603 = vmatprep.subr.mxu0 0.0
  %1604 = vmatpush1.msra.mxu0 0.0
  %1605 = vmatprep.subr.mxu0 0.0
  %1606 = vmatpush1.msra.mxu0 0.0
  %1607 = vmatprep.subr.mxu0 0.0
  %1608 = vmatpush1.msra.mxu0 0.0
  %1609 = vmatprep.subr.mxu0 0.0
  %1610 = vmatpush1.msra.mxu0 0.0
  %1611 = vmatprep.subr.mxu0 0.0
  %1612 = vmatpush1.msra.mxu0 0.0
  %1613 = vmatprep.subr.mxu0 0.0
  %1614 = vmatpush1.msra.mxu0 0.0
  %1615 = vmatprep.subr.mxu0 0.0
  %1616 = vmatpush1.msra.mxu0 0.0
  %1617 = vmatprep.subr.mxu0 0.0
  %1618 = vmatpush1.msra.mxu0 0.0
  %1619 = vmatprep.subr.mxu0 0.0
  %1620 = vmatpush1.msra.mxu0 0.0
  %1621 = vmatprep.subr.mxu0 0.0
  %1622 = vmatpush1.msra.mxu0 0.0
  %1623 = vmatprep.mubr.f32.mxu0 0.0
  %1624 = vmatmul.mubr.f32.gmra.mrb[0].mxu0 %v1462
  %v1625 = vpop.f32.mrb[0].mxu0
  %v1626 = vadd.f32 0.0, %v1625
  %v1627 = vpop.f32.mrb[0].mxu0
  %1628 = vdwg.mxu0
  %v1629 = vadd.f32 %v179, %v1626
  %v1630 = vxor.u32 %v1629, 2147483648
  %v1631 = vmul.f32 %v1630, 1.442695
  %v1632 = vpow.pop %v1631
  %v1633 = vadd.f32 %v1632, 1.0
  %v1634 = vrcp.pop %v1633
  %v1635 = vmul.f32 1.0, %v1634
  %v1636 = vtanh.pop %v1629
  %v1637 = vmul.f32 %v1635, %v1377
  %1639 = vrot.lane.b32.xlu0 %v1636, 64
  %v1640 = vpop.permute.xlu0 %1639
  %v1642 = vmul.f32 %v1635, %v1640
  %1644 = vrot.lane.b32.xlu0 %v1642, 32
  %v1645 = vpop.permute.xlu0 %1644
  %v1647 = vadd.f32 %v1637, %v1645
  %v1648 = vtanh.pop %v1647
  %1650 = vrot.lane.b32.xlu0 %v1648, 64
  %v1651 = vpop.permute.xlu0 %1650
  %v1653 = vmul.f32 %v1635, %v1651
  %1655 = vrot.lane.b32.xlu0 %v1558, 32
  %v1656 = vpop.permute.xlu0 %1655
  %v1657 = vsel %vm196, %v1656, 0
  %1659 = vmatprep.subr.mxu0 0.0
  %1660 = vmatpush1.msra.mxu0 %v299
  %1661 = vmatprep.subr.mxu0 0.0
  %1662 = vmatpush1.msra.mxu0 %v300
  %1663 = vmatprep.subr.mxu0 0.0
  %1664 = vmatpush1.msra.mxu0 %v301
  %1665 = vmatprep.subr.mxu0 0.0
  %1666 = vmatpush1.msra.mxu0 %v302
  %1667 = vmatprep.subr.mxu0 0.0
  %1668 = vmatpush1.msra.mxu0 0.0
  %1669 = vmatprep.subr.mxu0 0.0
  %1670 = vmatpush1.msra.mxu0 0.0
  %1671 = vmatprep.subr.mxu0 0.0
  %1672 = vmatpush1.msra.mxu0 0.0
  %1673 = vmatprep.subr.mxu0 0.0
  %1674 = vmatpush1.msra.mxu0 0.0
  %1675 = vmatprep.subr.mxu0 0.0
  %1676 = vmatpush1.msra.mxu0 0.0
  %1677 = vmatprep.subr.mxu0 0.0
  %1678 = vmatpush1.msra.mxu0 0.0
  %1679 = vmatprep.subr.mxu0 0.0
  %1680 = vmatpush1.msra.mxu0 0.0
  %1681 = vmatprep.subr.mxu0 0.0
  %1682 = vmatpush1.msra.mxu0 0.0
  %1683 = vmatprep.subr.mxu0 0.0
  %1684 = vmatpush1.msra.mxu0 0.0
  %1685 = vmatprep.subr.mxu0 0.0
  %1686 = vmatpush1.msra.mxu0 0.0
  %1687 = vmatprep.subr.mxu0 0.0
  %1688 = vmatpush1.msra.mxu0 0.0
  %1689 = vmatprep.subr.mxu0 0.0
  %1690 = vmatpush1.msra.mxu0 0.0
  %1691 = vmatprep.subr.mxu0 0.0
  %1692 = vmatpush1.msra.mxu0 0.0
  %1693 = vmatprep.subr.mxu0 0.0
  %1694 = vmatpush1.msra.mxu0 0.0
  %1695 = vmatprep.subr.mxu0 0.0
  %1696 = vmatpush1.msra.mxu0 0.0
  %1697 = vmatprep.subr.mxu0 0.0
  %1698 = vmatpush1.msra.mxu0 0.0
  %1699 = vmatprep.subr.mxu0 0.0
  %1700 = vmatpush1.msra.mxu0 0.0
  %1701 = vmatprep.subr.mxu0 0.0
  %1702 = vmatpush1.msra.mxu0 0.0
  %1703 = vmatprep.subr.mxu0 0.0
  %1704 = vmatpush1.msra.mxu0 0.0
  %1705 = vmatprep.subr.mxu0 0.0
  %1706 = vmatpush1.msra.mxu0 0.0
  %1707 = vmatprep.subr.mxu0 0.0
  %1708 = vmatpush1.msra.mxu0 0.0
  %1709 = vmatprep.subr.mxu0 0.0
  %1710 = vmatpush1.msra.mxu0 0.0
  %1711 = vmatprep.subr.mxu0 0.0
  %1712 = vmatpush1.msra.mxu0 0.0
  %1713 = vmatprep.subr.mxu0 0.0
  %1714 = vmatpush1.msra.mxu0 0.0
  %1715 = vmatprep.subr.mxu0 0.0
  %1716 = vmatpush1.msra.mxu0 0.0
  %1717 = vmatprep.subr.mxu0 0.0
  %1718 = vmatpush1.msra.mxu0 0.0
  %1719 = vmatprep.subr.mxu0 0.0
  %1720 = vmatpush1.msra.mxu0 0.0
  %1721 = vmatprep.subr.mxu0 0.0
  %1722 = vmatpush1.msra.mxu0 0.0
  %1723 = vmatprep.mubr.f32.mxu0 0.0
  %1724 = vmatmul.mubr.f32.gmra.mrb[0].mxu0 %v1657
  %v1725 = vpop.f32.mrb[0].mxu0
  %v1726 = vadd.f32 0.0, %v1725
  %v1727 = vpop.f32.mrb[0].mxu0
  %1728 = vdwg.mxu0
  %1730 = vrot.lane.b32.xlu0 %v1653, 32
  %v1731 = vpop.permute.xlu0 %1730
  %v1732 = vsel %vm196, %v1731, 0
  %1734 = vmatprep.subr.mxu0 0.0
  %1735 = vmatpush1.msra.mxu0 %v295
  %1736 = vmatprep.subr.mxu0 0.0
  %1737 = vmatpush1.msra.mxu0 %v296
  %1738 = vmatprep.subr.mxu0 0.0
  %1739 = vmatpush1.msra.mxu0 %v297
  %1740 = vmatprep.subr.mxu0 0.0
  %1741 = vmatpush1.msra.mxu0 %v298
  %1742 = vmatprep.subr.mxu0 0.0
  %1743 = vmatpush1.msra.mxu0 0.0
  %1744 = vmatprep.subr.mxu0 0.0
  %1745 = vmatpush1.msra.mxu0 0.0
  %1746 = vmatprep.subr.mxu0 0.0
  %1747 = vmatpush1.msra.mxu0 0.0
  %1748 = vmatprep.subr.mxu0 0.0
  %1749 = vmatpush1.msra.mxu0 0.0
  %1750 = vmatprep.subr.mxu0 0.0
  %1751 = vmatpush1.msra.mxu0 0.0
  %1752 = vmatprep.subr.mxu0 0.0
  %1753 = vmatpush1.msra.mxu0 0.0
  %1754 = vmatprep.subr.mxu0 0.0
  %1755 = vmatpush1.msra.mxu0 0.0
  %1756 = vmatprep.subr.mxu0 0.0
  %1757 = vmatpush1.msra.mxu0 0.0
  %1758 = vmatprep.subr.mxu0 0.0
  %1759 = vmatpush1.msra.mxu0 0.0
  %1760 = vmatprep.subr.mxu0 0.0
  %1761 = vmatpush1.msra.mxu0 0.0
  %1762 = vmatprep.subr.mxu0 0.0
  %1763 = vmatpush1.msra.mxu0 0.0
  %1764 = vmatprep.subr.mxu0 0.0
  %1765 = vmatpush1.msra.mxu0 0.0
  %1766 = vmatprep.subr.mxu0 0.0
  %1767 = vmatpush1.msra.mxu0 0.0
  %1768 = vmatprep.subr.mxu0 0.0
  %1769 = vmatpush1.msra.mxu0 0.0
  %1770 = vmatprep.subr.mxu0 0.0
  %1771 = vmatpush1.msra.mxu0 0.0
  %1772 = vmatprep.subr.mxu0 0.0
  %1773 = vmatpush1.msra.mxu0 0.0
  %1774 = vmatprep.subr.mxu0 0.0
  %1775 = vmatpush1.msra.mxu0 0.0
  %1776 = vmatprep.subr.mxu0 0.0
  %1777 = vmatpush1.msra.mxu0 0.0
  %1778 = vmatprep.subr.mxu0 0.0
  %1779 = vmatpush1.msra.mxu0 0.0
  %1780 = vmatprep.subr.mxu0 0.0
  %1781 = vmatpush1.msra.mxu0 0.0
  %1782 = vmatprep.subr.mxu0 0.0
  %1783 = vmatpush1.msra.mxu0 0.0
  %1784 = vmatprep.subr.mxu0 0.0
  %1785 = vmatpush1.msra.mxu0 0.0
  %1786 = vmatprep.subr.mxu0 0.0
  %1787 = vmatpush1.msra.mxu0 0.0
  %1788 = vmatprep.subr.mxu0 0.0
  %1789 = vmatpush1.msra.mxu0 0.0
  %1790 = vmatprep.subr.mxu0 0.0
  %1791 = vmatpush1.msra.mxu0 0.0
  %1792 = vmatprep.subr.mxu0 0.0
  %1793 = vmatpush1.msra.mxu0 0.0
  %1794 = vmatprep.subr.mxu0 0.0
  %1795 = vmatpush1.msra.mxu0 0.0
  %1796 = vmatprep.subr.mxu0 0.0
  %1797 = vmatpush1.msra.mxu0 0.0
  %1798 = vmatprep.mubr.f32.mxu0 0.0
  %1799 = vmatmul.mubr.f32.gmra.mrb[0].mxu0 %v1732
  %v1800 = vpop.f32.mrb[0].mxu0
  %v1801 = vadd.f32 %v1726, %v1800
  %v1802 = vpop.f32.mrb[0].mxu0
  %1803 = vdwg.mxu0
  %v1804 = vadd.f32 %v1801, %v452
  %v1805 = vxor.u32 %v1804, 2147483648
  %v1806 = vmul.f32 %v1805, 1.442695
  %v1807 = vpow.pop %v1806
  %v1808 = vadd.f32 %v1807, 1.0
  %v1809 = vrcp.pop %v1808
  %v1810 = vmul.f32 1.0, %v1809
  %v1811 = vtanh.pop %v1804
  %v1812 = vmul.f32 %v1810, %v1552
  %1814 = vrot.lane.b32.xlu0 %v1811, 64
  %v1815 = vpop.permute.xlu0 %1814
  %v1817 = vmul.f32 %v1810, %v1815
  %1819 = vrot.lane.b32.xlu0 %v1817, 32
  %v1820 = vpop.permute.xlu0 %1819
  %v1822 = vadd.f32 %v1812, %v1820
  %v1823 = vtanh.pop %v1822
  %1825 = vrot.lane.b32.xlu0 %v1823, 64
  %v1826 = vpop.permute.xlu0 %1825
  %v1828 = vmul.f32 %v1810, %v1826
  %1829 = vmatprep.subr.mxu0 0.0
  %1830 = vmatpush1.msra.mxu0 %v192
  %1831 = vmatprep.subr.mxu0 0.0
  %1832 = vmatpush1.msra.mxu0 %v193
  %1833 = vmatprep.subr.mxu0 0.0
  %1834 = vmatpush1.msra.mxu0 %v194
  %1835 = vmatprep.subr.mxu0 0.0
  %1836 = vmatpush1.msra.mxu0 %v195
  %1837 = vmatprep.subr.mxu0 0.0
  %1838 = vmatpush1.msra.mxu0 0.0
  %1839 = vmatprep.subr.mxu0 0.0
  %1840 = vmatpush1.msra.mxu0 0.0
  %1841 = vmatprep.subr.mxu0 0.0
  %1842 = vmatpush1.msra.mxu0 0.0
  %1843 = vmatprep.subr.mxu0 0.0
  %1844 = vmatpush1.msra.mxu0 0.0
  %1845 = vmatprep.subr.mxu0 0.0
  %1846 = vmatpush1.msra.mxu0 0.0
  %1847 = vmatprep.subr.mxu0 0.0
  %1848 = vmatpush1.msra.mxu0 0.0
  %1849 = vmatprep.subr.mxu0 0.0
  %1850 = vmatpush1.msra.mxu0 0.0
  %1851 = vmatprep.subr.mxu0 0.0
  %1852 = vmatpush1.msra.mxu0 0.0
  %1853 = vmatprep.subr.mxu0 0.0
  %1854 = vmatpush1.msra.mxu0 0.0
  %1855 = vmatprep.subr.mxu0 0.0
  %1856 = vmatpush1.msra.mxu0 0.0
  %1857 = vmatprep.subr.mxu0 0.0
  %1858 = vmatpush1.msra.mxu0 0.0
  %1859 = vmatprep.subr.mxu0 0.0
  %1860 = vmatpush1.msra.mxu0 0.0
  %1861 = vmatprep.subr.mxu0 0.0
  %1862 = vmatpush1.msra.mxu0 0.0
  %1863 = vmatprep.subr.mxu0 0.0
  %1864 = vmatpush1.msra.mxu0 0.0
  %1865 = vmatprep.subr.mxu0 0.0
  %1866 = vmatpush1.msra.mxu0 0.0
  %1867 = vmatprep.subr.mxu0 0.0
  %1868 = vmatpush1.msra.mxu0 0.0
  %1869 = vmatprep.subr.mxu0 0.0
  %1870 = vmatpush1.msra.mxu0 0.0
  %1871 = vmatprep.subr.mxu0 0.0
  %1872 = vmatpush1.msra.mxu0 0.0
  %1873 = vmatprep.subr.mxu0 0.0
  %1874 = vmatpush1.msra.mxu0 0.0
  %1875 = vmatprep.subr.mxu0 0.0
  %1876 = vmatpush1.msra.mxu0 0.0
  %1877 = vmatprep.subr.mxu0 0.0
  %1878 = vmatpush1.msra.mxu0 0.0
  %1879 = vmatprep.subr.mxu0 0.0
  %1880 = vmatpush1.msra.mxu0 0.0
  %1881 = vmatprep.subr.mxu0 0.0
  %1882 = vmatpush1.msra.mxu0 0.0
  %1883 = vmatprep.subr.mxu0 0.0
  %1884 = vmatpush1.msra.mxu0 0.0
  %1885 = vmatprep.subr.mxu0 0.0
  %1886 = vmatpush1.msra.mxu0 0.0
  %1887 = vmatprep.subr.mxu0 0.0
  %1888 = vmatpush1.msra.mxu0 0.0
  %1889 = vmatprep.subr.mxu0 0.0
  %1890 = vmatpush1.msra.mxu0 0.0
  %1891 = vmatprep.subr.mxu0 0.0
  %1892 = vmatpush1.msra.mxu0 0.0
  %1893 = vmatprep.mubr.f32.mxu0 0.0
  %1894 = vmatmul.mubr.f32.gmra.mrb[0].mxu0 %v1732
  %v1895 = vpop.f32.mrb[0].mxu0
  %v1896 = vadd.f32 0.0, %v1895
  %v1897 = vpop.f32.mrb[0].mxu0
  %1898 = vdwg.mxu0
  %v1899 = vadd.f32 %v184, %v1896
  %v1900 = vxor.u32 %v1899, 2147483648
  %v1901 = vmul.f32 %v1900, 1.442695
  %v1902 = vpow.pop %v1901
  %v1903 = vadd.f32 %v1902, 1.0
  %v1904 = vrcp.pop %v1903
  %v1905 = vmul.f32 1.0, %v1904
  %v1906 = vtanh.pop %v1899
  %v1907 = vmul.f32 %v1905, %v1647
  %1909 = vrot.lane.b32.xlu0 %v1906, 64
  %v1910 = vpop.permute.xlu0 %1909
  %v1912 = vmul.f32 %v1905, %v1910
  %1914 = vrot.lane.b32.xlu0 %v1912, 32
  %v1915 = vpop.permute.xlu0 %1914
  %v1917 = vadd.f32 %v1907, %v1915
  %v1918 = vtanh.pop %v1917
  %1920 = vrot.lane.b32.xlu0 %v1918, 64
  %v1921 = vpop.permute.xlu0 %1920
  %v1923 = vmul.f32 %v1905, %v1921
  %1925 = vrot.lane.b32.xlu0 %v1828, 32
  %v1926 = vpop.permute.xlu0 %1925
  %v1927 = vsel %vm196, %v1926, 0
  %1929 = vmatprep.subr.mxu0 0.0
  %1930 = vmatpush1.msra.mxu0 %v299
  %1931 = vmatprep.subr.mxu0 0.0
  %1932 = vmatpush1.msra.mxu0 %v300
  %1933 = vmatprep.subr.mxu0 0.0
  %1934 = vmatpush1.msra.mxu0 %v301
  %1935 = vmatprep.subr.mxu0 0.0
  %1936 = vmatpush1.msra.mxu0 %v302
  %1937 = vmatprep.subr.mxu0 0.0
  %1938 = vmatpush1.msra.mxu0 0.0
  %1939 = vmatprep.subr.mxu0 0.0
  %1940 = vmatpush1.msra.mxu0 0.0
  %1941 = vmatprep.subr.mxu0 0.0
  %1942 = vmatpush1.msra.mxu0 0.0
  %1943 = vmatprep.subr.mxu0 0.0
  %1944 = vmatpush1.msra.mxu0 0.0
  %1945 = vmatprep.subr.mxu0 0.0
  %1946 = vmatpush1.msra.mxu0 0.0
  %1947 = vmatprep.subr.mxu0 0.0
  %1948 = vmatpush1.msra.mxu0 0.0
  %1949 = vmatprep.subr.mxu0 0.0
  %1950 = vmatpush1.msra.mxu0 0.0
  %1951 = vmatprep.subr.mxu0 0.0
  %1952 = vmatpush1.msra.mxu0 0.0
  %1953 = vmatprep.subr.mxu0 0.0
  %1954 = vmatpush1.msra.mxu0 0.0
  %1955 = vmatprep.subr.mxu0 0.0
  %1956 = vmatpush1.msra.mxu0 0.0
  %1957 = vmatprep.subr.mxu0 0.0
  %1958 = vmatpush1.msra.mxu0 0.0
  %1959 = vmatprep.subr.mxu0 0.0
  %1960 = vmatpush1.msra.mxu0 0.0
  %1961 = vmatprep.subr.mxu0 0.0
  %1962 = vmatpush1.msra.mxu0 0.0
  %1963 = vmatprep.subr.mxu0 0.0
  %1964 = vmatpush1.msra.mxu0 0.0
  %1965 = vmatprep.subr.mxu0 0.0
  %1966 = vmatpush1.msra.mxu0 0.0
  %1967 = vmatprep.subr.mxu0 0.0
  %1968 = vmatpush1.msra.mxu0 0.0
  %1969 = vmatprep.subr.mxu0 0.0
  %1970 = vmatpush1.msra.mxu0 0.0
  %1971 = vmatprep.subr.mxu0 0.0
  %1972 = vmatpush1.msra.mxu0 0.0
  %1973 = vmatprep.subr.mxu0 0.0
  %1974 = vmatpush1.msra.mxu0 0.0
  %1975 = vmatprep.subr.mxu0 0.0
  %1976 = vmatpush1.msra.mxu0 0.0
  %1977 = vmatprep.subr.mxu0 0.0
  %1978 = vmatpush1.msra.mxu0 0.0
  %1979 = vmatprep.subr.mxu0 0.0
  %1980 = vmatpush1.msra.mxu0 0.0
  %1981 = vmatprep.subr.mxu0 0.0
  %1982 = vmatpush1.msra.mxu0 0.0
  %1983 = vmatprep.subr.mxu0 0.0
  %1984 = vmatpush1.msra.mxu0 0.0
  %1985 = vmatprep.subr.mxu0 0.0
  %1986 = vmatpush1.msra.mxu0 0.0
  %1987 = vmatprep.subr.mxu0 0.0
  %1988 = vmatpush1.msra.mxu0 0.0
  %1989 = vmatprep.subr.mxu0 0.0
  %1990 = vmatpush1.msra.mxu0 0.0
  %1991 = vmatprep.subr.mxu0 0.0
  %1992 = vmatpush1.msra.mxu0 0.0
  %1993 = vmatprep.mubr.f32.mxu0 0.0
  %1994 = vmatmul.mubr.f32.gmra.mrb[0].mxu0 %v1927
  %v1995 = vpop.f32.mrb[0].mxu0
  %v1996 = vadd.f32 0.0, %v1995
  %v1997 = vpop.f32.mrb[0].mxu0
  %1998 = vdwg.mxu0
  %2000 = vrot.lane.b32.xlu0 %v1923, 32
  %v2001 = vpop.permute.xlu0 %2000
  %v2002 = vsel %vm196, %v2001, 0
  %2004 = vmatprep.subr.mxu0 0.0
  %2005 = vmatpush1.msra.mxu0 %v295
  %2006 = vmatprep.subr.mxu0 0.0
  %2007 = vmatpush1.msra.mxu0 %v296
  %2008 = vmatprep.subr.mxu0 0.0
  %2009 = vmatpush1.msra.mxu0 %v297
  %2010 = vmatprep.subr.mxu0 0.0
  %2011 = vmatpush1.msra.mxu0 %v298
  %2012 = vmatprep.subr.mxu0 0.0
  %2013 = vmatpush1.msra.mxu0 0.0
  %2014 = vmatprep.subr.mxu0 0.0
  %2015 = vmatpush1.msra.mxu0 0.0
  %2016 = vmatprep.subr.mxu0 0.0
  %2017 = vmatpush1.msra.mxu0 0.0
  %2018 = vmatprep.subr.mxu0 0.0
  %2019 = vmatpush1.msra.mxu0 0.0
  %2020 = vmatprep.subr.mxu0 0.0
  %2021 = vmatpush1.msra.mxu0 0.0
  %2022 = vmatprep.subr.mxu0 0.0
  %2023 = vmatpush1.msra.mxu0 0.0
  %2024 = vmatprep.subr.mxu0 0.0
  %2025 = vmatpush1.msra.mxu0 0.0
  %2026 = vmatprep.subr.mxu0 0.0
  %2027 = vmatpush1.msra.mxu0 0.0
  %2028 = vmatprep.subr.mxu0 0.0
  %2029 = vmatpush1.msra.mxu0 0.0
  %2030 = vmatprep.subr.mxu0 0.0
  %2031 = vmatpush1.msra.mxu0 0.0
  %2032 = vmatprep.subr.mxu0 0.0
  %2033 = vmatpush1.msra.mxu0 0.0
  %2034 = vmatprep.subr.mxu0 0.0
  %2035 = vmatpush1.msra.mxu0 0.0
  %2036 = vmatprep.subr.mxu0 0.0
  %2037 = vmatpush1.msra.mxu0 0.0
  %2038 = vmatprep.subr.mxu0 0.0
  %2039 = vmatpush1.msra.mxu0 0.0
  %2040 = vmatprep.subr.mxu0 0.0
  %2041 = vmatpush1.msra.mxu0 0.0
  %2042 = vmatprep.subr.mxu0 0.0
  %2043 = vmatpush1.msra.mxu0 0.0
  %2044 = vmatprep.subr.mxu0 0.0
  %2045 = vmatpush1.msra.mxu0 0.0
  %2046 = vmatprep.subr.mxu0 0.0
  %2047 = vmatpush1.msra.mxu0 0.0
  %2048 = vmatprep.subr.mxu0 0.0
  %2049 = vmatpush1.msra.mxu0 0.0
  %2050 = vmatprep.subr.mxu0 0.0
  %2051 = vmatpush1.msra.mxu0 0.0
  %2052 = vmatprep.subr.mxu0 0.0
  %2053 = vmatpush1.msra.mxu0 0.0
  %2054 = vmatprep.subr.mxu0 0.0
  %2055 = vmatpush1.msra.mxu0 0.0
  %2056 = vmatprep.subr.mxu0 0.0
  %2057 = vmatpush1.msra.mxu0 0.0
  %2058 = vmatprep.subr.mxu0 0.0
  %2059 = vmatpush1.msra.mxu0 0.0
  %2060 = vmatprep.subr.mxu0 0.0
  %2061 = vmatpush1.msra.mxu0 0.0
  %2062 = vmatprep.subr.mxu0 0.0
  %2063 = vmatpush1.msra.mxu0 0.0
  %2064 = vmatprep.subr.mxu0 0.0
  %2065 = vmatpush1.msra.mxu0 0.0
  %2066 = vmatprep.subr.mxu0 0.0
  %2067 = vmatpush1.msra.mxu0 0.0
  %2068 = vmatprep.mubr.f32.mxu0 0.0
  %2069 = vmatmul.mubr.f32.gmra.mrb[0].mxu0 %v2002
  %v2070 = vpop.f32.mrb[0].mxu0
  %v2071 = vadd.f32 %v1996, %v2070
  %v2072 = vpop.f32.mrb[0].mxu0
  %2073 = vdwg.mxu0
  %v2074 = vadd.f32 %v2071, %v452
  %v2075 = vxor.u32 %v2074, 2147483648
  %v2076 = vmul.f32 %v2075, 1.442695
  %v2077 = vpow.pop %v2076
  %v2078 = vadd.f32 %v2077, 1.0
  %v2079 = vrcp.pop %v2078
  %v2080 = vmul.f32 1.0, %v2079
  %v2081 = vtanh.pop %v2074
  %v2082 = vmul.f32 %v2080, %v1822
  %2084 = vrot.lane.b32.xlu0 %v2081, 64
  %v2085 = vpop.permute.xlu0 %2084
  %v2087 = vmul.f32 %v2080, %v2085
  %2089 = vrot.lane.b32.xlu0 %v2087, 32
  %v2090 = vpop.permute.xlu0 %2089
  %v2092 = vadd.f32 %v2082, %v2090
  %v2093 = vtanh.pop %v2092
  %2095 = vrot.lane.b32.xlu0 %v2093, 64
  %v2096 = vpop.permute.xlu0 %2095
  %v2098 = vmul.f32 %v2080, %v2096
  %2099 = vmatprep.subr.mxu0 0.0
  %2100 = vmatpush1.msra.mxu0 %v192
  %2101 = vmatprep.subr.mxu0 0.0
  %2102 = vmatpush1.msra.mxu0 %v193
  %2103 = vmatprep.subr.mxu0 0.0
  %2104 = vmatpush1.msra.mxu0 %v194
  %2105 = vmatprep.subr.mxu0 0.0
  %2106 = vmatpush1.msra.mxu0 %v195
  %2107 = vmatprep.subr.mxu0 0.0
  %2108 = vmatpush1.msra.mxu0 0.0
  %2109 = vmatprep.subr.mxu0 0.0
  %2110 = vmatpush1.msra.mxu0 0.0
  %2111 = vmatprep.subr.mxu0 0.0
  %2112 = vmatpush1.msra.mxu0 0.0
  %2113 = vmatprep.subr.mxu0 0.0
  %2114 = vmatpush1.msra.mxu0 0.0
  %2115 = vmatprep.subr.mxu0 0.0
  %2116 = vmatpush1.msra.mxu0 0.0
  %2117 = vmatprep.subr.mxu0 0.0
  %2118 = vmatpush1.msra.mxu0 0.0
  %2119 = vmatprep.subr.mxu0 0.0
  %2120 = vmatpush1.msra.mxu0 0.0
  %2121 = vmatprep.subr.mxu0 0.0
  %2122 = vmatpush1.msra.mxu0 0.0
  %2123 = vmatprep.subr.mxu0 0.0
  %2124 = vmatpush1.msra.mxu0 0.0
  %2125 = vmatprep.subr.mxu0 0.0
  %2126 = vmatpush1.msra.mxu0 0.0
  %2127 = vmatprep.subr.mxu0 0.0
  %2128 = vmatpush1.msra.mxu0 0.0
  %2129 = vmatprep.subr.mxu0 0.0
  %2130 = vmatpush1.msra.mxu0 0.0
  %2131 = vmatprep.subr.mxu0 0.0
  %2132 = vmatpush1.msra.mxu0 0.0
  %2133 = vmatprep.subr.mxu0 0.0
  %2134 = vmatpush1.msra.mxu0 0.0
  %2135 = vmatprep.subr.mxu0 0.0
  %2136 = vmatpush1.msra.mxu0 0.0
  %2137 = vmatprep.subr.mxu0 0.0
  %2138 = vmatpush1.msra.mxu0 0.0
  %2139 = vmatprep.subr.mxu0 0.0
  %2140 = vmatpush1.msra.mxu0 0.0
  %2141 = vmatprep.subr.mxu0 0.0
  %2142 = vmatpush1.msra.mxu0 0.0
  %2143 = vmatprep.subr.mxu0 0.0
  %2144 = vmatpush1.msra.mxu0 0.0
  %2145 = vmatprep.subr.mxu0 0.0
  %2146 = vmatpush1.msra.mxu0 0.0
  %2147 = vmatprep.subr.mxu0 0.0
  %2148 = vmatpush1.msra.mxu0 0.0
  %2149 = vmatprep.subr.mxu0 0.0
  %2150 = vmatpush1.msra.mxu0 0.0
  %2151 = vmatprep.subr.mxu0 0.0
  %2152 = vmatpush1.msra.mxu0 0.0
  %2153 = vmatprep.subr.mxu0 0.0
  %2154 = vmatpush1.msra.mxu0 0.0
  %2155 = vmatprep.subr.mxu0 0.0
  %2156 = vmatpush1.msra.mxu0 0.0
  %2157 = vmatprep.subr.mxu0 0.0
  %2158 = vmatpush1.msra.mxu0 0.0
  %2159 = vmatprep.subr.mxu0 0.0
  %2160 = vmatpush1.msra.mxu0 0.0
  %2161 = vmatprep.subr.mxu0 0.0
  %2162 = vmatpush1.msra.mxu0 0.0
  %2163 = vmatprep.mubr.f32.mxu0 0.0
  %2164 = vmatmul.mubr.f32.gmra.mrb[0].mxu0 %v2002
  %v2165 = vpop.f32.mrb[0].mxu0
  %v2166 = vadd.f32 0.0, %v2165
  %v2167 = vpop.f32.mrb[0].mxu0
  %2168 = vdwg.mxu0
  %v2169 = vadd.f32 %v189, %v2166
  %v2170 = vxor.u32 %v2169, 2147483648
  %v2171 = vmul.f32 %v2170, 1.442695
  %v2172 = vpow.pop %v2171
  %v2173 = vadd.f32 %v2172, 1.0
  %v2174 = vrcp.pop %v2173
  %v2175 = vmul.f32 1.0, %v2174
  %v2176 = vtanh.pop %v2169
  %v2177 = vmul.f32 %v2175, %v1917
  %2179 = vrot.lane.b32.xlu0 %v2176, 64
  %v2180 = vpop.permute.xlu0 %2179
  %v2182 = vmul.f32 %v2175, %v2180
  %2184 = vrot.lane.b32.xlu0 %v2182, 32
  %v2185 = vpop.permute.xlu0 %2184
  %v2187 = vadd.f32 %v2177, %v2185
  %v2188 = vtanh.pop %v2187
  %2190 = vrot.lane.b32.xlu0 %v2188, 64
  %v2191 = vpop.permute.xlu0 %2190
  %v2193 = vmul.f32 %v2175, %v2191
  %2195 = vrot.lane.b32.xlu0 %v2098, 32
  %v2196 = vpop.permute.xlu0 %2195
  %v2197 = vsel %vm196, %v2196, 0
  %2199 = vmatprep.subr.mxu0 0.0
  %2200 = vmatpush1.msra.mxu0 %v299
  %2201 = vmatprep.subr.mxu0 0.0
  %2202 = vmatpush1.msra.mxu0 %v300
  %2203 = vmatprep.subr.mxu0 0.0
  %2204 = vmatpush1.msra.mxu0 %v301
  %2205 = vmatprep.subr.mxu0 0.0
  %2206 = vmatpush1.msra.mxu0 %v302
  %2207 = vmatprep.subr.mxu0 0.0
  %2208 = vmatpush1.msra.mxu0 0.0
  %2209 = vmatprep.subr.mxu0 0.0
  %2210 = vmatpush1.msra.mxu0 0.0
  %2211 = vmatprep.subr.mxu0 0.0
  %2212 = vmatpush1.msra.mxu0 0.0
  %2213 = vmatprep.subr.mxu0 0.0
  %2214 = vmatpush1.msra.mxu0 0.0
  %2215 = vmatprep.subr.mxu0 0.0
  %2216 = vmatpush1.msra.mxu0 0.0
  %2217 = vmatprep.subr.mxu0 0.0
  %2218 = vmatpush1.msra.mxu0 0.0
  %2219 = vmatprep.subr.mxu0 0.0
  %2220 = vmatpush1.msra.mxu0 0.0
  %2221 = vmatprep.subr.mxu0 0.0
  %2222 = vmatpush1.msra.mxu0 0.0
  %2223 = vmatprep.subr.mxu0 0.0
  %2224 = vmatpush1.msra.mxu0 0.0
  %2225 = vmatprep.subr.mxu0 0.0
  %2226 = vmatpush1.msra.mxu0 0.0
  %2227 = vmatprep.subr.mxu0 0.0
  %2228 = vmatpush1.msra.mxu0 0.0
  %2229 = vmatprep.subr.mxu0 0.0
  %2230 = vmatpush1.msra.mxu0 0.0
  %2231 = vmatprep.subr.mxu0 0.0
  %2232 = vmatpush1.msra.mxu0 0.0
  %2233 = vmatprep.subr.mxu0 0.0
  %2234 = vmatpush1.msra.mxu0 0.0
  %2235 = vmatprep.subr.mxu0 0.0
  %2236 = vmatpush1.msra.mxu0 0.0
  %2237 = vmatprep.subr.mxu0 0.0
  %2238 = vmatpush1.msra.mxu0 0.0
  %2239 = vmatprep.subr.mxu0 0.0
  %2240 = vmatpush1.msra.mxu0 0.0
  %2241 = vmatprep.subr.mxu0 0.0
  %2242 = vmatpush1.msra.mxu0 0.0
  %2243 = vmatprep.subr.mxu0 0.0
  %2244 = vmatpush1.msra.mxu0 0.0
  %2245 = vmatprep.subr.mxu0 0.0
  %2246 = vmatpush1.msra.mxu0 0.0
  %2247 = vmatprep.subr.mxu0 0.0
  %2248 = vmatpush1.msra.mxu0 0.0
  %2249 = vmatprep.subr.mxu0 0.0
  %2250 = vmatpush1.msra.mxu0 0.0
  %2251 = vmatprep.subr.mxu0 0.0
  %2252 = vmatpush1.msra.mxu0 0.0
  %2253 = vmatprep.subr.mxu0 0.0
  %2254 = vmatpush1.msra.mxu0 0.0
  %2255 = vmatprep.subr.mxu0 0.0
  %2256 = vmatpush1.msra.mxu0 0.0
  %2257 = vmatprep.subr.mxu0 0.0
  %2258 = vmatpush1.msra.mxu0 0.0
  %2259 = vmatprep.subr.mxu0 0.0
  %2260 = vmatpush1.msra.mxu0 0.0
  %2261 = vmatprep.subr.mxu0 0.0
  %2262 = vmatpush1.msra.mxu0 0.0
  %2263 = vmatprep.mubr.f32.mxu0 0.0
  %2264 = vmatmul.mubr.f32.gmra.mrb[0].mxu0 %v2197
  %v2265 = vpop.f32.mrb[0].mxu0
  %v2266 = vadd.f32 0.0, %v2265
  %v2267 = vpop.f32.mrb[0].mxu0
  %2268 = vdwg.mxu0
  %2270 = vrot.lane.b32.xlu0 %v2193, 32
  %v2271 = vpop.permute.xlu0 %2270
  %v2272 = vsel %vm196, %v2271, 0
  %2274 = vmatprep.subr.mxu0 0.0
  %2275 = vmatpush1.msra.mxu0 %v295
  %2276 = vmatprep.subr.mxu0 0.0
  %2277 = vmatpush1.msra.mxu0 %v296
  %2278 = vmatprep.subr.mxu0 0.0
  %2279 = vmatpush1.msra.mxu0 %v297
  %2280 = vmatprep.subr.mxu0 0.0
  %2281 = vmatpush1.msra.mxu0 %v298
  %2282 = vmatprep.subr.mxu0 0.0
  %2283 = vmatpush1.msra.mxu0 0.0
  %2284 = vmatprep.subr.mxu0 0.0
  %2285 = vmatpush1.msra.mxu0 0.0
  %2286 = vmatprep.subr.mxu0 0.0
  %2287 = vmatpush1.msra.mxu0 0.0
  %2288 = vmatprep.subr.mxu0 0.0
  %2289 = vmatpush1.msra.mxu0 0.0
  %2290 = vmatprep.subr.mxu0 0.0
  %2291 = vmatpush1.msra.mxu0 0.0
  %2292 = vmatprep.subr.mxu0 0.0
  %2293 = vmatpush1.msra.mxu0 0.0
  %2294 = vmatprep.subr.mxu0 0.0
  %2295 = vmatpush1.msra.mxu0 0.0
  %2296 = vmatprep.subr.mxu0 0.0
  %2297 = vmatpush1.msra.mxu0 0.0
  %2298 = vmatprep.subr.mxu0 0.0
  %2299 = vmatpush1.msra.mxu0 0.0
  %2300 = vmatprep.subr.mxu0 0.0
  %2301 = vmatpush1.msra.mxu0 0.0
  %2302 = vmatprep.subr.mxu0 0.0
  %2303 = vmatpush1.msra.mxu0 0.0
  %2304 = vmatprep.subr.mxu0 0.0
  %2305 = vmatpush1.msra.mxu0 0.0
  %2306 = vmatprep.subr.mxu0 0.0
  %2307 = vmatpush1.msra.mxu0 0.0
  %2308 = vmatprep.subr.mxu0 0.0
  %2309 = vmatpush1.msra.mxu0 0.0
  %2310 = vmatprep.subr.mxu0 0.0
  %2311 = vmatpush1.msra.mxu0 0.0
  %2312 = vmatprep.subr.mxu0 0.0
  %2313 = vmatpush1.msra.mxu0 0.0
  %2314 = vmatprep.subr.mxu0 0.0
  %2315 = vmatpush1.msra.mxu0 0.0
  %2316 = vmatprep.subr.mxu0 0.0
  %2317 = vmatpush1.msra.mxu0 0.0
  %2318 = vmatprep.subr.mxu0 0.0
  %2319 = vmatpush1.msra.mxu0 0.0
  %2320 = vmatprep.subr.mxu0 0.0
  %2321 = vmatpush1.msra.mxu0 0.0
  %2322 = vmatprep.subr.mxu0 0.0
  %2323 = vmatpush1.msra.mxu0 0.0
  %2324 = vmatprep.subr.mxu0 0.0
  %2325 = vmatpush1.msra.mxu0 0.0
  %2326 = vmatprep.subr.mxu0 0.0
  %2327 = vmatpush1.msra.mxu0 0.0
  %2328 = vmatprep.subr.mxu0 0.0
  %2329 = vmatpush1.msra.mxu0 0.0
  %2330 = vmatprep.subr.mxu0 0.0
  %2331 = vmatpush1.msra.mxu0 0.0
  %2332 = vmatprep.subr.mxu0 0.0
  %2333 = vmatpush1.msra.mxu0 0.0
  %2334 = vmatprep.subr.mxu0 0.0
  %2335 = vmatpush1.msra.mxu0 0.0
  %2336 = vmatprep.subr.mxu0 0.0
  %2337 = vmatpush1.msra.mxu0 0.0
  %2338 = vmatprep.mubr.f32.mxu0 0.0
  %2339 = vmatmul.mubr.f32.gmra.mrb[0].mxu0 %v2272
  %v2340 = vpop.f32.mrb[0].mxu0
  %v2341 = vadd.f32 %v2266, %v2340
  %v2342 = vpop.f32.mrb[0].mxu0
  %2343 = vdwg.mxu0
  %v2344 = vadd.f32 %v2341, %v452
  %v2345 = vxor.u32 %v2344, 2147483648
  %v2346 = vmul.f32 %v2345, 1.442695
  %v2347 = vpow.pop %v2346
  %v2348 = vadd.f32 %v2347, 1.0
  %v2349 = vrcp.pop %v2348
  %v2350 = vmul.f32 1.0, %v2349
  %v2351 = vtanh.pop %v2344
  %v2352 = vmul.f32 %v2350, %v2092
  %2354 = vrot.lane.b32.xlu0 %v2351, 64
  %v2355 = vpop.permute.xlu0 %2354
  %v2357 = vmul.f32 %v2350, %v2355
  %2359 = vrot.lane.b32.xlu0 %v2357, 32
  %v2360 = vpop.permute.xlu0 %2359
  %v2362 = vadd.f32 %v2352, %v2360
  %v2363 = vtanh.pop %v2362
  %2365 = vrot.lane.b32.xlu0 %v2363, 64
  %v2366 = vpop.permute.xlu0 %2365
  %v2368 = vmul.f32 %v2350, %v2366
  %v2369 = vld [vmem:[%s7] sm:$0xff]
  %v2370 = vld [vmem:[%s7 + $0x8] sm:$0xff]
  %v2371 = vld [vmem:[%s7 + $0x10] sm:$0xff]
  %v2372 = vld [vmem:[%s7 + $0x18] sm:$0xff]
  %v2373 = vld [vmem:[%s8] sm:$0x1]
  %v2375 = vlaneseq
  %v2376 = vshrl.u32 %v2375, 7
  %v2377 = vsub.s32 0, %v2376
  %v2378 = vrot.slane %v2373, %v2377
  %2381 = vrot.lane.b32.xlu0 %v2368, 32
  %v2382 = vpop.permute.xlu0 %2381
  %v2383 = vsel %vm196, %v2382, 0
  %2385 = vmatprep.subr.mxu0 0.0
  %2386 = vmatpush1.msra.mxu0 %v2369
  %2387 = vmatprep.subr.mxu0 0.0
  %2388 = vmatpush1.msra.mxu0 %v2370
  %2389 = vmatprep.subr.mxu0 0.0
  %2390 = vmatpush1.msra.mxu0 %v2371
  %2391 = vmatprep.subr.mxu0 0.0
  %2392 = vmatpush1.msra.mxu0 %v2372
  %2393 = vmatprep.subr.mxu0 0.0
  %2394 = vmatpush1.msra.mxu0 0.0
  %2395 = vmatprep.subr.mxu0 0.0
  %2396 = vmatpush1.msra.mxu0 0.0
  %2397 = vmatprep.subr.mxu0 0.0
  %2398 = vmatpush1.msra.mxu0 0.0
  %2399 = vmatprep.subr.mxu0 0.0
  %2400 = vmatpush1.msra.mxu0 0.0
  %2401 = vmatprep.subr.mxu0 0.0
  %2402 = vmatpush1.msra.mxu0 0.0
  %2403 = vmatprep.subr.mxu0 0.0
  %2404 = vmatpush1.msra.mxu0 0.0
  %2405 = vmatprep.subr.mxu0 0.0
  %2406 = vmatpush1.msra.mxu0 0.0
  %2407 = vmatprep.subr.mxu0 0.0
  %2408 = vmatpush1.msra.mxu0 0.0
  %2409 = vmatprep.subr.mxu0 0.0
  %2410 = vmatpush1.msra.mxu0 0.0
  %2411 = vmatprep.subr.mxu0 0.0
  %2412 = vmatpush1.msra.mxu0 0.0
  %2413 = vmatprep.subr.mxu0 0.0
  %2414 = vmatpush1.msra.mxu0 0.0
  %2415 = vmatprep.subr.mxu0 0.0
  %2416 = vmatpush1.msra.mxu0 0.0
  %2417 = vmatprep.subr.mxu0 0.0
  %2418 = vmatpush1.msra.mxu0 0.0
  %2419 = vmatprep.subr.mxu0 0.0
  %2420 = vmatpush1.msra.mxu0 0.0
  %2421 = vmatprep.subr.mxu0 0.0
  %2422 = vmatpush1.msra.mxu0 0.0
  %2423 = vmatprep.subr.mxu0 0.0
  %2424 = vmatpush1.msra.mxu0 0.0
  %2425 = vmatprep.subr.mxu0 0.0
  %2426 = vmatpush1.msra.mxu0 0.0
  %2427 = vmatprep.subr.mxu0 0.0
  %2428 = vmatpush1.msra.mxu0 0.0
  %2429 = vmatprep.subr.mxu0 0.0
  %2430 = vmatpush1.msra.mxu0 0.0
  %2431 = vmatprep.subr.mxu0 0.0
  %2432 = vmatpush1.msra.mxu0 0.0
  %2433 = vmatprep.subr.mxu0 0.0
  %2434 = vmatpush1.msra.mxu0 0.0
  %2435 = vmatprep.subr.mxu0 0.0
  %2436 = vmatpush1.msra.mxu0 0.0
  %2437 = vmatprep.subr.mxu0 0.0
  %2438 = vmatpush1.msra.mxu0 0.0
  %2439 = vmatprep.subr.mxu0 0.0
  %2440 = vmatpush1.msra.mxu0 0.0
  %2441 = vmatprep.subr.mxu0 0.0
  %2442 = vmatpush1.msra.mxu0 0.0
  %2443 = vmatprep.subr.mxu0 0.0
  %2444 = vmatpush1.msra.mxu0 0.0
  %2445 = vmatprep.subr.mxu0 0.0
  %2446 = vmatpush1.msra.mxu0 0.0
  %2447 = vmatprep.subr.mxu0 0.0
  %2448 = vmatpush1.msra.mxu0 0.0
  %2449 = vmatprep.mubr.f32.mxu0 0.0
  %2450 = vmatmul.mubr.f32.gmra.mrb[0].mxu0 %v577
  %v2451 = vpop.f32.mrb[0].mxu0
  %v2452 = vadd.f32 %v2378, %v2451
  %v2453 = vpop.f32.mrb[0].mxu0
  %2454 = vmatprep.mubr.f32.mxu0 0.0
  %2455 = vmatmul.mubr.f32.gmra.mrb[0].mxu0 %v847
  %v2456 = vpop.f32.mrb[0].mxu0
  %v2457 = vadd.f32 %v2378, %v2456
  %v2458 = vpop.f32.mrb[0].mxu0
  %2459 = vmatprep.mubr.f32.mxu0 0.0
  %2460 = vmatmul.mubr.f32.gmra.mrb[0].mxu0 %v1117
  %v2461 = vpop.f32.mrb[0].mxu0
  %v2462 = vadd.f32 %v2378, %v2461
  %v2463 = vpop.f32.mrb[0].mxu0
  %2464 = vmatprep.mubr.f32.mxu0 0.0
  %2465 = vmatmul.mubr.f32.gmra.mrb[0].mxu0 %v1387
  %v2466 = vpop.f32.mrb[0].mxu0
  %v2467 = vadd.f32 %v2378, %v2466
  %v2468 = vpop.f32.mrb[0].mxu0
  %2469 = vmatprep.mubr.f32.mxu0 0.0
  %2470 = vmatmul.mubr.f32.gmra.mrb[0].mxu0 %v1657
  %v2471 = vpop.f32.mrb[0].mxu0
  %v2472 = vadd.f32 %v2378, %v2471
  %v2473 = vpop.f32.mrb[0].mxu0
  %2474 = vmatprep.mubr.f32.mxu0 0.0
  %2475 = vmatmul.mubr.f32.gmra.mrb[0].mxu0 %v1927
  %v2476 = vpop.f32.mrb[0].mxu0
  %v2477 = vadd.f32 %v2378, %v2476
  %v2478 = vpop.f32.mrb[0].mxu0
  %2479 = vmatprep.mubr.f32.mxu0 0.0
  %2480 = vmatmul.mubr.f32.gmra.mrb[0].mxu0 %v2197
  %v2481 = vpop.f32.mrb[0].mxu0
  %v2482 = vadd.f32 %v2378, %v2481
  %v2483 = vpop.f32.mrb[0].mxu0
  %2484 = vmatprep.mubr.f32.mxu0 0.0
  %2485 = vmatmul.mubr.f32.gmra.mrb[0].mxu0 %v2383
  %v2486 = vpop.f32.mrb[0].mxu0
  %v2487 = vadd.f32 %v2378, %v2486
  %v2488 = vpop.f32.mrb[0].mxu0
  %2489 = vdwg.mxu0
  %v2490 = vmax.f32 %v2452, 0.0
  %v2491 = vmax.f32 %v2457, 0.0
  %v2492 = vmax.f32 %v2462, 0.0
  %v2493 = vmax.f32 %v2467, 0.0
  %v2494 = vmax.f32 %v2472, 0.0
  %v2495 = vmax.f32 %v2477, 0.0
  %v2496 = vmax.f32 %v2482, 0.0
  %v2497 = vmax.f32 %v2487, 0.0
  %v2498 = vld [vmem:[%s9] sm:$0xff]
  %v2499 = vld [vmem:[%s9 + $0x8] sm:$0xff]
  %v2500 = vld [vmem:[%s10] sm:$0x1]
  %v2502 = vlaneseq
  %v2503 = vshrl.u32 %v2502, 7
  %v2504 = vsub.s32 0, %v2503
  %v2505 = vrot.slane %v2500, %v2504
  %v2508 = vsel %vm62, %v2490, 0
  %v2511 = vsel %vm62, %v2491, 0
  %v2514 = vsel %vm62, %v2492, 0
  %v2517 = vsel %vm62, %v2493, 0
  %v2520 = vsel %vm62, %v2494, 0
  %v2523 = vsel %vm62, %v2495, 0
  %v2526 = vsel %vm62, %v2496, 0
  %v2529 = vsel %vm62, %v2497, 0
  %2531 = vmatprep.subr.mxu0 0.0
  %2532 = vmatpush1.msra.mxu0 %v2498
  %2533 = vmatprep.subr.mxu0 0.0
  %2534 = vmatpush1.msra.mxu0 %v2499
  %2535 = vmatprep.subr.mxu0 0.0
  %2536 = vmatpush1.msra.mxu0 0.0
  %2537 = vmatprep.subr.mxu0 0.0
  %2538 = vmatpush1.msra.mxu0 0.0
  %2539 = vmatprep.subr.mxu0 0.0
  %2540 = vmatpush1.msra.mxu0 0.0
  %2541 = vmatprep.subr.mxu0 0.0
  %2542 = vmatpush1.msra.mxu0 0.0
  %2543 = vmatprep.subr.mxu0 0.0
  %2544 = vmatpush1.msra.mxu0 0.0
  %2545 = vmatprep.subr.mxu0 0.0
  %2546 = vmatpush1.msra.mxu0 0.0
  %2547 = vmatprep.subr.mxu0 0.0
  %2548 = vmatpush1.msra.mxu0 0.0
  %2549 = vmatprep.subr.mxu0 0.0
  %2550 = vmatpush1.msra.mxu0 0.0
  %2551 = vmatprep.subr.mxu0 0.0
  %2552 = vmatpush1.msra.mxu0 0.0
  %2553 = vmatprep.subr.mxu0 0.0
  %2554 = vmatpush1.msra.mxu0 0.0
  %2555 = vmatprep.subr.mxu0 0.0
  %2556 = vmatpush1.msra.mxu0 0.0
  %2557 = vmatprep.subr.mxu0 0.0
  %2558 = vmatpush1.msra.mxu0 0.0
  %2559 = vmatprep.subr.mxu0 0.0
  %2560 = vmatpush1.msra.mxu0 0.0
  %2561 = vmatprep.subr.mxu0 0.0
  %2562 = vmatpush1.msra.mxu0 0.0
  %2563 = vmatprep.subr.mxu0 0.0
  %2564 = vmatpush1.msra.mxu0 0.0
  %2565 = vmatprep.subr.mxu0 0.0
  %2566 = vmatpush1.msra.mxu0 0.0
  %2567 = vmatprep.subr.mxu0 0.0
  %2568 = vmatpush1.msra.mxu0 0.0
  %2569 = vmatprep.subr.mxu0 0.0
  %2570 = vmatpush1.msra.mxu0 0.0
  %2571 = vmatprep.subr.mxu0 0.0
  %2572 = vmatpush1.msra.mxu0 0.0
  %2573 = vmatprep.subr.mxu0 0.0
  %2574 = vmatpush1.msra.mxu0 0.0
  %2575 = vmatprep.subr.mxu0 0.0
  %2576 = vmatpush1.msra.mxu0 0.0
  %2577 = vmatprep.subr.mxu0 0.0
  %2578 = vmatpush1.msra.mxu0 0.0
  %2579 = vmatprep.subr.mxu0 0.0
  %2580 = vmatpush1.msra.mxu0 0.0
  %2581 = vmatprep.subr.mxu0 0.0
  %2582 = vmatpush1.msra.mxu0 0.0
  %2583 = vmatprep.subr.mxu0 0.0
  %2584 = vmatpush1.msra.mxu0 0.0
  %2585 = vmatprep.subr.mxu0 0.0
  %2586 = vmatpush1.msra.mxu0 0.0
  %2587 = vmatprep.subr.mxu0 0.0
  %2588 = vmatpush1.msra.mxu0 0.0
  %2589 = vmatprep.subr.mxu0 0.0
  %2590 = vmatpush1.msra.mxu0 0.0
  %2591 = vmatprep.subr.mxu0 0.0
  %2592 = vmatpush1.msra.mxu0 0.0
  %2593 = vmatprep.subr.mxu0 0.0
  %2594 = vmatpush1.msra.mxu0 0.0
  %2595 = vmatprep.mubr.f32.mxu0 0.0
  %2596 = vmatmul.mubr.f32.gmra.mrb[0].mxu0 %v2508
  %v2597 = vpop.f32.mrb[0].mxu0
  %v2598 = vadd.f32 %v2505, %v2597
  %v2599 = vpop.f32.mrb[0].mxu0
  %2600 = vmatprep.mubr.f32.mxu0 0.0
  %2601 = vmatmul.mubr.f32.gmra.mrb[0].mxu0 %v2511
  %v2602 = vpop.f32.mrb[0].mxu0
  %v2603 = vadd.f32 %v2505, %v2602
  %v2604 = vpop.f32.mrb[0].mxu0
  %2605 = vmatprep.mubr.f32.mxu0 0.0
  %2606 = vmatmul.mubr.f32.gmra.mrb[0].mxu0 %v2514
  %v2607 = vpop.f32.mrb[0].mxu0
  %v2608 = vadd.f32 %v2505, %v2607
  %v2609 = vpop.f32.mrb[0].mxu0
  %2610 = vmatprep.mubr.f32.mxu0 0.0
  %2611 = vmatmul.mubr.f32.gmra.mrb[0].mxu0 %v2517
  %v2612 = vpop.f32.mrb[0].mxu0
  %v2613 = vadd.f32 %v2505, %v2612
  %v2614 = vpop.f32.mrb[0].mxu0
  %2615 = vmatprep.mubr.f32.mxu0 0.0
  %2616 = vmatmul.mubr.f32.gmra.mrb[0].mxu0 %v2520
  %v2617 = vpop.f32.mrb[0].mxu0
  %v2618 = vadd.f32 %v2505, %v2617
  %v2619 = vpop.f32.mrb[0].mxu0
  %2620 = vmatprep.mubr.f32.mxu0 0.0
  %2621 = vmatmul.mubr.f32.gmra.mrb[0].mxu0 %v2523
  %v2622 = vpop.f32.mrb[0].mxu0
  %v2623 = vadd.f32 %v2505, %v2622
  %v2624 = vpop.f32.mrb[0].mxu0
  %2625 = vmatprep.mubr.f32.mxu0 0.0
  %2626 = vmatmul.mubr.f32.gmra.mrb[0].mxu0 %v2526
  %v2627 = vpop.f32.mrb[0].mxu0
  %v2628 = vadd.f32 %v2505, %v2627
  %v2629 = vpop.f32.mrb[0].mxu0
  %2630 = vmatprep.mubr.f32.mxu0 0.0
  %2631 = vmatmul.mubr.f32.gmra.mrb[0].mxu0 %v2529
  %v2632 = vpop.f32.mrb[0].mxu0
  %v2633 = vadd.f32 %v2505, %v2632
  %v2634 = vpop.f32.mrb[0].mxu0
  %2635 = vdwg.mxu0
  %v2636 = vmax.f32 %v2598, 0.0
  %v2637 = vmax.f32 %v2603, 0.0
  %v2638 = vmax.f32 %v2608, 0.0
  %v2639 = vmax.f32 %v2613, 0.0
  %v2640 = vmax.f32 %v2618, 0.0
  %v2641 = vmax.f32 %v2623, 0.0
  %v2642 = vmax.f32 %v2628, 0.0
  %v2643 = vmax.f32 %v2633, 0.0
  %v2644 = vld [vmem:[%s11] sm:$0xff]
  %v2645 = vld [vmem:[%s12] sm:$0x1]
  %v2647 = vlaneseq
  %v2648 = vshrl.u32 %v2647, 7
  %v2649 = vsub.s32 0, %v2648
  %v2650 = vrot.slane %v2645, %v2649
  %vm2652 = vcmask 64512
  %v2654 = vsel %vm2652, %v2636, 0
  %v2657 = vsel %vm2652, %v2637, 0
  %v2660 = vsel %vm2652, %v2638, 0
  %v2663 = vsel %vm2652, %v2639, 0
  %v2666 = vsel %vm2652, %v2640, 0
  %v2669 = vsel %vm2652, %v2641, 0
  %v2672 = vsel %vm2652, %v2642, 0
  %v2675 = vsel %vm2652, %v2643, 0
  %2677 = vmatprep.subr.mxu0 0.0
  %2678 = vmatpush1.msra.mxu0 %v2644
  %2679 = vmatprep.subr.mxu0 0.0
  %2680 = vmatpush1.msra.mxu0 0.0
  %2681 = vmatprep.subr.mxu0 0.0
  %2682 = vmatpush1.msra.mxu0 0.0
  %2683 = vmatprep.subr.mxu0 0.0
  %2684 = vmatpush1.msra.mxu0 0.0
  %2685 = vmatprep.subr.mxu0 0.0
  %2686 = vmatpush1.msra.mxu0 0.0
  %2687 = vmatprep.subr.mxu0 0.0
  %2688 = vmatpush1.msra.mxu0 0.0
  %2689 = vmatprep.subr.mxu0 0.0
  %2690 = vmatpush1.msra.mxu0 0.0
  %2691 = vmatprep.subr.mxu0 0.0
  %2692 = vmatpush1.msra.mxu0 0.0
  %2693 = vmatprep.subr.mxu0 0.0
  %2694 = vmatpush1.msra.mxu0 0.0
  %2695 = vmatprep.subr.mxu0 0.0
  %2696 = vmatpush1.msra.mxu0 0.0
  %2697 = vmatprep.subr.mxu0 0.0
  %2698 = vmatpush1.msra.mxu0 0.0
  %2699 = vmatprep.subr.mxu0 0.0
  %2700 = vmatpush1.msra.mxu0 0.0
  %2701 = vmatprep.subr.mxu0 0.0
  %2702 = vmatpush1.msra.mxu0 0.0
  %2703 = vmatprep.subr.mxu0 0.0
  %2704 = vmatpush1.msra.mxu0 0.0
  %2705 = vmatprep.subr.mxu0 0.0
  %2706 = vmatpush1.msra.mxu0 0.0
  %2707 = vmatprep.subr.mxu0 0.0
  %2708 = vmatpush1.msra.mxu0 0.0
  %2709 = vmatprep.subr.mxu0 0.0
  %2710 = vmatpush1.msra.mxu0 0.0
  %2711 = vmatprep.subr.mxu0 0.0
  %2712 = vmatpush1.msra.mxu0 0.0
  %2713 = vmatprep.subr.mxu0 0.0
  %2714 = vmatpush1.msra.mxu0 0.0
  %2715 = vmatprep.subr.mxu0 0.0
  %2716 = vmatpush1.msra.mxu0 0.0
  %2717 = vmatprep.subr.mxu0 0.0
  %2718 = vmatpush1.msra.mxu0 0.0
  %2719 = vmatprep.subr.mxu0 0.0
  %2720 = vmatpush1.msra.mxu0 0.0
  %2721 = vmatprep.subr.mxu0 0.0
  %2722 = vmatpush1.msra.mxu0 0.0
  %2723 = vmatprep.subr.mxu0 0.0
  %2724 = vmatpush1.msra.mxu0 0.0
  %2725 = vmatprep.subr.mxu0 0.0
  %2726 = vmatpush1.msra.mxu0 0.0
  %2727 = vmatprep.subr.mxu0 0.0
  %2728 = vmatpush1.msra.mxu0 0.0
  %2729 = vmatprep.subr.mxu0 0.0
  %2730 = vmatpush1.msra.mxu0 0.0
  %2731 = vmatprep.subr.mxu0 0.0
  %2732 = vmatpush1.msra.mxu0 0.0
  %2733 = vmatprep.subr.mxu0 0.0
  %2734 = vmatpush1.msra.mxu0 0.0
  %2735 = vmatprep.subr.mxu0 0.0
  %2736 = vmatpush1.msra.mxu0 0.0
  %2737 = vmatprep.subr.mxu0 0.0
  %2738 = vmatpush1.msra.mxu0 0.0
  %2739 = vmatprep.subr.mxu0 0.0
  %2740 = vmatpush1.msra.mxu0 0.0
  %2741 = vmatprep.mubr.f32.mxu0 0.0
  %2742 = vmatmul.mubr.f32.gmra.mrb[0].mxu0 %v2654
  %v2743 = vpop.f32.mrb[0].mxu0
  %v2744 = vadd.f32 %v2650, %v2743
  %v2745 = vpop.f32.mrb[0].mxu0
  %2746 = vmatprep.mubr.f32.mxu0 0.0
  %2747 = vmatmul.mubr.f32.gmra.mrb[0].mxu0 %v2657
  %v2748 = vpop.f32.mrb[0].mxu0
  %v2749 = vadd.f32 %v2650, %v2748
  %v2750 = vpop.f32.mrb[0].mxu0
  %2751 = vmatprep.mubr.f32.mxu0 0.0
  %2752 = vmatmul.mubr.f32.gmra.mrb[0].mxu0 %v2660
  %v2753 = vpop.f32.mrb[0].mxu0
  %v2754 = vadd.f32 %v2650, %v2753
  %v2755 = vpop.f32.mrb[0].mxu0
  %2756 = vmatprep.mubr.f32.mxu0 0.0
  %2757 = vmatmul.mubr.f32.gmra.mrb[0].mxu0 %v2663
  %v2758 = vpop.f32.mrb[0].mxu0
  %v2759 = vadd.f32 %v2650, %v2758
  %v2760 = vpop.f32.mrb[0].mxu0
  %2761 = vmatprep.mubr.f32.mxu0 0.0
  %2762 = vmatmul.mubr.f32.gmra.mrb[0].mxu0 %v2666
  %v2763 = vpop.f32.mrb[0].mxu0
  %v2764 = vadd.f32 %v2650, %v2763
  %v2765 = vpop.f32.mrb[0].mxu0
  %2766 = vmatprep.mubr.f32.mxu0 0.0
  %2767 = vmatmul.mubr.f32.gmra.mrb[0].mxu0 %v2669
  %v2768 = vpop.f32.mrb[0].mxu0
  %v2769 = vadd.f32 %v2650, %v2768
  %v2770 = vpop.f32.mrb[0].mxu0
  %2771 = vmatprep.mubr.f32.mxu0 0.0
  %2772 = vmatmul.mubr.f32.gmra.mrb[0].mxu0 %v2672
  %v2773 = vpop.f32.mrb[0].mxu0
  %v2774 = vadd.f32 %v2650, %v2773
  %v2775 = vpop.f32.mrb[0].mxu0
  %2776 = vmatprep.mubr.f32.mxu0 0.0
  %2777 = vmatmul.mubr.f32.gmra.mrb[0].mxu0 %v2675
  %v2778 = vpop.f32.mrb[0].mxu0
  %v2779 = vadd.f32 %v2650, %v2778
  %v2780 = vpop.f32.mrb[0].mxu0
  %2781 = vdwg.mxu0
  %vm2782 = vcmask 31744
  %v2783 = vsel %vm2782, %v2744, -inf
  %2784 = vmax.xlane.f32.xlu0 %v2783
  %v2785 = vpop.xlane.xlu0 %2784
  %v2786 = vsel %vm2782, %v2749, -inf
  %2787 = vmax.xlane.f32.xlu0 %v2786
  %v2788 = vpop.xlane.xlu0 %2787
  %v2789 = vsel %vm2782, %v2754, -inf
  %2790 = vmax.xlane.f32.xlu0 %v2789
  %v2791 = vpop.xlane.xlu0 %2790
  %v2792 = vsel %vm2782, %v2759, -inf
  %2793 = vmax.xlane.f32.xlu0 %v2792
  %v2794 = vpop.xlane.xlu0 %2793
  %v2795 = vsel %vm2782, %v2764, -inf
  %2796 = vmax.xlane.f32.xlu0 %v2795
  %v2797 = vpop.xlane.xlu0 %2796
  %v2798 = vsel %vm2782, %v2769, -inf
  %2799 = vmax.xlane.f32.xlu0 %v2798
  %v2800 = vpop.xlane.xlu0 %2799
  %v2801 = vsel %vm2782, %v2774, -inf
  %2802 = vmax.xlane.f32.xlu0 %v2801
  %v2803 = vpop.xlane.xlu0 %2802
  %v2804 = vsel %vm2782, %v2779, -inf
  %2805 = vmax.xlane.f32.xlu0 %v2804
  %v2806 = vpop.xlane.xlu0 %2805
  %v2807 = vsub.f32 %v2744, %v2785
  %v2808 = vsub.f32 %v2749, %v2788
  %v2809 = vsub.f32 %v2754, %v2791
  %v2810 = vsub.f32 %v2759, %v2794
  %v2811 = vsub.f32 %v2764, %v2797
  %v2812 = vsub.f32 %v2769, %v2800
  %v2813 = vsub.f32 %v2774, %v2803
  %v2814 = vsub.f32 %v2779, %v2806
  %v2815 = vmul.f32 %v2807, 1.442695
  %v2816 = vpow.pop %v2815
  %v2817 = vmul.f32 %v2808, 1.442695
  %v2818 = vpow.pop %v2817
  %v2819 = vmul.f32 %v2809, 1.442695
  %v2820 = vpow.pop %v2819
  %v2821 = vmul.f32 %v2810, 1.442695
  %v2822 = vpow.pop %v2821
  %v2823 = vmul.f32 %v2811, 1.442695
  %v2824 = vpow.pop %v2823
  %v2825 = vmul.f32 %v2812, 1.442695
  %v2826 = vpow.pop %v2825
  %v2827 = vmul.f32 %v2813, 1.442695
  %v2828 = vpow.pop %v2827
  %v2829 = vmul.f32 %v2814, 1.442695
  %v2830 = vpow.pop %v2829
  %v2831 = vsel %vm2782, %v2816, 0.0
  %2832 = vadd.xlane.f32.xlu0 %v2831
  %v2833 = vpop.xlane.xlu0 %2832
  %v2834 = vsel %vm2782, %v2818, 0.0
  %2835 = vadd.xlane.f32.xlu0 %v2834
  %v2836 = vpop.xlane.xlu0 %2835
  %v2837 = vsel %vm2782, %v2820, 0.0
  %2838 = vadd.xlane.f32.xlu0 %v2837
  %v2839 = vpop.xlane.xlu0 %2838
  %v2840 = vsel %vm2782, %v2822, 0.0
  %2841 = vadd.xlane.f32.xlu0 %v2840
  %v2842 = vpop.xlane.xlu0 %2841
  %v2843 = vsel %vm2782, %v2824, 0.0
  %2844 = vadd.xlane.f32.xlu0 %v2843
  %v2845 = vpop.xlane.xlu0 %2844
  %v2846 = vsel %vm2782, %v2826, 0.0
  %2847 = vadd.xlane.f32.xlu0 %v2846
  %v2848 = vpop.xlane.xlu0 %2847
  %v2849 = vsel %vm2782, %v2828, 0.0
  %2850 = vadd.xlane.f32.xlu0 %v2849
  %v2851 = vpop.xlane.xlu0 %2850
  %v2852 = vsel %vm2782, %v2830, 0.0
  %2853 = vadd.xlane.f32.xlu0 %v2852
  %v2854 = vpop.xlane.xlu0 %2853
  %v2855 = vrcp.pop %v2833
  %v2856 = vrcp.pop %v2836
  %v2857 = vrcp.pop %v2839
  %v2858 = vrcp.pop %v2842
  %v2859 = vrcp.pop %v2845
  %v2860 = vrcp.pop %v2848
  %v2861 = vrcp.pop %v2851
  %v2862 = vrcp.pop %v2854
  %v2863 = vmul.f32 %v2816, %v2855
  %v2864 = vmul.f32 %v2818, %v2856
  %v2865 = vmul.f32 %v2820, %v2857
  %v2866 = vmul.f32 %v2822, %v2858
  %v2867 = vmul.f32 %v2824, %v2859
  %v2868 = vmul.f32 %v2826, %v2860
  %v2869 = vmul.f32 %v2828, %v2861
  %v2870 = vmul.f32 %v2830, %v2862
  %2871 = vst.msk [vmem:[%s13] sm:$0xff] %vm2782, %v2863
  %2872 = vst.msk [vmem:[%s13 + $0x8] sm:$0xff] %vm2782, %v2864
  %2873 = vst.msk [vmem:[%s13 + $0x10] sm:$0xff] %vm2782, %v2865
  %2874 = vst.msk [vmem:[%s13 + $0x18] sm:$0xff] %vm2782, %v2866
  %2875 = vst.msk [vmem:[%s13 + $0x20] sm:$0xff] %vm2782, %v2867
  %2876 = vst.msk [vmem:[%s13 + $0x28] sm:$0xff] %vm2782, %v2868
  %2877 = vst.msk [vmem:[%s13 + $0x30] sm:$0xff] %vm2782, %v2869
  %2878 = vst.msk [vmem:[%s13 + $0x38] sm:$0xff] %vm2782, %v2870
  // Predicated region
  $region54: #{net_forward.1} parent=0 // pred_check
    _
  $region55: #{net_forward.1} parent=0 // pred_check_branch
    %2880 = sbr.rel (0) target = $region57
  $region56: #{net_forward.1} parent=0 // pred_region
    _
  $region57: #{net_forward.1} parent=0 // pred_fallthru
    _
  // Predicated region
  $region58: #{net_forward.1} parent=0 // pred_check
    _
  $region59: #{net_forward.1} parent=0 // pred_check_branch
    %2882 = sbr.rel (0) target = $region61
  $region60: #{net_forward.1} parent=0 // pred_region
    _
  $region61: #{net_forward.1} parent=0 // pred_fallthru
    _

</llo_original>
